<compile_context>
chip_gen: v7x
topology: tpu7x:2x2x1
jax: 0.10.0
libtpu: 0.0.40
codegen_flags: <defaults>
</compile_context>

<pallas_src>
import math

import jax
import jax.numpy as jnp
from jax import lax
from jax.experimental import pallas as pl
from jax.experimental.pallas import tpu as pltpu


_MXU_DTYPE = jnp.bfloat16  # MXU operand dtype; accumulation stays f32

_PARAM_ORDER = ('g1', 'be1', 'wkqv', 'bkqv', 'wt', 'wp', 'bp',
                'g2', 'be2', 'wm1', 'bm1', 'wm2', 'bm2')


def _ceil_to(x, n):
    return -(-x // n) * n


# ----------------------------------------------------------------------------
# Pallas kernel: one grid step == Bt batch elements; tokens flattened to
# (Bt*Tp, ·) so every projection / MLP matmul has a large M on the MXU.
# ----------------------------------------------------------------------------
def _make_kernel(Bt, Tp, T, dim, emb, m, EP):
    inv_sqrt_m = 1.0 / math.sqrt(m)
    inv_sqrt_2 = 1.0 / math.sqrt(2.0)
    attn_eps = 1e-8
    ln_eps = 1e-5
    mask_tokens = (Tp != T)          # padded token rows present in each block

    def layernorm(z, g, b):
        mu = jnp.mean(z, axis=-1, keepdims=True)
        var = jnp.mean((z - mu) ** 2, axis=-1, keepdims=True)
        return (z - mu) * lax.rsqrt(var + ln_eps) * g + b

    def kernel(x_ref,
               g1_ref, be1_ref, wkqv_ref, bkqv_ref, wt_ref,
               wp_ref, bp_ref, g2_ref, be2_ref,
               wm1_ref, bm1_ref, wm2_ref, bm2_ref,
               out_ref):
        f32 = jnp.float32
        x = x_ref[...].astype(f32)                               # (Bt*Tp, dim)

        # ---------------- norm1 (f32, VPU) ----------------
        xn = layernorm(x, g1_ref[...], be1_ref[...])

        # ------- fused kqv projection: one MXU matmul, N = 3*EP -------
        # each k/q/v group occupies a 128-aligned slab of EP lanes; padded
        # lanes are exact zeros (zero weight columns / bias entries).
        kqv = jnp.dot(xn.astype(_MXU_DTYPE), wkqv_ref[...],
                      preferred_element_type=f32) + bkqv_ref[...]
        k = kqv[:, 0 * EP:1 * EP]                                # aligned, free views
        q = kqv[:, 1 * EP:2 * EP]
        v = kqv[:, 2 * EP:3 * EP]

        wt = wt_ref[...]                                         # (EP, m) bf16, padded rows zero

        def prm_exp(z):                                          # (Bt*Tp, EP) -> (Bt*Tp, m)
            zd = 0.5 * jnp.sum(z * z, axis=-1, keepdims=True)    # padded lanes add 0
            wtz = jnp.dot(z.astype(_MXU_DTYPE), wt, preferred_element_type=f32)
            return jnp.exp(wtz - zd) * inv_sqrt_m                # exp kept in f32

        kp = prm_exp(k)                                          # (Bt*Tp, m)
        qp = prm_exp(q)

        if mask_tokens:
            # zero the kernel features of padded token rows so they don't
            # pollute the cross-token reductions (kp_sum, kptv)
            row = lax.broadcasted_iota(jnp.int32, (Bt * Tp, 1), 0)
            kp = jnp.where((row % Tp) < T, kp, 0.0)

        kp3 = kp.reshape(Bt, Tp, m)
        qp3 = qp.reshape(Bt, Tp, m)
        v3 = v.reshape(Bt, Tp, EP)

        kp_sum = jnp.sum(kp3, axis=1, keepdims=True)             # (Bt, 1, m)
        D = jnp.sum(qp3 * kp_sum, axis=-1, keepdims=True)        # (Bt, Tp, 1)  f32
        D = D.reshape(Bt * Tp, 1)

        # ---- batched contractions: one dot_general each, no unroll/concat ----
        # kptv[b, n, e] = sum_t kp[b, t, n] * v[b, t, e]
        kptv = jnp.einsum('btn,bte->bne',
                          kp3.astype(_MXU_DTYPE), v3.astype(_MXU_DTYPE),
                          preferred_element_type=f32)            # (Bt, m, EP)
        # NOTE: kptv is a sum of Tp positive features; bf16 operand error here is
        # ~0.4% relative (fine at these T).  Keep this operand f32 for very long T.
        y = jnp.einsum('btn,bne->bte',
                       qp3.astype(_MXU_DTYPE), kptv.astype(_MXU_DTYPE),
                       preferred_element_type=f32)               # (Bt, Tp, EP)
        y = y.reshape(Bt * Tp, EP)

        # reciprocal-then-multiply (EUP slot) instead of a full-width divide
        inv_d = pl.reciprocal(D + attn_eps, approx=True)
        y = y * inv_d

        # ---------------- proj (dropout dp = identity, eval mode) -----------
        y = jnp.dot(y.astype(_MXU_DTYPE), wp_ref[...],
                    preferred_element_type=f32) + bp_ref[...]    # (Bt*Tp, emb)

        x1 = x + y                                               # residual (dim == emb)

        # ---------------- norm2 + mlp (Linear -> exact GELU -> Linear) ------
        xn2 = layernorm(x1, g2_ref[...], be2_ref[...])
        h = jnp.dot(xn2.astype(_MXU_DTYPE), wm1_ref[...],
                    preferred_element_type=f32) + bm1_ref[...]
        h = 0.5 * h * (1.0 + lax.erf(h * inv_sqrt_2))
        h = jnp.dot(h.astype(_MXU_DTYPE), wm2_ref[...],
                    preferred_element_type=f32) + bm2_ref[...]

        out_ref[...] = (x1 + h).astype(out_ref.dtype)

    return kernel


# ----------------------------------------------------------------------------
# Wrapper helpers
# ----------------------------------------------------------------------------
def _prepare_operands(params, dim, emb, m, EP):
    """Pad k/q/v column groups to EP lanes, pre-transpose w, cast MXU weights to bf16."""
    f32 = jnp.float32
    pad_e = EP - emb

    def pad_last(a):                       # zero-pad last dim emb -> EP
        if pad_e == 0:
            return a
        cfg = [(0, 0)] * (a.ndim - 1) + [(0, pad_e)]
        return jnp.pad(a, cfg)

    def pad_groups(a):                     # (..., 3*emb) -> (..., 3*EP), per-group
        parts = [pad_last(a[..., g * emb:(g + 1) * emb]) for g in range(3)]
        return jnp.concatenate(parts, axis=-1)

    wT = params['w'].T                     # (emb, m): no in-kernel transpose
    wp = params['wp']
    if pad_e:
        wT = jnp.pad(wT, ((0, pad_e), (0, 0)))
        wp = jnp.pad(wp, ((0, pad_e), (0, 0)))

    return dict(
        g1=params['g1'].astype(f32), be1=params['be1'].astype(f32),
        wkqv=pad_groups(params['wkqv']).astype(_MXU_DTYPE),
        bkqv=pad_groups(params['bkqv']).astype(f32),
        wt=wT.astype(_MXU_DTYPE),
        wp=wp.astype(_MXU_DTYPE), bp=params['bp'].astype(f32),
        g2=params['g2'].astype(f32), be2=params['be2'].astype(f32),
        wm1=params['wm1'].astype(_MXU_DTYPE), bm1=params['bm1'].astype(f32),
        wm2=params['wm2'].astype(_MXU_DTYPE), bm2=params['bm2'].astype(f32),
    )


def _vmem_limits():
    """Generation-aware scoped-VMEM limit (64 MiB on 128-MiB parts, 40 MiB on v7x)."""
    phys = 128 * 1024 * 1024
    try:
        info = pltpu.get_tpu_info()
        phys = int(getattr(info, 'vmem_capacity_bytes', phys)) or phys
    except Exception:
        pass
    limit = int(min(phys * 5 // 8, 64 * 1024 * 1024))
    return phys, limit


def _estimate_vmem_bytes(bt, Tp, dim, emb, m, EP):
    """Conservative per-step VMEM footprint (I/O blocks + weights + live temporaries)."""
    ntok = bt * Tp
    f32b, bf16b = 4, 2
    io = 2 * ntok * dim * f32b + 2 * ntok * emb * f32b          # double-buffered x / out blocks
    w = 2 * (dim * 3 * EP * bf16b + 3 * EP * f32b + EP * m * bf16b + EP * emb * bf16b
             + 2 * emb * emb * bf16b + 2 * dim * f32b + 8 * emb * f32b)
    act = ntok * f32b * (2 * dim + 5 * EP + 2 * m + 5 * emb)    # f32 temporaries
    act = act * 3 // 2 + 2 * bt * m * EP * f32b                 # + bf16 staging + kptv
    return io + w + act


def _pick_bt(B, Tp, dim, emb, m, EP, budget):
    divisors = [d for d in range(1, B + 1) if B % d == 0]
    fits = [d for d in divisors if _estimate_vmem_bytes(d, Tp, dim, emb, m, EP) <= budget]
    if not fits:
        fits = [1]
    steps = lambda d: B // d
    # prefer an even number of grid steps (>=2) so v7x's 2 TCs are both busy,
    # then any >=2 steps, then the biggest block that fits.
    for ok in (lambda d: steps(d) >= 2 and steps(d) % 2 == 0,
               lambda d: steps(d) >= 2,
               lambda d: True):
        cand = [d for d in fits if ok(d)]
        if cand:
            return max(cand)
    return 1


# ----------------------------------------------------------------------------
# Wrapper
# ----------------------------------------------------------------------------
def token_performer_forward(x, params, *, bt=None, alias_io=False):
    B, T, dim = x.shape
    emb = params['wp'].shape[0]
    m = params['w'].shape[0]
    assert dim == emb, "residual x + attn(x) requires dim == emb (= in_dim*head_cnt)"

    EP = _ceil_to(emb, 128)            # lane-aligned width for each k/q/v group
    Tp = _ceil_to(T, 8)                # sublane-aligned tokens per batch element

    phys_vmem, vmem_limit = _vmem_limits()
    if bt is None:
        bt = _pick_bt(B, Tp, dim, emb, m, EP, budget=vmem_limit * 3 // 4)
    assert B % bt == 0

    op = _prepare_operands(params, dim, emb, m, EP)

    if Tp != T:
        x = jnp.pad(x, ((0, 0), (0, Tp - T), (0, 0)))            # padded token rows are zero
    x2 = x.reshape(B * Tp, dim)

    kernel = _make_kernel(bt, Tp, T, dim, emb, m, EP)

    def run(single_buffer_weights):
        def w_spec(shape):
            if single_buffer_weights:
                # grid-invariant weights: one VMEM copy instead of two
                return pl.BlockSpec(shape, lambda i: (0, 0), pipeline_mode=pl.Buffered(1))
            return pl.BlockSpec(shape, lambda i: (0, 0))

        in_specs = [pl.BlockSpec((bt * Tp, dim), lambda i: (i, 0))]
        in_specs += [w_spec(op[name].shape) for name in _PARAM_ORDER]
        extra = {}
        if alias_io:
            # v5e knob: x2 / out have identical shape+dtype (dim == emb); reuse the buffer
            extra['input_output_aliases'] = {0: 0}
        return pl.pallas_call(
            kernel,
            out_shape=jax.ShapeDtypeStruct((B * Tp, emb), x.dtype),
            grid=(B // bt,),
            in_specs=in_specs,
            out_specs=pl.BlockSpec((bt * Tp, emb), lambda i: (i, 0)),
            compiler_params=pltpu.CompilerParams(
                dimension_semantics=("parallel",),
                vmem_limit_bytes=vmem_limit),
            **extra,
        )(x2, *[op[name] for name in _PARAM_ORDER])

    try:
        out2 = run(True)
    except Exception:
        # this jax/libtpu rejects pipeline_mode=pl.Buffered(1); fall back to default buffering
        out2 = run(False)

    out = out2.reshape(B, Tp, emb)
    return out[:, :T, :] if Tp != T else out


# ----------------------------------------------------------------------------
# Deterministic parameter init (matches the __init__ shapes; synthetic values)
# ----------------------------------------------------------------------------
def init_params(key, dim, in_dim, head_cnt=1, kernel_ratio=0.5):
    emb = in_dim * head_cnt
    m = int(emb * kernel_ratio)
    keys = jax.random.split(key, 6)

    def linear(k, fan_in, fan_out):
        bound = 1.0 / math.sqrt(fan_in)
        wkey, bkey = jax.random.split(k)
        W = jax.random.uniform(wkey, (fan_in, fan_out), jnp.float32, -bound, bound)
        b = jax.random.uniform(bkey, (1, fan_out), jnp.float32, -bound, bound)
        return W, b

    wkqv, bkqv = linear(keys[0], dim, 3 * emb)    # kqv: Linear(dim, 3*emb); split order k,q,v
    wp, bp = linear(keys[1], emb, emb)            # proj
    wm1, bm1 = linear(keys[2], emb, emb)          # mlp[0]
    wm2, bm2 = linear(keys[3], emb, emb)          # mlp[2]

    # random-feature matrix w: (m, emb), orthonormal rows, scaled by sqrt(m)
    g = jax.random.normal(keys[4], (emb, m), jnp.float32)
    q_mat, _ = jnp.linalg.qr(g)                   # (emb, m) orthonormal columns
    w = q_mat.T * math.sqrt(m)                    # (m, emb)

    return dict(
        g1=jnp.ones((1, dim), jnp.float32), be1=jnp.zeros((1, dim), jnp.float32),
        wkqv=wkqv, bkqv=bkqv, w=w,
        wp=wp, bp=bp,
        g2=jnp.ones((1, emb), jnp.float32), be2=jnp.zeros((1, emb), jnp.float32),
        wm1=wm1, bm1=bm1, wm2=wm2, bm2=bm2,
    )


# ----------------------------------------------------------------------------
# Pure-JAX reference (mirrors the PyTorch forward, full f32)
# ----------------------------------------------------------------------------
def reference_forward(x, p):
    emb = p['wp'].shape[0]
    m = p['w'].shape[0]

    def ln(z, g, b):
        mu = z.mean(-1, keepdims=True)
        var = ((z - mu) ** 2).mean(-1, keepdims=True)
        return (z - mu) / jnp.sqrt(var + 1e-5) * g + b

    def prm_exp(z):
        zd = 0.5 * jnp.sum(z * z, -1, keepdims=True)
        wtz = jnp.einsum('bti,mi->btm', z, p['w'])
        return jnp.exp(wtz - zd) / math.sqrt(m)

    xn = ln(x, p['g1'], p['be1'])
    kqv = xn @ p['wkqv'] + p['bkqv']
    k, q, v = kqv[..., :emb], kqv[..., emb:2 * emb], kqv[..., 2 * emb:]
    kp, qp = prm_exp(k), prm_exp(q)
    D = jnp.einsum('btm,bm->bt', qp, kp.sum(1))[..., None]
    kptv = jnp.einsum('bin,bim->bnm', v, kp)
    y = jnp.einsum('btm,bnm->btn', qp, kptv) / (D + 1e-8)
    y = y @ p['wp'] + p['bp']
    x1 = x + y
    xn2 = ln(x1, p['g2'], p['be2'])
    h = xn2 @ p['wm1'] + p['bm1']
    h = 0.5 * h * (1.0 + jax.scipy.special.erf(h / math.sqrt(2.0)))
    h = h @ p['wm2'] + p['bm2']
    return x1 + h


if __name__ == "__main__":
    key = jax.random.PRNGKey(0)

    # Case 1: small, 8-aligned token count (batch=2, tokens=8, dim=emb=32).
    B, T, dim, in_dim = 2, 8, 32, 32
    kx, kparam, key = jax.random.split(key, 3)
    params = init_params(kparam, dim, in_dim, head_cnt=1, kernel_ratio=0.5)
    x = jax.random.normal(kx, (B, T, dim), jnp.float32)

    out = jax.block_until_ready(token_performer_forward(x, params))
    ref = jax.block_until_ready(reference_forward(x, params))
    assert out.shape == (B, T, in_dim)
    # bf16 MXU operands with f32 accumulation -> slightly loose tolerance;
    # LN / exp / erf / denominator math all stay f32.
    err = float(jnp.max(jnp.abs(out - ref)))
    assert jnp.allclose(out, ref, atol=3e-2, rtol=3e-2), f"mismatch (max abs err {err})"

    # Case 2: token count not a multiple of 8 -> exercises the padded-T /
    # masked-kp path (replaces the old bt=B full-extent fallback).
    T2 = 12
    kx2, key = jax.random.split(key)
    x_b = jax.random.normal(kx2, (B, T2, dim), jnp.float32)
    out_b = jax.block_until_ready(token_performer_forward(x_b, params))
    ref_b = jax.block_until_ready(reference_forward(x_b, params))
    assert out_b.shape == (B, T2, in_dim)
    err_b = float(jnp.max(jnp.abs(out_b - ref_b)))
    assert jnp.allclose(out_b, ref_b, atol=3e-2, rtol=3e-2), f"mismatch padded-T (max abs err {err_b})"

    # TODO(synk): dropout (dp1/dp2) is identity here (eval mode); training-mode
    # stochastic dropout would need pltpu.prng_* inside the kernel.
    print("KERNEL_OK")
</pallas_src>

<mosaic_0001>
module attributes {stable_mosaic.version = 11 : i64} {
  func.func @kernel(%arg0: i32, %arg1: memref<8x32xf32, #tpu.memory_space<vmem>>, %arg2: memref<1x32xf32, #tpu.memory_space<vmem>>, %arg3: memref<1x32xf32, #tpu.memory_space<vmem>>, %arg4: memref<32x384xbf16, #tpu.memory_space<vmem>>, %arg5: memref<1x384xf32, #tpu.memory_space<vmem>>, %arg6: memref<128x16xbf16, #tpu.memory_space<vmem>>, %arg7: memref<128x32xbf16, #tpu.memory_space<vmem>>, %arg8: memref<1x32xf32, #tpu.memory_space<vmem>>, %arg9: memref<1x32xf32, #tpu.memory_space<vmem>>, %arg10: memref<1x32xf32, #tpu.memory_space<vmem>>, %arg11: memref<32x32xbf16, #tpu.memory_space<vmem>>, %arg12: memref<1x32xf32, #tpu.memory_space<vmem>>, %arg13: memref<32x32xbf16, #tpu.memory_space<vmem>>, %arg14: memref<1x32xf32, #tpu.memory_space<vmem>>, %arg15: memref<8x32xf32, #tpu.memory_space<vmem>>) attributes {dimension_semantics = [#tpu.dimension_semantics<parallel>], iteration_bounds = array<i64: 2>, scalar_prefetch = 0 : i64, scratch_operands = 0 : i64, tpu.core_type = #tpu.core_type<tc>, window_params = [{transform_indices = @transform_0, window_bounds = array<i64: 8, 32>}, {pipeline_mode = #tpu.pipeline_mode<synchronous>, transform_indices = @transform_1, window_bounds = array<i64: 1, 32>}, {pipeline_mode = #tpu.pipeline_mode<synchronous>, transform_indices = @transform_2, window_bounds = array<i64: 1, 32>}, {pipeline_mode = #tpu.pipeline_mode<synchronous>, transform_indices = @transform_3, window_bounds = array<i64: 32, 384>}, {pipeline_mode = #tpu.pipeline_mode<synchronous>, transform_indices = @transform_4, window_bounds = array<i64: 1, 384>}, {pipeline_mode = #tpu.pipeline_mode<synchronous>, transform_indices = @transform_5, window_bounds = array<i64: 128, 16>}, {pipeline_mode = #tpu.pipeline_mode<synchronous>, transform_indices = @transform_6, window_bounds = array<i64: 128, 32>}, {pipeline_mode = #tpu.pipeline_mode<synchronous>, transform_indices = @transform_7, window_bounds = array<i64: 1, 32>}, {pipeline_mode = #tpu.pipeline_mode<synchronous>, transform_indices = @transform_8, window_bounds = array<i64: 1, 32>}, {pipeline_mode = #tpu.pipeline_mode<synchronous>, transform_indices = @transform_9, window_bounds = array<i64: 1, 32>}, {pipeline_mode = #tpu.pipeline_mode<synchronous>, transform_indices = @transform_10, window_bounds = array<i64: 32, 32>}, {pipeline_mode = #tpu.pipeline_mode<synchronous>, transform_indices = @transform_11, window_bounds = array<i64: 1, 32>}, {pipeline_mode = #tpu.pipeline_mode<synchronous>, transform_indices = @transform_12, window_bounds = array<i64: 32, 32>}, {pipeline_mode = #tpu.pipeline_mode<synchronous>, transform_indices = @transform_13, window_bounds = array<i64: 1, 32>}, {transform_indices = @transform_14, window_bounds = array<i64: 8, 32>}]} {
    %c0 = arith.constant 0 : index
    %c0_0 = arith.constant 0 : index
    %0 = vector.load %arg1[%c0, %c0_0] : memref<8x32xf32, #tpu.memory_space<vmem>>, vector<8x32xf32>
    %c0_1 = arith.constant 0 : index
    %c0_2 = arith.constant 0 : index
    %1 = vector.load %arg2[%c0_1, %c0_2] : memref<1x32xf32, #tpu.memory_space<vmem>>, vector<1x32xf32>
    %c0_3 = arith.constant 0 : index
    %c0_4 = arith.constant 0 : index
    %2 = vector.load %arg3[%c0_3, %c0_4] : memref<1x32xf32, #tpu.memory_space<vmem>>, vector<1x32xf32>
    %cst = arith.constant dense<0.000000e+00> : vector<8xf32>
    %3 = vector.multi_reduction <add>, %0, %cst [1] : vector<8x32xf32> to vector<8xf32>
    %4 = vector.shape_cast %3 : vector<8xf32> to vector<8x1xf32>
    %cst_5 = arith.constant 3.200000e+01 : f32
    %5 = vector.broadcast %cst_5 : f32 to vector<8x1xf32>
    %6 = arith.divf %4, %5 : vector<8x1xf32>
    %7 = vector.broadcast %6 : vector<8x1xf32> to vector<8x32xf32>
    %8 = arith.subf %0, %7 : vector<8x32xf32>
    %9 = arith.mulf %8, %8 : vector<8x32xf32>
    %cst_6 = arith.constant dense<0.000000e+00> : vector<8xf32>
    %10 = vector.multi_reduction <add>, %9, %cst_6 [1] : vector<8x32xf32> to vector<8xf32>
    %11 = vector.shape_cast %10 : vector<8xf32> to vector<8x1xf32>
    %cst_7 = arith.constant 3.200000e+01 : f32
    %12 = vector.broadcast %cst_7 : f32 to vector<8x1xf32>
    %13 = arith.divf %11, %12 : vector<8x1xf32>
    %14 = vector.broadcast %6 : vector<8x1xf32> to vector<8x32xf32>
    %15 = arith.subf %0, %14 : vector<8x32xf32>
    %cst_8 = arith.constant 9.99999974E-6 : f32
    %16 = vector.broadcast %cst_8 : f32 to vector<8x1xf32>
    %17 = arith.addf %13, %16 : vector<8x1xf32>
    %18 = math.rsqrt %17 : vector<8x1xf32>
    %19 = vector.broadcast %18 : vector<8x1xf32> to vector<8x32xf32>
    %20 = arith.mulf %15, %19 : vector<8x32xf32>
    %21 = vector.broadcast %1 : vector<1x32xf32> to vector<8x32xf32>
    %22 = arith.mulf %20, %21 : vector<8x32xf32>
    %23 = vector.broadcast %2 : vector<1x32xf32> to vector<8x32xf32>
    %24 = arith.addf %22, %23 : vector<8x32xf32>
    %25 = arith.truncf %24 : vector<8x32xf32> to vector<8x32xbf16>
    %c0_9 = arith.constant 0 : index
    %c0_10 = arith.constant 0 : index
    %26 = vector.load %arg4[%c0_9, %c0_10] : memref<32x384xbf16, #tpu.memory_space<vmem>>, vector<32x384xbf16>
    %cst_11 = arith.constant dense<0.000000e+00> : vector<8x384xf32>
    %27 = tpu.matmul %25, %26, %cst_11 {dimension_numbers = #tpu.dot_dimension_numbers<[1], [0], [0], [1], [0, 0, 1, 1], [], []>} : vector<8x32xbf16>, vector<32x384xbf16>, vector<8x384xf32> -> vector<8x384xf32>
    %c0_12 = arith.constant 0 : index
    %c0_13 = arith.constant 0 : index
    %28 = vector.load %arg5[%c0_12, %c0_13] : memref<1x384xf32, #tpu.memory_space<vmem>>, vector<1x384xf32>
    %29 = vector.broadcast %28 : vector<1x384xf32> to vector<8x384xf32>
    %30 = arith.addf %27, %29 : vector<8x384xf32>
    %31 = vector.extract_strided_slice %30 {offsets = [0, 0], sizes = [8, 128], strides = [1, 1]} : vector<8x384xf32> to vector<8x128xf32>
    %32 = vector.extract_strided_slice %30 {offsets = [0, 128], sizes = [8, 128], strides = [1, 1]} : vector<8x384xf32> to vector<8x128xf32>
    %33 = vector.extract_strided_slice %30 {offsets = [0, 256], sizes = [8, 128], strides = [1, 1]} : vector<8x384xf32> to vector<8x128xf32>
    %c0_14 = arith.constant 0 : index
    %c0_15 = arith.constant 0 : index
    %34 = vector.load %arg6[%c0_14, %c0_15] : memref<128x16xbf16, #tpu.memory_space<vmem>>, vector<128x16xbf16>
    %35 = arith.mulf %31, %31 : vector<8x128xf32>
    %cst_16 = arith.constant dense<0.000000e+00> : vector<8xf32>
    %36 = vector.multi_reduction <add>, %35, %cst_16 [1] : vector<8x128xf32> to vector<8xf32>
    %37 = vector.shape_cast %36 : vector<8xf32> to vector<8x1xf32>
    %cst_17 = arith.constant 5.000000e-01 : f32
    %38 = vector.broadcast %cst_17 : f32 to vector<8x1xf32>
    %39 = arith.mulf %38, %37 : vector<8x1xf32>
    %40 = arith.truncf %31 : vector<8x128xf32> to vector<8x128xbf16>
    %cst_18 = arith.constant dense<0.000000e+00> : vector<8x16xf32>
    %41 = tpu.matmul %40, %34, %cst_18 {dimension_numbers = #tpu.dot_dimension_numbers<[1], [0], [0], [1], [0, 0, 1, 1], [], []>} : vector<8x128xbf16>, vector<128x16xbf16>, vector<8x16xf32> -> vector<8x16xf32>
    %42 = vector.broadcast %39 : vector<8x1xf32> to vector<8x16xf32>
    %43 = arith.subf %41, %42 : vector<8x16xf32>
    %44 = math.exp %43 : vector<8x16xf32>
    %cst_19 = arith.constant 2.500000e-01 : f32
    %45 = vector.broadcast %cst_19 : f32 to vector<8x16xf32>
    %46 = arith.mulf %44, %45 : vector<8x16xf32>
    %47 = arith.mulf %32, %32 : vector<8x128xf32>
    %cst_20 = arith.constant dense<0.000000e+00> : vector<8xf32>
    %48 = vector.multi_reduction <add>, %47, %cst_20 [1] : vector<8x128xf32> to vector<8xf32>
    %49 = vector.shape_cast %48 : vector<8xf32> to vector<8x1xf32>
    %cst_21 = arith.constant 5.000000e-01 : f32
    %50 = vector.broadcast %cst_21 : f32 to vector<8x1xf32>
    %51 = arith.mulf %50, %49 : vector<8x1xf32>
    %52 = arith.truncf %32 : vector<8x128xf32> to vector<8x128xbf16>
    %cst_22 = arith.constant dense<0.000000e+00> : vector<8x16xf32>
    %53 = tpu.matmul %52, %34, %cst_22 {dimension_numbers = #tpu.dot_dimension_numbers<[1], [0], [0], [1], [0, 0, 1, 1], [], []>} : vector<8x128xbf16>, vector<128x16xbf16>, vector<8x16xf32> -> vector<8x16xf32>
    %54 = vector.broadcast %51 : vector<8x1xf32> to vector<8x16xf32>
    %55 = arith.subf %53, %54 : vector<8x16xf32>
    %56 = math.exp %55 : vector<8x16xf32>
    %cst_23 = arith.constant 2.500000e-01 : f32
    %57 = vector.broadcast %cst_23 : f32 to vector<8x16xf32>
    %58 = arith.mulf %56, %57 : vector<8x16xf32>
    %59 = vector.shape_cast %46 : vector<8x16xf32> to vector<1x8x16xf32>
    %60 = vector.shape_cast %58 : vector<8x16xf32> to vector<1x8x16xf32>
    %61 = vector.shape_cast %33 : vector<8x128xf32> to vector<1x8x128xf32>
    %cst_24 = arith.constant dense<0.000000e+00> : vector<1x16xf32>
    %62 = vector.multi_reduction <add>, %59, %cst_24 [1] : vector<1x8x16xf32> to vector<1x16xf32>
    %63 = vector.shape_cast %62 : vector<1x16xf32> to vector<1x1x16xf32>
    %64 = vector.broadcast %63 : vector<1x1x16xf32> to vector<1x8x16xf32>
    %65 = arith.mulf %60, %64 : vector<1x8x16xf32>
    %cst_25 = arith.constant dense<0.000000e+00> : vector<1x8xf32>
    %66 = vector.multi_reduction <add>, %65, %cst_25 [2] : vector<1x8x16xf32> to vector<1x8xf32>
    %67 = vector.shape_cast %66 : vector<1x8xf32> to vector<1x8x1xf32>
    %68 = vector.shape_cast %67 : vector<1x8x1xf32> to vector<8x1xf32>
    %69 = arith.truncf %59 : vector<1x8x16xf32> to vector<1x8x16xbf16>
    %70 = arith.truncf %61 : vector<1x8x128xf32> to vector<1x8x128xbf16>
    "tpu.trace_start"() <{level = 10 : i32, message = "btn,bte->bne"}> : () -> ()
    %cst_26 = arith.constant dense<0.000000e+00> : vector<1x16x128xf32>
    %71 = tpu.matmul %69, %70, %cst_26 {dimension_numbers = #tpu.dot_dimension_numbers<[1], [1], [2], [2], [0, 0, 0, 2, 1, 2], [0], [0]>} : vector<1x8x16xbf16>, vector<1x8x128xbf16>, vector<1x16x128xf32> -> vector<1x16x128xf32>
    "tpu.trace_stop"() : () -> ()
    %72 = arith.truncf %60 : vector<1x8x16xf32> to vector<1x8x16xbf16>
    %73 = arith.truncf %71 : vector<1x16x128xf32> to vector<1x16x128xbf16>
    "tpu.trace_start"() <{level = 10 : i32, message = "btn,bne->bte"}> : () -> ()
    %cst_27 = arith.constant dense<0.000000e+00> : vector<1x8x128xf32>
    %74 = tpu.matmul %72, %73, %cst_27 {dimension_numbers = #tpu.dot_dimension_numbers<[2], [1], [1], [2], [0, 0, 0, 1, 1, 2], [0], [0]>} : vector<1x8x16xbf16>, vector<1x16x128xbf16>, vector<1x8x128xf32> -> vector<1x8x128xf32>
    "tpu.trace_stop"() : () -> ()
    %75 = vector.shape_cast %74 : vector<1x8x128xf32> to vector<8x128xf32>
    %cst_28 = arith.constant 9.99999993E-9 : f32
    %76 = vector.broadcast %cst_28 : f32 to vector<8x1xf32>
    %77 = arith.addf %68, %76 : vector<8x1xf32>
    %78 = tpu.reciprocal %77 {approx = true} : vector<8x1xf32> -> vector<8x1xf32>
    %79 = vector.broadcast %78 : vector<8x1xf32> to vector<8x128xf32>
    %80 = arith.mulf %75, %79 : vector<8x128xf32>
    %81 = arith.truncf %80 : vector<8x128xf32> to vector<8x128xbf16>
    %c0_29 = arith.constant 0 : index
    %c0_30 = arith.constant 0 : index
    %82 = vector.load %arg7[%c0_29, %c0_30] : memref<128x32xbf16, #tpu.memory_space<vmem>>, vector<128x32xbf16>
    %cst_31 = arith.constant dense<0.000000e+00> : vector<8x32xf32>
    %83 = tpu.matmul %81, %82, %cst_31 {dimension_numbers = #tpu.dot_dimension_numbers<[1], [0], [0], [1], [0, 0, 1, 1], [], []>} : vector<8x128xbf16>, vector<128x32xbf16>, vector<8x32xf32> -> vector<8x32xf32>
    %c0_32 = arith.constant 0 : index
    %c0_33 = arith.constant 0 : index
    %84 = vector.load %arg8[%c0_32, %c0_33] : memref<1x32xf32, #tpu.memory_space<vmem>>, vector<1x32xf32>
    %85 = vector.broadcast %84 : vector<1x32xf32> to vector<8x32xf32>
    %86 = arith.addf %83, %85 : vector<8x32xf32>
    %87 = arith.addf %0, %86 : vector<8x32xf32>
    %c0_34 = arith.constant 0 : index
    %c0_35 = arith.constant 0 : index
    %88 = vector.load %arg9[%c0_34, %c0_35] : memref<1x32xf32, #tpu.memory_space<vmem>>, vector<1x32xf32>
    %c0_36 = arith.constant 0 : index
    %c0_37 = arith.constant 0 : index
    %89 = vector.load %arg10[%c0_36, %c0_37] : memref<1x32xf32, #tpu.memory_space<vmem>>, vector<1x32xf32>
    %cst_38 = arith.constant dense<0.000000e+00> : vector<8xf32>
    %90 = vector.multi_reduction <add>, %87, %cst_38 [1] : vector<8x32xf32> to vector<8xf32>
    %91 = vector.shape_cast %90 : vector<8xf32> to vector<8x1xf32>
    %cst_39 = arith.constant 3.200000e+01 : f32
    %92 = vector.broadcast %cst_39 : f32 to vector<8x1xf32>
    %93 = arith.divf %91, %92 : vector<8x1xf32>
    %94 = vector.broadcast %93 : vector<8x1xf32> to vector<8x32xf32>
    %95 = arith.subf %87, %94 : vector<8x32xf32>
    %96 = arith.mulf %95, %95 : vector<8x32xf32>
    %cst_40 = arith.constant dense<0.000000e+00> : vector<8xf32>
    %97 = vector.multi_reduction <add>, %96, %cst_40 [1] : vector<8x32xf32> to vector<8xf32>
    %98 = vector.shape_cast %97 : vector<8xf32> to vector<8x1xf32>
    %cst_41 = arith.constant 3.200000e+01 : f32
    %99 = vector.broadcast %cst_41 : f32 to vector<8x1xf32>
    %100 = arith.divf %98, %99 : vector<8x1xf32>
    %101 = vector.broadcast %93 : vector<8x1xf32> to vector<8x32xf32>
    %102 = arith.subf %87, %101 : vector<8x32xf32>
    %cst_42 = arith.constant 9.99999974E-6 : f32
    %103 = vector.broadcast %cst_42 : f32 to vector<8x1xf32>
    %104 = arith.addf %100, %103 : vector<8x1xf32>
    %105 = math.rsqrt %104 : vector<8x1xf32>
    %106 = vector.broadcast %105 : vector<8x1xf32> to vector<8x32xf32>
    %107 = arith.mulf %102, %106 : vector<8x32xf32>
    %108 = vector.broadcast %88 : vector<1x32xf32> to vector<8x32xf32>
    %109 = arith.mulf %107, %108 : vector<8x32xf32>
    %110 = vector.broadcast %89 : vector<1x32xf32> to vector<8x32xf32>
    %111 = arith.addf %109, %110 : vector<8x32xf32>
    %112 = arith.truncf %111 : vector<8x32xf32> to vector<8x32xbf16>
    %c0_43 = arith.constant 0 : index
    %c0_44 = arith.constant 0 : index
    %113 = vector.load %arg11[%c0_43, %c0_44] : memref<32x32xbf16, #tpu.memory_space<vmem>>, vector<32x32xbf16>
    %cst_45 = arith.constant dense<0.000000e+00> : vector<8x32xf32>
    %114 = tpu.matmul %112, %113, %cst_45 {dimension_numbers = #tpu.dot_dimension_numbers<[1], [0], [0], [1], [0, 0, 1, 1], [], []>} : vector<8x32xbf16>, vector<32x32xbf16>, vector<8x32xf32> -> vector<8x32xf32>
    %c0_46 = arith.constant 0 : index
    %c0_47 = arith.constant 0 : index
    %115 = vector.load %arg12[%c0_46, %c0_47] : memref<1x32xf32, #tpu.memory_space<vmem>>, vector<1x32xf32>
    %116 = vector.broadcast %115 : vector<1x32xf32> to vector<8x32xf32>
    %117 = arith.addf %114, %116 : vector<8x32xf32>
    %cst_48 = arith.constant 5.000000e-01 : f32
    %118 = vector.broadcast %cst_48 : f32 to vector<8x32xf32>
    %119 = arith.mulf %118, %117 : vector<8x32xf32>
    %cst_49 = arith.constant 0.707106769 : f32
    %120 = vector.broadcast %cst_49 : f32 to vector<8x32xf32>
    %121 = arith.mulf %117, %120 : vector<8x32xf32>
    %122 = math.erf %121 : vector<8x32xf32>
    %cst_50 = arith.constant 1.000000e+00 : f32
    %123 = vector.broadcast %cst_50 : f32 to vector<8x32xf32>
    %124 = arith.addf %123, %122 : vector<8x32xf32>
    %125 = arith.mulf %119, %124 : vector<8x32xf32>
    %126 = arith.truncf %125 : vector<8x32xf32> to vector<8x32xbf16>
    %c0_51 = arith.constant 0 : index
    %c0_52 = arith.constant 0 : index
    %127 = vector.load %arg13[%c0_51, %c0_52] : memref<32x32xbf16, #tpu.memory_space<vmem>>, vector<32x32xbf16>
    %cst_53 = arith.constant dense<0.000000e+00> : vector<8x32xf32>
    %128 = tpu.matmul %126, %127, %cst_53 {dimension_numbers = #tpu.dot_dimension_numbers<[1], [0], [0], [1], [0, 0, 1, 1], [], []>} : vector<8x32xbf16>, vector<32x32xbf16>, vector<8x32xf32> -> vector<8x32xf32>
    %c0_54 = arith.constant 0 : index
    %c0_55 = arith.constant 0 : index
    %129 = vector.load %arg14[%c0_54, %c0_55] : memref<1x32xf32, #tpu.memory_space<vmem>>, vector<1x32xf32>
    %130 = vector.broadcast %129 : vector<1x32xf32> to vector<8x32xf32>
    %131 = arith.addf %128, %130 : vector<8x32xf32>
    %132 = arith.addf %87, %131 : vector<8x32xf32>
    %c0_56 = arith.constant 0 : index
    %c0_57 = arith.constant 0 : index
    %133 = vector.load %arg15[%c0_56, %c0_57] : memref<8x32xf32, #tpu.memory_space<vmem>>, vector<8x32xf32>
    tpu.vector_store %arg15[%c0_56, %c0_57], %132 {strides = array<i32>} : memref<8x32xf32, #tpu.memory_space<vmem>>, vector<8x32xf32>,
    return
  }
  func.func @transform_0(%arg0: i32) -> (i32, i32) {
    %c0_i32 = arith.constant 0 : i32
    %c0_i32_0 = arith.constant 0 : i32
    return %arg0, %c0_i32 : i32, i32
  }
  func.func @transform_1(%arg0: i32) -> (i32, i32) {
    %c0_i32 = arith.constant 0 : i32
    %c0_i32_0 = arith.constant 0 : i32
    %c0_i32_1 = arith.constant 0 : i32
    return %c0_i32, %c0_i32_0 : i32, i32
  }
  func.func @transform_2(%arg0: i32) -> (i32, i32) {
    %c0_i32 = arith.constant 0 : i32
    %c0_i32_0 = arith.constant 0 : i32
    %c0_i32_1 = arith.constant 0 : i32
    return %c0_i32, %c0_i32_0 : i32, i32
  }
  func.func @transform_3(%arg0: i32) -> (i32, i32) {
    %c0_i32 = arith.constant 0 : i32
    %c0_i32_0 = arith.constant 0 : i32
    %c0_i32_1 = arith.constant 0 : i32
    return %c0_i32, %c0_i32_0 : i32, i32
  }
  func.func @transform_4(%arg0: i32) -> (i32, i32) {
    %c0_i32 = arith.constant 0 : i32
    %c0_i32_0 = arith.constant 0 : i32
    %c0_i32_1 = arith.constant 0 : i32
    return %c0_i32, %c0_i32_0 : i32, i32
  }
  func.func @transform_5(%arg0: i32) -> (i32, i32) {
    %c0_i32 = arith.constant 0 : i32
    %c0_i32_0 = arith.constant 0 : i32
    %c0_i32_1 = arith.constant 0 : i32
    return %c0_i32, %c0_i32_0 : i32, i32
  }
  func.func @transform_6(%arg0: i32) -> (i32, i32) {
    %c0_i32 = arith.constant 0 : i32
    %c0_i32_0 = arith.constant 0 : i32
    %c0_i32_1 = arith.constant 0 : i32
    return %c0_i32, %c0_i32_0 : i32, i32
  }
  func.func @transform_7(%arg0: i32) -> (i32, i32) {
    %c0_i32 = arith.constant 0 : i32
    %c0_i32_0 = arith.constant 0 : i32
    %c0_i32_1 = arith.constant 0 : i32
    return %c0_i32, %c0_i32_0 : i32, i32
  }
  func.func @transform_8(%arg0: i32) -> (i32, i32) {
    %c0_i32 = arith.constant 0 : i32
    %c0_i32_0 = arith.constant 0 : i32
    %c0_i32_1 = arith.constant 0 : i32
    return %c0_i32, %c0_i32_0 : i32, i32
  }
  func.func @transform_9(%arg0: i32) -> (i32, i32) {
    %c0_i32 = arith.constant 0 : i32
    %c0_i32_0 = arith.constant 0 : i32
    %c0_i32_1 = arith.constant 0 : i32
    return %c0_i32, %c0_i32_0 : i32, i32
  }
  func.func @transform_10(%arg0: i32) -> (i32, i32) {
    %c0_i32 = arith.constant 0 : i32
    %c0_i32_0 = arith.constant 0 : i32
    %c0_i32_1 = arith.constant 0 : i32
    return %c0_i32, %c0_i32_0 : i32, i32
  }
  func.func @transform_11(%arg0: i32) -> (i32, i32) {
    %c0_i32 = arith.constant 0 : i32
    %c0_i32_0 = arith.constant 0 : i32
    %c0_i32_1 = arith.constant 0 : i32
    return %c0_i32, %c0_i32_0 : i32, i32
  }
  func.func @transform_12(%arg0: i32) -> (i32, i32) {
    %c0_i32 = arith.constant 0 : i32
    %c0_i32_0 = arith.constant 0 : i32
    %c0_i32_1 = arith.constant 0 : i32
    return %c0_i32, %c0_i32_0 : i32, i32
  }
  func.func @transform_13(%arg0: i32) -> (i32, i32) {
    %c0_i32 = arith.constant 0 : i32
    %c0_i32_0 = arith.constant 0 : i32
    %c0_i32_1 = arith.constant 0 : i32
    return %c0_i32, %c0_i32_0 : i32, i32
  }
  func.func @transform_14(%arg0: i32) -> (i32, i32) {
    %c0_i32 = arith.constant 0 : i32
    %c0_i32_0 = arith.constant 0 : i32
    return %arg0, %c0_i32 : i32, i32
  }
}

module attributes {stable_mosaic.version = 11 : i64} {
  func.func @kernel(%arg0: i32, %arg1: memref<8x32xf32, #tpu.memory_space<vmem>>, %arg2: memref<1x32xf32, #tpu.memory_space<vmem>>, %arg3: memref<1x32xf32, #tpu.memory_space<vmem>>, %arg4: memref<32x384xbf16, #tpu.memory_space<vmem>>, %arg5: memref<1x384xf32, #tpu.memory_space<vmem>>, %arg6: memref<128x16xbf16, #tpu.memory_space<vmem>>, %arg7: memref<128x32xbf16, #tpu.memory_space<vmem>>, %arg8: memref<1x32xf32, #tpu.memory_space<vmem>>, %arg9: memref<1x32xf32, #tpu.memory_space<vmem>>, %arg10: memref<1x32xf32, #tpu.memory_space<vmem>>, %arg11: memref<32x32xbf16, #tpu.memory_space<vmem>>, %arg12: memref<1x32xf32, #tpu.memory_space<vmem>>, %arg13: memref<32x32xbf16, #tpu.memory_space<vmem>>, %arg14: memref<1x32xf32, #tpu.memory_space<vmem>>, %arg15: memref<8x32xf32, #tpu.memory_space<vmem>>) attributes {dimension_semantics = [#tpu.dimension_semantics<parallel>], iteration_bounds = array<i64: 2>, scalar_prefetch = 0 : i64, scratch_operands = 0 : i64, tpu.core_type = #tpu.core_type<tc>, window_params = [{transform_indices = @transform_0, window_bounds = array<i64: 8, 32>}, {pipeline_mode = #tpu.pipeline_mode<synchronous>, transform_indices = @transform_1, window_bounds = array<i64: 1, 32>}, {pipeline_mode = #tpu.pipeline_mode<synchronous>, transform_indices = @transform_2, window_bounds = array<i64: 1, 32>}, {pipeline_mode = #tpu.pipeline_mode<synchronous>, transform_indices = @transform_3, window_bounds = array<i64: 32, 384>}, {pipeline_mode = #tpu.pipeline_mode<synchronous>, transform_indices = @transform_4, window_bounds = array<i64: 1, 384>}, {pipeline_mode = #tpu.pipeline_mode<synchronous>, transform_indices = @transform_5, window_bounds = array<i64: 128, 16>}, {pipeline_mode = #tpu.pipeline_mode<synchronous>, transform_indices = @transform_6, window_bounds = array<i64: 128, 32>}, {pipeline_mode = #tpu.pipeline_mode<synchronous>, transform_indices = @transform_7, window_bounds = array<i64: 1, 32>}, {pipeline_mode = #tpu.pipeline_mode<synchronous>, transform_indices = @transform_8, window_bounds = array<i64: 1, 32>}, {pipeline_mode = #tpu.pipeline_mode<synchronous>, transform_indices = @transform_9, window_bounds = array<i64: 1, 32>}, {pipeline_mode = #tpu.pipeline_mode<synchronous>, transform_indices = @transform_10, window_bounds = array<i64: 32, 32>}, {pipeline_mode = #tpu.pipeline_mode<synchronous>, transform_indices = @transform_11, window_bounds = array<i64: 1, 32>}, {pipeline_mode = #tpu.pipeline_mode<synchronous>, transform_indices = @transform_12, window_bounds = array<i64: 32, 32>}, {pipeline_mode = #tpu.pipeline_mode<synchronous>, transform_indices = @transform_13, window_bounds = array<i64: 1, 32>}, {transform_indices = @transform_14, window_bounds = array<i64: 8, 32>}]} {
    %c0 = arith.constant 0 : index
    %c0_0 = arith.constant 0 : index
    %0 = vector.load %arg1[%c0, %c0_0] : memref<8x32xf32, #tpu.memory_space<vmem>>, vector<8x32xf32>
    %c0_1 = arith.constant 0 : index
    %c0_2 = arith.constant 0 : index
    %1 = vector.load %arg2[%c0_1, %c0_2] : memref<1x32xf32, #tpu.memory_space<vmem>>, vector<1x32xf32>
    %c0_3 = arith.constant 0 : index
    %c0_4 = arith.constant 0 : index
    %2 = vector.load %arg3[%c0_3, %c0_4] : memref<1x32xf32, #tpu.memory_space<vmem>>, vector<1x32xf32>
    %cst = arith.constant dense<0.000000e+00> : vector<8xf32>
    %3 = vector.multi_reduction <add>, %0, %cst [1] : vector<8x32xf32> to vector<8xf32>
    %4 = vector.shape_cast %3 : vector<8xf32> to vector<8x1xf32>
    %cst_5 = arith.constant 3.200000e+01 : f32
    %5 = vector.broadcast %cst_5 : f32 to vector<8x1xf32>
    %6 = arith.divf %4, %5 : vector<8x1xf32>
    %7 = vector.broadcast %6 : vector<8x1xf32> to vector<8x32xf32>
    %8 = arith.subf %0, %7 : vector<8x32xf32>
    %9 = arith.mulf %8, %8 : vector<8x32xf32>
    %cst_6 = arith.constant dense<0.000000e+00> : vector<8xf32>
    %10 = vector.multi_reduction <add>, %9, %cst_6 [1] : vector<8x32xf32> to vector<8xf32>
    %11 = vector.shape_cast %10 : vector<8xf32> to vector<8x1xf32>
    %cst_7 = arith.constant 3.200000e+01 : f32
    %12 = vector.broadcast %cst_7 : f32 to vector<8x1xf32>
    %13 = arith.divf %11, %12 : vector<8x1xf32>
    %14 = vector.broadcast %6 : vector<8x1xf32> to vector<8x32xf32>
    %15 = arith.subf %0, %14 : vector<8x32xf32>
    %cst_8 = arith.constant 9.99999974E-6 : f32
    %16 = vector.broadcast %cst_8 : f32 to vector<8x1xf32>
    %17 = arith.addf %13, %16 : vector<8x1xf32>
    %18 = math.rsqrt %17 : vector<8x1xf32>
    %19 = vector.broadcast %18 : vector<8x1xf32> to vector<8x32xf32>
    %20 = arith.mulf %15, %19 : vector<8x32xf32>
    %21 = vector.broadcast %1 : vector<1x32xf32> to vector<8x32xf32>
    %22 = arith.mulf %20, %21 : vector<8x32xf32>
    %23 = vector.broadcast %2 : vector<1x32xf32> to vector<8x32xf32>
    %24 = arith.addf %22, %23 : vector<8x32xf32>
    %25 = arith.truncf %24 : vector<8x32xf32> to vector<8x32xbf16>
    %c0_9 = arith.constant 0 : index
    %c0_10 = arith.constant 0 : index
    %26 = vector.load %arg4[%c0_9, %c0_10] : memref<32x384xbf16, #tpu.memory_space<vmem>>, vector<32x384xbf16>
    %cst_11 = arith.constant dense<0.000000e+00> : vector<8x384xf32>
    %27 = tpu.matmul %25, %26, %cst_11 {dimension_numbers = #tpu.dot_dimension_numbers<[1], [0], [0], [1], [0, 0, 1, 1], [], []>} : vector<8x32xbf16>, vector<32x384xbf16>, vector<8x384xf32> -> vector<8x384xf32>
    %c0_12 = arith.constant 0 : index
    %c0_13 = arith.constant 0 : index
    %28 = vector.load %arg5[%c0_12, %c0_13] : memref<1x384xf32, #tpu.memory_space<vmem>>, vector<1x384xf32>
    %29 = vector.broadcast %28 : vector<1x384xf32> to vector<8x384xf32>
    %30 = arith.addf %27, %29 : vector<8x384xf32>
    %31 = vector.extract_strided_slice %30 {offsets = [0, 0], sizes = [8, 128], strides = [1, 1]} : vector<8x384xf32> to vector<8x128xf32>
    %32 = vector.extract_strided_slice %30 {offsets = [0, 128], sizes = [8, 128], strides = [1, 1]} : vector<8x384xf32> to vector<8x128xf32>
    %33 = vector.extract_strided_slice %30 {offsets = [0, 256], sizes = [8, 128], strides = [1, 1]} : vector<8x384xf32> to vector<8x128xf32>
    %c0_14 = arith.constant 0 : index
    %c0_15 = arith.constant 0 : index
    %34 = vector.load %arg6[%c0_14, %c0_15] : memref<128x16xbf16, #tpu.memory_space<vmem>>, vector<128x16xbf16>
    %35 = arith.mulf %31, %31 : vector<8x128xf32>
    %cst_16 = arith.constant dense<0.000000e+00> : vector<8xf32>
    %36 = vector.multi_reduction <add>, %35, %cst_16 [1] : vector<8x128xf32> to vector<8xf32>
    %37 = vector.shape_cast %36 : vector<8xf32> to vector<8x1xf32>
    %cst_17 = arith.constant 5.000000e-01 : f32
    %38 = vector.broadcast %cst_17 : f32 to vector<8x1xf32>
    %39 = arith.mulf %38, %37 : vector<8x1xf32>
    %40 = arith.truncf %31 : vector<8x128xf32> to vector<8x128xbf16>
    %cst_18 = arith.constant dense<0.000000e+00> : vector<8x16xf32>
    %41 = tpu.matmul %40, %34, %cst_18 {dimension_numbers = #tpu.dot_dimension_numbers<[1], [0], [0], [1], [0, 0, 1, 1], [], []>} : vector<8x128xbf16>, vector<128x16xbf16>, vector<8x16xf32> -> vector<8x16xf32>
    %42 = vector.broadcast %39 : vector<8x1xf32> to vector<8x16xf32>
    %43 = arith.subf %41, %42 : vector<8x16xf32>
    %44 = math.exp %43 : vector<8x16xf32>
    %cst_19 = arith.constant 2.500000e-01 : f32
    %45 = vector.broadcast %cst_19 : f32 to vector<8x16xf32>
    %46 = arith.mulf %44, %45 : vector<8x16xf32>
    %47 = arith.mulf %32, %32 : vector<8x128xf32>
    %cst_20 = arith.constant dense<0.000000e+00> : vector<8xf32>
    %48 = vector.multi_reduction <add>, %47, %cst_20 [1] : vector<8x128xf32> to vector<8xf32>
    %49 = vector.shape_cast %48 : vector<8xf32> to vector<8x1xf32>
    %cst_21 = arith.constant 5.000000e-01 : f32
    %50 = vector.broadcast %cst_21 : f32 to vector<8x1xf32>
    %51 = arith.mulf %50, %49 : vector<8x1xf32>
    %52 = arith.truncf %32 : vector<8x128xf32> to vector<8x128xbf16>
    %cst_22 = arith.constant dense<0.000000e+00> : vector<8x16xf32>
    %53 = tpu.matmul %52, %34, %cst_22 {dimension_numbers = #tpu.dot_dimension_numbers<[1], [0], [0], [1], [0, 0, 1, 1], [], []>} : vector<8x128xbf16>, vector<128x16xbf16>, vector<8x16xf32> -> vector<8x16xf32>
    %54 = vector.broadcast %51 : vector<8x1xf32> to vector<8x16xf32>
    %55 = arith.subf %53, %54 : vector<8x16xf32>
    %56 = math.exp %55 : vector<8x16xf32>
    %cst_23 = arith.constant 2.500000e-01 : f32
    %57 = vector.broadcast %cst_23 : f32 to vector<8x16xf32>
    %58 = arith.mulf %56, %57 : vector<8x16xf32>
    %59 = vector.shape_cast %46 : vector<8x16xf32> to vector<1x8x16xf32>
    %60 = vector.shape_cast %58 : vector<8x16xf32> to vector<1x8x16xf32>
    %61 = vector.shape_cast %33 : vector<8x128xf32> to vector<1x8x128xf32>
    %cst_24 = arith.constant dense<0.000000e+00> : vector<1x16xf32>
    %62 = vector.multi_reduction <add>, %59, %cst_24 [1] : vector<1x8x16xf32> to vector<1x16xf32>
    %63 = vector.shape_cast %62 : vector<1x16xf32> to vector<1x1x16xf32>
    %64 = vector.broadcast %63 : vector<1x1x16xf32> to vector<1x8x16xf32>
    %65 = arith.mulf %60, %64 : vector<1x8x16xf32>
    %cst_25 = arith.constant dense<0.000000e+00> : vector<1x8xf32>
    %66 = vector.multi_reduction <add>, %65, %cst_25 [2] : vector<1x8x16xf32> to vector<1x8xf32>
    %67 = vector.shape_cast %66 : vector<1x8xf32> to vector<1x8x1xf32>
    %68 = vector.shape_cast %67 : vector<1x8x1xf32> to vector<8x1xf32>
    %69 = arith.truncf %59 : vector<1x8x16xf32> to vector<1x8x16xbf16>
    %70 = arith.truncf %61 : vector<1x8x128xf32> to vector<1x8x128xbf16>
    "tpu.trace_start"() <{level = 10 : i32, message = "btn,bte->bne"}> : () -> ()
    %cst_26 = arith.constant dense<0.000000e+00> : vector<1x16x128xf32>
    %71 = tpu.matmul %69, %70, %cst_26 {dimension_numbers = #tpu.dot_dimension_numbers<[1], [1], [2], [2], [0, 0, 0, 2, 1, 2], [0], [0]>} : vector<1x8x16xbf16>, vector<1x8x128xbf16>, vector<1x16x128xf32> -> vector<1x16x128xf32>
    "tpu.trace_stop"() : () -> ()
    %72 = arith.truncf %60 : vector<1x8x16xf32> to vector<1x8x16xbf16>
    %73 = arith.truncf %71 : vector<1x16x128xf32> to vector<1x16x128xbf16>
    "tpu.trace_start"() <{level = 10 : i32, message = "btn,bne->bte"}> : () -> ()
    %cst_27 = arith.constant dense<0.000000e+00> : vector<1x8x128xf32>
    %74 = tpu.matmul %72, %73, %cst_27 {dimension_numbers = #tpu.dot_dimension_numbers<[2], [1], [1], [2], [0, 0, 0, 1, 1, 2], [0], [0]>} : vector<1x8x16xbf16>, vector<1x16x128xbf16>, vector<1x8x128xf32> -> vector<1x8x128xf32>
    "tpu.trace_stop"() : () -> ()
    %75 = vector.shape_cast %74 : vector<1x8x128xf32> to vector<8x128xf32>
    %cst_28 = arith.constant 9.99999993E-9 : f32
    %76 = vector.broadcast %cst_28 : f32 to vector<8x1xf32>
    %77 = arith.addf %68, %76 : vector<8x1xf32>
    %78 = tpu.reciprocal %77 {approx = true} : vector<8x1xf32> -> vector<8x1xf32>
    %79 = vector.broadcast %78 : vector<8x1xf32> to vector<8x128xf32>
    %80 = arith.mulf %75, %79 : vector<8x128xf32>
    %81 = arith.truncf %80 : vector<8x128xf32> to vector<8x128xbf16>
    %c0_29 = arith.constant 0 : index
    %c0_30 = arith.constant 0 : index
    %82 = vector.load %arg7[%c0_29, %c0_30] : memref<128x32xbf16, #tpu.memory_space<vmem>>, vector<128x32xbf16>
    %cst_31 = arith.constant dense<0.000000e+00> : vector<8x32xf32>
    %83 = tpu.matmul %81, %82, %cst_31 {dimension_numbers = #tpu.dot_dimension_numbers<[1], [0], [0], [1], [0, 0, 1, 1], [], []>} : vector<8x128xbf16>, vector<128x32xbf16>, vector<8x32xf32> -> vector<8x32xf32>
    %c0_32 = arith.constant 0 : index
    %c0_33 = arith.constant 0 : index
    %84 = vector.load %arg8[%c0_32, %c0_33] : memref<1x32xf32, #tpu.memory_space<vmem>>, vector<1x32xf32>
    %85 = vector.broadcast %84 : vector<1x32xf32> to vector<8x32xf32>
    %86 = arith.addf %83, %85 : vector<8x32xf32>
    %87 = arith.addf %0, %86 : vector<8x32xf32>
    %c0_34 = arith.constant 0 : index
    %c0_35 = arith.constant 0 : index
    %88 = vector.load %arg9[%c0_34, %c0_35] : memref<1x32xf32, #tpu.memory_space<vmem>>, vector<1x32xf32>
    %c0_36 = arith.constant 0 : index
    %c0_37 = arith.constant 0 : index
    %89 = vector.load %arg10[%c0_36, %c0_37] : memref<1x32xf32, #tpu.memory_space<vmem>>, vector<1x32xf32>
    %cst_38 = arith.constant dense<0.000000e+00> : vector<8xf32>
    %90 = vector.multi_reduction <add>, %87, %cst_38 [1] : vector<8x32xf32> to vector<8xf32>
    %91 = vector.shape_cast %90 : vector<8xf32> to vector<8x1xf32>
    %cst_39 = arith.constant 3.200000e+01 : f32
    %92 = vector.broadcast %cst_39 : f32 to vector<8x1xf32>
    %93 = arith.divf %91, %92 : vector<8x1xf32>
    %94 = vector.broadcast %93 : vector<8x1xf32> to vector<8x32xf32>
    %95 = arith.subf %87, %94 : vector<8x32xf32>
    %96 = arith.mulf %95, %95 : vector<8x32xf32>
    %cst_40 = arith.constant dense<0.000000e+00> : vector<8xf32>
    %97 = vector.multi_reduction <add>, %96, %cst_40 [1] : vector<8x32xf32> to vector<8xf32>
    %98 = vector.shape_cast %97 : vector<8xf32> to vector<8x1xf32>
    %cst_41 = arith.constant 3.200000e+01 : f32
    %99 = vector.broadcast %cst_41 : f32 to vector<8x1xf32>
    %100 = arith.divf %98, %99 : vector<8x1xf32>
    %101 = vector.broadcast %93 : vector<8x1xf32> to vector<8x32xf32>
    %102 = arith.subf %87, %101 : vector<8x32xf32>
    %cst_42 = arith.constant 9.99999974E-6 : f32
    %103 = vector.broadcast %cst_42 : f32 to vector<8x1xf32>
    %104 = arith.addf %100, %103 : vector<8x1xf32>
    %105 = math.rsqrt %104 : vector<8x1xf32>
    %106 = vector.broadcast %105 : vector<8x1xf32> to vector<8x32xf32>
    %107 = arith.mulf %102, %106 : vector<8x32xf32>
    %108 = vector.broadcast %88 : vector<1x32xf32> to vector<8x32xf32>
    %109 = arith.mulf %107, %108 : vector<8x32xf32>
    %110 = vector.broadcast %89 : vector<1x32xf32> to vector<8x32xf32>
    %111 = arith.addf %109, %110 : vector<8x32xf32>
    %112 = arith.truncf %111 : vector<8x32xf32> to vector<8x32xbf16>
    %c0_43 = arith.constant 0 : index
    %c0_44 = arith.constant 0 : index
    %113 = vector.load %arg11[%c0_43, %c0_44] : memref<32x32xbf16, #tpu.memory_space<vmem>>, vector<32x32xbf16>
    %cst_45 = arith.constant dense<0.000000e+00> : vector<8x32xf32>
    %114 = tpu.matmul %112, %113, %cst_45 {dimension_numbers = #tpu.dot_dimension_numbers<[1], [0], [0], [1], [0, 0, 1, 1], [], []>} : vector<8x32xbf16>, vector<32x32xbf16>, vector<8x32xf32> -> vector<8x32xf32>
    %c0_46 = arith.constant 0 : index
    %c0_47 = arith.constant 0 : index
    %115 = vector.load %arg12[%c0_46, %c0_47] : memref<1x32xf32, #tpu.memory_space<vmem>>, vector<1x32xf32>
    %116 = vector.broadcast %115 : vector<1x32xf32> to vector<8x32xf32>
    %117 = arith.addf %114, %116 : vector<8x32xf32>
    %cst_48 = arith.constant 5.000000e-01 : f32
    %118 = vector.broadcast %cst_48 : f32 to vector<8x32xf32>
    %119 = arith.mulf %118, %117 : vector<8x32xf32>
    %cst_49 = arith.constant 0.707106769 : f32
    %120 = vector.broadcast %cst_49 : f32 to vector<8x32xf32>
    %121 = arith.mulf %117, %120 : vector<8x32xf32>
    %122 = math.erf %121 : vector<8x32xf32>
    %cst_50 = arith.constant 1.000000e+00 : f32
    %123 = vector.broadcast %cst_50 : f32 to vector<8x32xf32>
    %124 = arith.addf %123, %122 : vector<8x32xf32>
    %125 = arith.mulf %119, %124 : vector<8x32xf32>
    %126 = arith.truncf %125 : vector<8x32xf32> to vector<8x32xbf16>
    %c0_51 = arith.constant 0 : index
    %c0_52 = arith.constant 0 : index
    %127 = vector.load %arg13[%c0_51, %c0_52] : memref<32x32xbf16, #tpu.memory_space<vmem>>, vector<32x32xbf16>
    %cst_53 = arith.constant dense<0.000000e+00> : vector<8x32xf32>
    %128 = tpu.matmul %126, %127, %cst_53 {dimension_numbers = #tpu.dot_dimension_numbers<[1], [0], [0], [1], [0, 0, 1, 1], [], []>} : vector<8x32xbf16>, vector<32x32xbf16>, vector<8x32xf32> -> vector<8x32xf32>
    %c0_54 = arith.constant 0 : index
    %c0_55 = arith.constant 0 : index
    %129 = vector.load %arg14[%c0_54, %c0_55] : memref<1x32xf32, #tpu.memory_space<vmem>>, vector<1x32xf32>
    %130 = vector.broadcast %129 : vector<1x32xf32> to vector<8x32xf32>
    %131 = arith.addf %128, %130 : vector<8x32xf32>
    %132 = arith.addf %87, %131 : vector<8x32xf32>
    %c0_56 = arith.constant 0 : index
    %c0_57 = arith.constant 0 : index
    %133 = vector.load %arg15[%c0_56, %c0_57] : memref<8x32xf32, #tpu.memory_space<vmem>>, vector<8x32xf32>
    tpu.vector_store %arg15[%c0_56, %c0_57], %132 {strides = array<i32>} : memref<8x32xf32, #tpu.memory_space<vmem>>, vector<8x32xf32>,
    return
  }
  func.func @transform_0(%arg0: i32) -> (i32, i32) {
    %c0_i32 = arith.constant 0 : i32
    %c0_i32_0 = arith.constant 0 : i32
    return %arg0, %c0_i32 : i32, i32
  }
  func.func @transform_1(%arg0: i32) -> (i32, i32) {
    %c0_i32 = arith.constant 0 : i32
    %c0_i32_0 = arith.constant 0 : i32
    %c0_i32_1 = arith.constant 0 : i32
    return %c0_i32, %c0_i32_0 : i32, i32
  }
  func.func @transform_2(%arg0: i32) -> (i32, i32) {
    %c0_i32 = arith.constant 0 : i32
    %c0_i32_0 = arith.constant 0 : i32
    %c0_i32_1 = arith.constant 0 : i32
    return %c0_i32, %c0_i32_0 : i32, i32
  }
  func.func @transform_3(%arg0: i32) -> (i32, i32) {
    %c0_i32 = arith.constant 0 : i32
    %c0_i32_0 = arith.constant 0 : i32
    %c0_i32_1 = arith.constant 0 : i32
    return %c0_i32, %c0_i32_0 : i32, i32
  }
  func.func @transform_4(%arg0: i32) -> (i32, i32) {
    %c0_i32 = arith.constant 0 : i32
    %c0_i32_0 = arith.constant 0 : i32
    %c0_i32_1 = arith.constant 0 : i32
    return %c0_i32, %c0_i32_0 : i32, i32
  }
  func.func @transform_5(%arg0: i32) -> (i32, i32) {
    %c0_i32 = arith.constant 0 : i32
    %c0_i32_0 = arith.constant 0 : i32
    %c0_i32_1 = arith.constant 0 : i32
    return %c0_i32, %c0_i32_0 : i32, i32
  }
  func.func @transform_6(%arg0: i32) -> (i32, i32) {
    %c0_i32 = arith.constant 0 : i32
    %c0_i32_0 = arith.constant 0 : i32
    %c0_i32_1 = arith.constant 0 : i32
    return %c0_i32, %c0_i32_0 : i32, i32
  }
  func.func @transform_7(%arg0: i32) -> (i32, i32) {
    %c0_i32 = arith.constant 0 : i32
    %c0_i32_0 = arith.constant 0 : i32
    %c0_i32_1 = arith.constant 0 : i32
    return %c0_i32, %c0_i32_0 : i32, i32
  }
  func.func @transform_8(%arg0: i32) -> (i32, i32) {
    %c0_i32 = arith.constant 0 : i32
    %c0_i32_0 = arith.constant 0 : i32
    %c0_i32_1 = arith.constant 0 : i32
    return %c0_i32, %c0_i32_0 : i32, i32
  }
  func.func @transform_9(%arg0: i32) -> (i32, i32) {
    %c0_i32 = arith.constant 0 : i32
    %c0_i32_0 = arith.constant 0 : i32
    %c0_i32_1 = arith.constant 0 : i32
    return %c0_i32, %c0_i32_0 : i32, i32
  }
  func.func @transform_10(%arg0: i32) -> (i32, i32) {
    %c0_i32 = arith.constant 0 : i32
    %c0_i32_0 = arith.constant 0 : i32
    %c0_i32_1 = arith.constant 0 : i32
    return %c0_i32, %c0_i32_0 : i32, i32
  }
  func.func @transform_11(%arg0: i32) -> (i32, i32) {
    %c0_i32 = arith.constant 0 : i32
    %c0_i32_0 = arith.constant 0 : i32
    %c0_i32_1 = arith.constant 0 : i32
    return %c0_i32, %c0_i32_0 : i32, i32
  }
  func.func @transform_12(%arg0: i32) -> (i32, i32) {
    %c0_i32 = arith.constant 0 : i32
    %c0_i32_0 = arith.constant 0 : i32
    %c0_i32_1 = arith.constant 0 : i32
    return %c0_i32, %c0_i32_0 : i32, i32
  }
  func.func @transform_13(%arg0: i32) -> (i32, i32) {
    %c0_i32 = arith.constant 0 : i32
    %c0_i32_0 = arith.constant 0 : i32
    %c0_i32_1 = arith.constant 0 : i32
    return %c0_i32, %c0_i32_0 : i32, i32
  }
  func.func @transform_14(%arg0: i32) -> (i32, i32) {
    %c0_i32 = arith.constant 0 : i32
    %c0_i32_0 = arith.constant 0 : i32
    return %arg0, %c0_i32 : i32, i32
  }
}

</mosaic_0001>

<llo_original>
// kernel: tpu_custom_call.1
$region0: #{tpu_custom_call.1}
  #allocation0 [shape = 'u32[]', space=smem, size = 0x4, offset = 0x4, fixed_abs, tag = 'smem constant byte address 0x4 - core index']
  #allocation1 [shape = 'u32[144,128]{1,0:T(1,128)}', space=vmem, size = 0x12000, scoped, tag = 'internal scratch']
  %s0 = inlined_call_operand.hbm [shape: f32[16,32], index: 0, kind: input, shape index: {}]
  %s1 = inlined_call_operand.hbm [shape: f32[1,32], index: 1, kind: input, shape index: {}]
  %s2 = inlined_call_operand.hbm [shape: f32[1,32], index: 2, kind: input, shape index: {}]
  %s3 = inlined_call_operand.hbm [shape: bf16[32,384], index: 3, kind: input, shape index: {}]
  %s4 = inlined_call_operand.hbm [shape: f32[1,384], index: 4, kind: input, shape index: {}]
  %s5 = inlined_call_operand.hbm [shape: bf16[128,16], index: 5, kind: input, shape index: {}]
  %s6 = inlined_call_operand.hbm [shape: bf16[128,32], index: 6, kind: input, shape index: {}]
  %s7 = inlined_call_operand.hbm [shape: f32[1,32], index: 7, kind: input, shape index: {}]
  %s8 = inlined_call_operand.hbm [shape: f32[1,32], index: 8, kind: input, shape index: {}]
  %s9 = inlined_call_operand.hbm [shape: f32[1,32], index: 9, kind: input, shape index: {}]
  %s10 = inlined_call_operand.hbm [shape: bf16[32,32], index: 10, kind: input, shape index: {}]
  %s11 = inlined_call_operand.hbm [shape: f32[1,32], index: 11, kind: input, shape index: {}]
  %s12 = inlined_call_operand.hbm [shape: bf16[32,32], index: 12, kind: input, shape index: {}]
  %s13 = inlined_call_operand.hbm [shape: f32[1,32], index: 13, kind: input, shape index: {}]
  %s14 = inlined_call_operand.hbm [shape: f32[16,32], index: 14, kind: output, shape index: {}]
  %s15 = sld [smem:[#allocation0]]
  $region145: #{tpu_custom_call.1} parent=0
    _
  %s17 = ssub.s32 1, %s15
  %s18 = scalar_select 0, %s17, %s15
  $region1: #{tpu_custom_call.1} parent=0
    #allocation2 [shape = 'u8[8192]{0}', space=vmem, size = 0x2000, scoped, tag = 'input window, operand 0']
    #allocation3 [shape = 's32[2]{0}', space=sflag, size = 0x8, scoped, tag = 'scoped memory for tpu_custom_call.1']
    #allocation4 [shape = 's32[2]{0}', space=sflag, size = 0x8, scoped, tag = 'scoped memory for tpu_custom_call.1']
    #allocation5 [shape = 'u8[512]{0}', space=vmem, size = 0x400, scoped, tag = 'input window, operand 1, single buffered']
    #allocation6 [shape = 's32[1]{0}', space=sflag, size = 0x4, scoped, tag = 'scoped memory for tpu_custom_call.1']
    #allocation7 [shape = 'u8[512]{0}', space=vmem, size = 0x400, scoped, tag = 'input window, operand 2, single buffered']
    #allocation8 [shape = 'u8[24576]{0}', space=vmem, size = 0x6000, scoped, tag = 'input window, operand 3, single buffered']
    #allocation9 [shape = 's32[1]{0}', space=sflag, size = 0x4, scoped, tag = 'scoped memory for tpu_custom_call.1']
    #allocation10 [shape = 'u8[1536]{0}', space=vmem, size = 0x800, scoped, tag = 'input window, operand 4, single buffered']
    #allocation11 [shape = 'u8[32768]{0}', space=vmem, size = 0x8000, scoped, tag = 'input window, operand 5, single buffered']
    #allocation12 [shape = 's32[1]{0}', space=sflag, size = 0x4, scoped, tag = 'scoped memory for tpu_custom_call.1']
    #allocation13 [shape = 'u8[32768]{0}', space=vmem, size = 0x8000, scoped, tag = 'input window, operand 6, single buffered']
    #allocation14 [shape = 'u8[512]{0}', space=vmem, size = 0x400, scoped, tag = 'input window, operand 7, single buffered']
    #allocation15 [shape = 's32[1]{0}', space=sflag, size = 0x4, scoped, tag = 'scoped memory for tpu_custom_call.1']
    #allocation16 [shape = 'u8[512]{0}', space=vmem, size = 0x400, scoped, tag = 'input window, operand 8, single buffered']
    #allocation17 [shape = 'u8[512]{0}', space=vmem, size = 0x400, scoped, tag = 'input window, operand 9, single buffered']
    #allocation18 [shape = 's32[1]{0}', space=sflag, size = 0x4, scoped, tag = 'scoped memory for tpu_custom_call.1']
    #allocation19 [shape = 'u8[8192]{0}', space=vmem, size = 0x2000, scoped, tag = 'input window, operand 10, single buffered']
    #allocation20 [shape = 'u8[512]{0}', space=vmem, size = 0x400, scoped, tag = 'input window, operand 11, single buffered']
    #allocation21 [shape = 's32[1]{0}', space=sflag, size = 0x4, scoped, tag = 'scoped memory for tpu_custom_call.1']
    #allocation22 [shape = 'u8[8192]{0}', space=vmem, size = 0x2000, scoped, tag = 'input window, operand 12, single buffered']
    #allocation23 [shape = 'u8[512]{0}', space=vmem, size = 0x400, scoped, tag = 'input window, operand 13, single buffered']
    #allocation24 [shape = 's32[1]{0}', space=sflag, size = 0x4, scoped, tag = 'scoped memory for tpu_custom_call.1']
    #allocation25 [shape = 'u8[8192]{0}', space=vmem, size = 0x2000, scoped, tag = 'output window, operand 0']
    %19 = vsyncpa [#allocation3], 0
    %s20 = scalar_lea.sflag [#allocation3], 1
    %21 = vsyncpa %s20, 0
    %22 = vsyncpa [#allocation6], 0
    %23 = vsyncpa [#allocation9], 0
    %24 = vsyncpa [#allocation12], 0
    %25 = vsyncpa [#allocation15], 0
    %26 = vsyncpa [#allocation18], 0
    %27 = vsyncpa [#allocation21], 0
    %28 = vsyncpa [#allocation24], 0
    %29 = vsyncpa [#allocation4], 0
    %s30 = scalar_lea.sflag [#allocation4], 1
    %31 = vsyncpa %s30, 0
    loop: start=0, step=1, limit=4
    $region2: #{tpu_custom_call.1} parent=1 // loop_pre_header
      _
    $region3: #{tpu_custom_call.1} parent=1 // loop_header
      %s33 = sphi 0, %s37
      %p34 = scmp.ge.s32.totalorder %s33, 4
      %s43 = sphi 0, %s45
      %s46 = sphi 0, %s43
      %s47 = sphi 0, %s46
      %s63 = sphi 0, %s47
      %s67 = sphi 0, %s67
      %s69 = sphi 0, %s67
      %s70 = sphi 0, %s69
      %s84 = sphi 0, %s70
      %s88 = sphi 0, %s88
      %s90 = sphi 0, %s88
      %s91 = sphi 0, %s90
      %s105 = sphi 0, %s91
      %s109 = sphi 0, %s109
      %s111 = sphi 0, %s109
      %s112 = sphi 0, %s111
      %s126 = sphi 0, %s112
      %s130 = sphi 0, %s130
      %s132 = sphi 0, %s130
      %s133 = sphi 0, %s132
      %s147 = sphi 0, %s133
      %s151 = sphi 0, %s151
      %s153 = sphi 0, %s151
      %s154 = sphi 0, %s153
      %s168 = sphi 0, %s154
      %s172 = sphi 0, %s172
      %s174 = sphi 0, %s172
      %s175 = sphi 0, %s174
      %s189 = sphi 0, %s175
      %s193 = sphi 0, %s193
      %s195 = sphi 0, %s193
      %s196 = sphi 0, %s195
      %s210 = sphi 0, %s196
      %s214 = sphi 0, %s214
      %s216 = sphi 0, %s214
      %s217 = sphi 0, %s216
      %s231 = sphi 0, %s217
      %s235 = sphi 0, %s235
      %s237 = sphi 0, %s235
      %s238 = sphi 0, %s237
      %s252 = sphi 0, %s238
      %s256 = sphi 0, %s256
      %s258 = sphi 0, %s256
      %s259 = sphi 0, %s258
      %s273 = sphi 0, %s259
      %s277 = sphi 0, %s277
      %s279 = sphi 0, %s277
      %s280 = sphi 0, %s279
      %s294 = sphi 0, %s280
      %s298 = sphi 0, %s298
      %s300 = sphi 0, %s298
      %s301 = sphi 0, %s300
      %s315 = sphi 0, %s301
      %s319 = sphi 0, %s319
      %s321 = sphi 0, %s319
      %s322 = sphi 0, %s321
      %s336 = sphi 0, %s322
      %s342 = sphi 0, %s344
      %s345 = sphi 0, %s342
      %s346 = sphi 0, %s345
      %s362 = sphi 0, %s346
    $region4: #{tpu_custom_call.1} parent=1 // loop_header_branch
      %36 = sbr.rel (%p34) target = $region8
    $region5: #{tpu_custom_call.1} parent=1 // loop_body
      %s38 = ssub.s32 %s33, 1
      %s39 = ssub.s32 %s33, 2
      %s40 = sadd.s32 %s33, 1
      %s41 = ssub.s32 %s33, %s40
      %p42 = scmp.eq.s32.totalorder %s41, 0
      %s44 = sadd.s32 %s43, 1
      %s45 = scalar_select %p42, %s43, %s44
      %p48 = pneg %p42
      %p49 = scmp.eq.s32.totalorder %s33, 1
      %p50 = por %p48, %p49
      %p51 = scmp.ne.s32.totalorder %s43, %s46
      %p52 = scmp.eq.s32.totalorder %s33, 0
      %p53 = por %p51, %p52
      %p54 = scmp.ne.s32.totalorder %s43, %s46
      %p55 = scmp.eq.s32.totalorder %s38, 1
      %p56 = por %p54, %p55
      %p57 = scmp.ne.s32.totalorder %s46, %s47
      %p58 = scmp.eq.s32.totalorder %s38, 0
      %p59 = por %p57, %p58
      %p60 = scmp.ne.s32.totalorder %s46, %s47
      %p61 = scmp.eq.s32.totalorder %s39, 1
      %p62 = por %p60, %p61
      %p64 = scmp.ne.s32.totalorder %s47, %s63
      %p65 = scmp.eq.s32.totalorder %s39, 0
      %p66 = por %p64, %p65
      %s68 = sadd.s32 %s67, 1
      %p71 = scmp.eq.s32.totalorder %s33, 1
      %p72 = scmp.ne.s32.totalorder %s67, %s69
      %p73 = scmp.eq.s32.totalorder %s33, 0
      %p74 = por %p72, %p73
      %p75 = scmp.ne.s32.totalorder %s67, %s69
      %p76 = scmp.eq.s32.totalorder %s38, 1
      %p77 = por %p75, %p76
      %p78 = scmp.ne.s32.totalorder %s69, %s70
      %p79 = scmp.eq.s32.totalorder %s38, 0
      %p80 = por %p78, %p79
      %p81 = scmp.ne.s32.totalorder %s69, %s70
      %p82 = scmp.eq.s32.totalorder %s39, 1
      %p83 = por %p81, %p82
      %p85 = scmp.ne.s32.totalorder %s70, %s84
      %p86 = scmp.eq.s32.totalorder %s39, 0
      %p87 = por %p85, %p86
      %s89 = sadd.s32 %s88, 1
      %p92 = scmp.eq.s32.totalorder %s33, 1
      %p93 = scmp.ne.s32.totalorder %s88, %s90
      %p94 = scmp.eq.s32.totalorder %s33, 0
      %p95 = por %p93, %p94
      %p96 = scmp.ne.s32.totalorder %s88, %s90
      %p97 = scmp.eq.s32.totalorder %s38, 1
      %p98 = por %p96, %p97
      %p99 = scmp.ne.s32.totalorder %s90, %s91
      %p100 = scmp.eq.s32.totalorder %s38, 0
      %p101 = por %p99, %p100
      %p102 = scmp.ne.s32.totalorder %s90, %s91
      %p103 = scmp.eq.s32.totalorder %s39, 1
      %p104 = por %p102, %p103
      %p106 = scmp.ne.s32.totalorder %s91, %s105
      %p107 = scmp.eq.s32.totalorder %s39, 0
      %p108 = por %p106, %p107
      %s110 = sadd.s32 %s109, 1
      %p113 = scmp.eq.s32.totalorder %s33, 1
      %p114 = scmp.ne.s32.totalorder %s109, %s111
      %p115 = scmp.eq.s32.totalorder %s33, 0
      %p116 = por %p114, %p115
      %p117 = scmp.ne.s32.totalorder %s109, %s111
      %p118 = scmp.eq.s32.totalorder %s38, 1
      %p119 = por %p117, %p118
      %p120 = scmp.ne.s32.totalorder %s111, %s112
      %p121 = scmp.eq.s32.totalorder %s38, 0
      %p122 = por %p120, %p121
      %p123 = scmp.ne.s32.totalorder %s111, %s112
      %p124 = scmp.eq.s32.totalorder %s39, 1
      %p125 = por %p123, %p124
      %p127 = scmp.ne.s32.totalorder %s112, %s126
      %p128 = scmp.eq.s32.totalorder %s39, 0
      %p129 = por %p127, %p128
      %s131 = sadd.s32 %s130, 1
      %p134 = scmp.eq.s32.totalorder %s33, 1
      %p135 = scmp.ne.s32.totalorder %s130, %s132
      %p136 = scmp.eq.s32.totalorder %s33, 0
      %p137 = por %p135, %p136
      %p138 = scmp.ne.s32.totalorder %s130, %s132
      %p139 = scmp.eq.s32.totalorder %s38, 1
      %p140 = por %p138, %p139
      %p141 = scmp.ne.s32.totalorder %s132, %s133
      %p142 = scmp.eq.s32.totalorder %s38, 0
      %p143 = por %p141, %p142
      %p144 = scmp.ne.s32.totalorder %s132, %s133
      %p145 = scmp.eq.s32.totalorder %s39, 1
      %p146 = por %p144, %p145
      %p148 = scmp.ne.s32.totalorder %s133, %s147
      %p149 = scmp.eq.s32.totalorder %s39, 0
      %p150 = por %p148, %p149
      %s152 = sadd.s32 %s151, 1
      %p155 = scmp.eq.s32.totalorder %s33, 1
      %p156 = scmp.ne.s32.totalorder %s151, %s153
      %p157 = scmp.eq.s32.totalorder %s33, 0
      %p158 = por %p156, %p157
      %p159 = scmp.ne.s32.totalorder %s151, %s153
      %p160 = scmp.eq.s32.totalorder %s38, 1
      %p161 = por %p159, %p160
      %p162 = scmp.ne.s32.totalorder %s153, %s154
      %p163 = scmp.eq.s32.totalorder %s38, 0
      %p164 = por %p162, %p163
      %p165 = scmp.ne.s32.totalorder %s153, %s154
      %p166 = scmp.eq.s32.totalorder %s39, 1
      %p167 = por %p165, %p166
      %p169 = scmp.ne.s32.totalorder %s154, %s168
      %p170 = scmp.eq.s32.totalorder %s39, 0
      %p171 = por %p169, %p170
      %s173 = sadd.s32 %s172, 1
      %p176 = scmp.eq.s32.totalorder %s33, 1
      %p177 = scmp.ne.s32.totalorder %s172, %s174
      %p178 = scmp.eq.s32.totalorder %s33, 0
      %p179 = por %p177, %p178
      %p180 = scmp.ne.s32.totalorder %s172, %s174
      %p181 = scmp.eq.s32.totalorder %s38, 1
      %p182 = por %p180, %p181
      %p183 = scmp.ne.s32.totalorder %s174, %s175
      %p184 = scmp.eq.s32.totalorder %s38, 0
      %p185 = por %p183, %p184
      %p186 = scmp.ne.s32.totalorder %s174, %s175
      %p187 = scmp.eq.s32.totalorder %s39, 1
      %p188 = por %p186, %p187
      %p190 = scmp.ne.s32.totalorder %s175, %s189
      %p191 = scmp.eq.s32.totalorder %s39, 0
      %p192 = por %p190, %p191
      %s194 = sadd.s32 %s193, 1
      %p197 = scmp.eq.s32.totalorder %s33, 1
      %p198 = scmp.ne.s32.totalorder %s193, %s195
      %p199 = scmp.eq.s32.totalorder %s33, 0
      %p200 = por %p198, %p199
      %p201 = scmp.ne.s32.totalorder %s193, %s195
      %p202 = scmp.eq.s32.totalorder %s38, 1
      %p203 = por %p201, %p202
      %p204 = scmp.ne.s32.totalorder %s195, %s196
      %p205 = scmp.eq.s32.totalorder %s38, 0
      %p206 = por %p204, %p205
      %p207 = scmp.ne.s32.totalorder %s195, %s196
      %p208 = scmp.eq.s32.totalorder %s39, 1
      %p209 = por %p207, %p208
      %p211 = scmp.ne.s32.totalorder %s196, %s210
      %p212 = scmp.eq.s32.totalorder %s39, 0
      %p213 = por %p211, %p212
      %s215 = sadd.s32 %s214, 1
      %p218 = scmp.eq.s32.totalorder %s33, 1
      %p219 = scmp.ne.s32.totalorder %s214, %s216
      %p220 = scmp.eq.s32.totalorder %s33, 0
      %p221 = por %p219, %p220
      %p222 = scmp.ne.s32.totalorder %s214, %s216
      %p223 = scmp.eq.s32.totalorder %s38, 1
      %p224 = por %p222, %p223
      %p225 = scmp.ne.s32.totalorder %s216, %s217
      %p226 = scmp.eq.s32.totalorder %s38, 0
      %p227 = por %p225, %p226
      %p228 = scmp.ne.s32.totalorder %s216, %s217
      %p229 = scmp.eq.s32.totalorder %s39, 1
      %p230 = por %p228, %p229
      %p232 = scmp.ne.s32.totalorder %s217, %s231
      %p233 = scmp.eq.s32.totalorder %s39, 0
      %p234 = por %p232, %p233
      %s236 = sadd.s32 %s235, 1
      %p239 = scmp.eq.s32.totalorder %s33, 1
      %p240 = scmp.ne.s32.totalorder %s235, %s237
      %p241 = scmp.eq.s32.totalorder %s33, 0
      %p242 = por %p240, %p241
      %p243 = scmp.ne.s32.totalorder %s235, %s237
      %p244 = scmp.eq.s32.totalorder %s38, 1
      %p245 = por %p243, %p244
      %p246 = scmp.ne.s32.totalorder %s237, %s238
      %p247 = scmp.eq.s32.totalorder %s38, 0
      %p248 = por %p246, %p247
      %p249 = scmp.ne.s32.totalorder %s237, %s238
      %p250 = scmp.eq.s32.totalorder %s39, 1
      %p251 = por %p249, %p250
      %p253 = scmp.ne.s32.totalorder %s238, %s252
      %p254 = scmp.eq.s32.totalorder %s39, 0
      %p255 = por %p253, %p254
      %s257 = sadd.s32 %s256, 1
      %p260 = scmp.eq.s32.totalorder %s33, 1
      %p261 = scmp.ne.s32.totalorder %s256, %s258
      %p262 = scmp.eq.s32.totalorder %s33, 0
      %p263 = por %p261, %p262
      %p264 = scmp.ne.s32.totalorder %s256, %s258
      %p265 = scmp.eq.s32.totalorder %s38, 1
      %p266 = por %p264, %p265
      %p267 = scmp.ne.s32.totalorder %s258, %s259
      %p268 = scmp.eq.s32.totalorder %s38, 0
      %p269 = por %p267, %p268
      %p270 = scmp.ne.s32.totalorder %s258, %s259
      %p271 = scmp.eq.s32.totalorder %s39, 1
      %p272 = por %p270, %p271
      %p274 = scmp.ne.s32.totalorder %s259, %s273
      %p275 = scmp.eq.s32.totalorder %s39, 0
      %p276 = por %p274, %p275
      %s278 = sadd.s32 %s277, 1
      %p281 = scmp.eq.s32.totalorder %s33, 1
      %p282 = scmp.ne.s32.totalorder %s277, %s279
      %p283 = scmp.eq.s32.totalorder %s33, 0
      %p284 = por %p282, %p283
      %p285 = scmp.ne.s32.totalorder %s277, %s279
      %p286 = scmp.eq.s32.totalorder %s38, 1
      %p287 = por %p285, %p286
      %p288 = scmp.ne.s32.totalorder %s279, %s280
      %p289 = scmp.eq.s32.totalorder %s38, 0
      %p290 = por %p288, %p289
      %p291 = scmp.ne.s32.totalorder %s279, %s280
      %p292 = scmp.eq.s32.totalorder %s39, 1
      %p293 = por %p291, %p292
      %p295 = scmp.ne.s32.totalorder %s280, %s294
      %p296 = scmp.eq.s32.totalorder %s39, 0
      %p297 = por %p295, %p296
      %s299 = sadd.s32 %s298, 1
      %p302 = scmp.eq.s32.totalorder %s33, 1
      %p303 = scmp.ne.s32.totalorder %s298, %s300
      %p304 = scmp.eq.s32.totalorder %s33, 0
      %p305 = por %p303, %p304
      %p306 = scmp.ne.s32.totalorder %s298, %s300
      %p307 = scmp.eq.s32.totalorder %s38, 1
      %p308 = por %p306, %p307
      %p309 = scmp.ne.s32.totalorder %s300, %s301
      %p310 = scmp.eq.s32.totalorder %s38, 0
      %p311 = por %p309, %p310
      %p312 = scmp.ne.s32.totalorder %s300, %s301
      %p313 = scmp.eq.s32.totalorder %s39, 1
      %p314 = por %p312, %p313
      %p316 = scmp.ne.s32.totalorder %s301, %s315
      %p317 = scmp.eq.s32.totalorder %s39, 0
      %p318 = por %p316, %p317
      %s320 = sadd.s32 %s319, 1
      %p323 = scmp.eq.s32.totalorder %s33, 1
      %p324 = scmp.ne.s32.totalorder %s319, %s321
      %p325 = scmp.eq.s32.totalorder %s33, 0
      %p326 = por %p324, %p325
      %p327 = scmp.ne.s32.totalorder %s319, %s321
      %p328 = scmp.eq.s32.totalorder %s38, 1
      %p329 = por %p327, %p328
      %p330 = scmp.ne.s32.totalorder %s321, %s322
      %p331 = scmp.eq.s32.totalorder %s38, 0
      %p332 = por %p330, %p331
      %p333 = scmp.ne.s32.totalorder %s321, %s322
      %p334 = scmp.eq.s32.totalorder %s39, 1
      %p335 = por %p333, %p334
      %p337 = scmp.ne.s32.totalorder %s322, %s336
      %p338 = scmp.eq.s32.totalorder %s39, 0
      %p339 = por %p337, %p338
      %s340 = ssub.s32 %s33, %s40
      %p341 = scmp.eq.s32.totalorder %s340, 0
      %s343 = sadd.s32 %s342, 1
      %s344 = scalar_select %p341, %s342, %s343
      %p347 = pneg %p341
      %p348 = scmp.eq.s32.totalorder %s33, 1
      %p349 = por %p347, %p348
      %p350 = scmp.ne.s32.totalorder %s342, %s345
      %p351 = scmp.eq.s32.totalorder %s33, 0
      %p352 = por %p350, %p351
      %p353 = scmp.ne.s32.totalorder %s342, %s345
      %p354 = scmp.eq.s32.totalorder %s38, 1
      %p355 = por %p353, %p354
      %p356 = scmp.ne.s32.totalorder %s345, %s346
      %p357 = scmp.eq.s32.totalorder %s38, 0
      %p358 = por %p356, %p357
      %p359 = scmp.ne.s32.totalorder %s345, %s346
      %p360 = scmp.eq.s32.totalorder %s39, 1
      %p361 = por %p359, %p360
      %p363 = scmp.ne.s32.totalorder %s346, %s362
      %p364 = scmp.eq.s32.totalorder %s39, 0
      %p365 = por %p363, %p364
      %p366 = scmp.le.s32.totalorder 1, %s33
      %p367 = scmp.lt.s32.totalorder %s33, 3
      %p368 = pnand %p366, %p367
      %p369 = pneg %p368
      // Predicated region
      $region9: #{tpu_custom_call.1} parent=5 // pred_check
        _
      $region10: #{tpu_custom_call.1} parent=5 // pred_check_branch
        %371 = sbr.rel (%p368) target = $region12
      $region11: #{tpu_custom_call.1} parent=5 // pred_region
        %s372 = ssub.s32 %s33, 1
        // Predicated region
        $region13: #{tpu_custom_call.1} parent=11 // pred_check
          %p373 = pneg %p80
        $region14: #{tpu_custom_call.1} parent=11 // pred_check_branch
          %375 = sbr.rel (%p373) target = $region16
        $region15: #{tpu_custom_call.1} parent=11 // pred_region
          %s377 = ssub.s32 16, 16
          %378 = vsyncadd [#allocation6], %s377
          %s380 = sshll.u32 [#allocation5], 4
          %s381 = int_to_ptr.vmem [resolvable:$true] %s380
          %383 = dma.hbm_to_vmem [thread:$0]  %s1, 16, %s381, [#allocation6]
        $region16: #{tpu_custom_call.1} parent=11 // pred_fallthru
          _
        // Predicated region
        $region17: #{tpu_custom_call.1} parent=11 // pred_check
          %p384 = pneg %p101
        $region18: #{tpu_custom_call.1} parent=11 // pred_check_branch
          %386 = sbr.rel (%p384) target = $region20
        $region19: #{tpu_custom_call.1} parent=11 // pred_region
          %s388 = ssub.s32 16, 16
          %389 = vsyncadd [#allocation6], %s388
          %s391 = sshll.u32 [#allocation7], 4
          %s392 = int_to_ptr.vmem [resolvable:$true] %s391
          %394 = dma.hbm_to_vmem [thread:$0]  %s2, 16, %s392, [#allocation6]
        $region20: #{tpu_custom_call.1} parent=11 // pred_fallthru
          _
        // Predicated region
        $region21: #{tpu_custom_call.1} parent=11 // pred_check
          %p395 = pneg %p122
        $region22: #{tpu_custom_call.1} parent=11 // pred_check_branch
          %397 = sbr.rel (%p395) target = $region24
        $region23: #{tpu_custom_call.1} parent=11 // pred_region
          %s399 = ssub.s32 768, 768
          %400 = vsyncadd [#allocation9], %s399
          %s401 = sshll.u32 [#allocation8], 4
          %s402 = int_to_ptr.vmem [resolvable:$true] %s401
          %407 = dma.hbm_to_vmem [thread:$0]  %s3, 768, %s402, [#allocation9], 192, 192, 12
        $region24: #{tpu_custom_call.1} parent=11 // pred_fallthru
          _
        // Predicated region
        $region25: #{tpu_custom_call.1} parent=11 // pred_check
          %p408 = pneg %p143
        $region26: #{tpu_custom_call.1} parent=11 // pred_check_branch
          %410 = sbr.rel (%p408) target = $region28
        $region27: #{tpu_custom_call.1} parent=11 // pred_region
          %s412 = ssub.s32 48, 48
          %413 = vsyncadd [#allocation9], %s412
          %s415 = sshll.u32 [#allocation10], 4
          %s416 = int_to_ptr.vmem [resolvable:$true] %s415
          %418 = dma.hbm_to_vmem [thread:$0]  %s4, 48, %s416, [#allocation9]
        $region28: #{tpu_custom_call.1} parent=11 // pred_fallthru
          _
        // Predicated region
        $region29: #{tpu_custom_call.1} parent=11 // pred_check
          %p419 = pneg %p164
        $region30: #{tpu_custom_call.1} parent=11 // pred_check_branch
          %421 = sbr.rel (%p419) target = $region32
        $region31: #{tpu_custom_call.1} parent=11 // pred_region
          %s423 = ssub.s32 1024, 1024
          %424 = vsyncadd [#allocation12], %s423
          %s425 = sshll.u32 [#allocation11], 4
          %s426 = int_to_ptr.vmem [resolvable:$true] %s425
          %431 = dma.hbm_to_vmem [thread:$0]  %s5, 1024, %s426, [#allocation12], 64, 64, 4
        $region32: #{tpu_custom_call.1} parent=11 // pred_fallthru
          _
        // Predicated region
        $region33: #{tpu_custom_call.1} parent=11 // pred_check
          %p432 = pneg %p185
        $region34: #{tpu_custom_call.1} parent=11 // pred_check_branch
          %434 = sbr.rel (%p432) target = $region36
        $region35: #{tpu_custom_call.1} parent=11 // pred_region
          %s436 = ssub.s32 1024, 1024
          %437 = vsyncadd [#allocation12], %s436
          %s438 = sshll.u32 [#allocation13], 4
          %s439 = int_to_ptr.vmem [resolvable:$true] %s438
          %444 = dma.hbm_to_vmem [thread:$0]  %s6, 1024, %s439, [#allocation12], 64, 64, 4
        $region36: #{tpu_custom_call.1} parent=11 // pred_fallthru
          _
        // Predicated region
        $region37: #{tpu_custom_call.1} parent=11 // pred_check
          %p445 = pneg %p206
        $region38: #{tpu_custom_call.1} parent=11 // pred_check_branch
          %447 = sbr.rel (%p445) target = $region40
        $region39: #{tpu_custom_call.1} parent=11 // pred_region
          %s449 = ssub.s32 16, 16
          %450 = vsyncadd [#allocation15], %s449
          %s452 = sshll.u32 [#allocation14], 4
          %s453 = int_to_ptr.vmem [resolvable:$true] %s452
          %455 = dma.hbm_to_vmem [thread:$0]  %s7, 16, %s453, [#allocation15]
        $region40: #{tpu_custom_call.1} parent=11 // pred_fallthru
          _
        // Predicated region
        $region41: #{tpu_custom_call.1} parent=11 // pred_check
          %p456 = pneg %p227
        $region42: #{tpu_custom_call.1} parent=11 // pred_check_branch
          %458 = sbr.rel (%p456) target = $region44
        $region43: #{tpu_custom_call.1} parent=11 // pred_region
          %s460 = ssub.s32 16, 16
          %461 = vsyncadd [#allocation15], %s460
          %s463 = sshll.u32 [#allocation16], 4
          %s464 = int_to_ptr.vmem [resolvable:$true] %s463
          %466 = dma.hbm_to_vmem [thread:$0]  %s8, 16, %s464, [#allocation15]
        $region44: #{tpu_custom_call.1} parent=11 // pred_fallthru
          _
        // Predicated region
        $region45: #{tpu_custom_call.1} parent=11 // pred_check
          %p467 = pneg %p248
        $region46: #{tpu_custom_call.1} parent=11 // pred_check_branch
          %469 = sbr.rel (%p467) target = $region48
        $region47: #{tpu_custom_call.1} parent=11 // pred_region
          %s471 = ssub.s32 16, 16
          %472 = vsyncadd [#allocation18], %s471
          %s474 = sshll.u32 [#allocation17], 4
          %s475 = int_to_ptr.vmem [resolvable:$true] %s474
          %477 = dma.hbm_to_vmem [thread:$0]  %s9, 16, %s475, [#allocation18]
        $region48: #{tpu_custom_call.1} parent=11 // pred_fallthru
          _
        // Predicated region
        $region49: #{tpu_custom_call.1} parent=11 // pred_check
          %p478 = pneg %p269
        $region50: #{tpu_custom_call.1} parent=11 // pred_check_branch
          %480 = sbr.rel (%p478) target = $region52
        $region51: #{tpu_custom_call.1} parent=11 // pred_region
          %s482 = ssub.s32 256, 256
          %483 = vsyncadd [#allocation18], %s482
          %s484 = sshll.u32 [#allocation19], 4
          %s485 = int_to_ptr.vmem [resolvable:$true] %s484
          %490 = dma.hbm_to_vmem [thread:$0]  %s10, 256, %s485, [#allocation18], 64, 64, 4
        $region52: #{tpu_custom_call.1} parent=11 // pred_fallthru
          _
        // Predicated region
        $region53: #{tpu_custom_call.1} parent=11 // pred_check
          %p491 = pneg %p290
        $region54: #{tpu_custom_call.1} parent=11 // pred_check_branch
          %493 = sbr.rel (%p491) target = $region56
        $region55: #{tpu_custom_call.1} parent=11 // pred_region
          %s495 = ssub.s32 16, 16
          %496 = vsyncadd [#allocation21], %s495
          %s498 = sshll.u32 [#allocation20], 4
          %s499 = int_to_ptr.vmem [resolvable:$true] %s498
          %501 = dma.hbm_to_vmem [thread:$0]  %s11, 16, %s499, [#allocation21]
        $region56: #{tpu_custom_call.1} parent=11 // pred_fallthru
          _
        // Predicated region
        $region57: #{tpu_custom_call.1} parent=11 // pred_check
          %p502 = pneg %p311
        $region58: #{tpu_custom_call.1} parent=11 // pred_check_branch
          %504 = sbr.rel (%p502) target = $region60
        $region59: #{tpu_custom_call.1} parent=11 // pred_region
          %s506 = ssub.s32 256, 256
          %507 = vsyncadd [#allocation21], %s506
          %s508 = sshll.u32 [#allocation22], 4
          %s509 = int_to_ptr.vmem [resolvable:$true] %s508
          %514 = dma.hbm_to_vmem [thread:$0]  %s12, 256, %s509, [#allocation21], 64, 64, 4
        $region60: #{tpu_custom_call.1} parent=11 // pred_fallthru
          _
        // Predicated region
        $region61: #{tpu_custom_call.1} parent=11 // pred_check
          %p515 = pneg %p332
        $region62: #{tpu_custom_call.1} parent=11 // pred_check_branch
          %517 = sbr.rel (%p515) target = $region64
        $region63: #{tpu_custom_call.1} parent=11 // pred_region
          %s519 = ssub.s32 16, 16
          %520 = vsyncadd [#allocation24], %s519
          %s522 = sshll.u32 [#allocation23], 4
          %s523 = int_to_ptr.vmem [resolvable:$true] %s522
          %525 = dma.hbm_to_vmem [thread:$0]  %s13, 16, %s523, [#allocation24]
        $region64: #{tpu_custom_call.1} parent=11 // pred_fallthru
          _
      $region12: #{tpu_custom_call.1} parent=5 // pred_fallthru
        _
      %p526 = scmp.lt.s32.totalorder %s33, 2
      // Predicated region
      $region65: #{tpu_custom_call.1} parent=5 // pred_check
        %p527 = pneg %p526
      $region66: #{tpu_custom_call.1} parent=5 // pred_check_branch
        %529 = sbr.rel (%p527) target = $region68
      $region67: #{tpu_custom_call.1} parent=5 // pred_region
        // Predicated region
        $region69: #{tpu_custom_call.1} parent=67 // pred_check
          %p530 = pneg %p53
        $region70: #{tpu_custom_call.1} parent=67 // pred_check_branch
          %532 = sbr.rel (%p530) target = $region72
        $region71: #{tpu_custom_call.1} parent=67 // pred_region
          %s533 = sand.u32 %s43, 1
          %s534 = scalar_lea.sflag [#allocation3], %s533
          %s535 = sand.u32 %s43, 1
          %s536 = smul.addr %s535, 8
          %s537 = scalar_lea.vmem [#allocation2], %s536
          %s539 = ssub.s32 128, 128
          %540 = vsyncadd %s534, %s539
          %s541 = smul.addr %s33, 128
          %s542 = scalar_lea.hbm %s0, %s541
          %s544 = sshll.u32 %s537, 4
          %s545 = int_to_ptr.vmem [resolvable:$true] %s544
          %547 = dma.hbm_to_vmem [thread:$0]  %s542, 128, %s545, %s534
        $region72: #{tpu_custom_call.1} parent=67 // pred_fallthru
          _
      $region68: #{tpu_custom_call.1} parent=5 // pred_fallthru
        _
      %p548 = scmp.le.s32.totalorder 1, %s33
      %p549 = scmp.lt.s32.totalorder %s33, 3
      %p550 = pnand %p548, %p549
      %p551 = pneg %p550
      // Predicated region
      $region73: #{tpu_custom_call.1} parent=5 // pred_check
        _
      $region74: #{tpu_custom_call.1} parent=5 // pred_check_branch
        %553 = sbr.rel (%p550) target = $region76
      $region75: #{tpu_custom_call.1} parent=5 // pred_region
        %s554 = ssub.s32 %s33, 1
        %s555 = sand.u32 %s46, 1
        %s556 = scalar_lea.sflag [#allocation3], %s555
        %s557 = sand.u32 %s46, 1
        %s558 = smul.addr %s557, 8
        %s559 = scalar_lea.vmem [#allocation2], %s558
        // Predicated region
        $region77: #{tpu_custom_call.1} parent=75 // pred_check
          %p560 = pneg %p59
        $region78: #{tpu_custom_call.1} parent=75 // pred_check_branch
          %562 = sbr.rel (%p560) target = $region80
        $region79: #{tpu_custom_call.1} parent=75 // pred_region
          %563 = dma.done %s556, 128
        $region80: #{tpu_custom_call.1} parent=75 // pred_fallthru
          _
        // Predicated region
        $region81: #{tpu_custom_call.1} parent=75 // pred_check
          %p564 = pneg %p80
        $region82: #{tpu_custom_call.1} parent=75 // pred_check_branch
          %566 = sbr.rel (%p564) target = $region84
        $region83: #{tpu_custom_call.1} parent=75 // pred_region
          %567 = dma.done [#allocation6], 16
        $region84: #{tpu_custom_call.1} parent=75 // pred_fallthru
          _
        // Predicated region
        $region85: #{tpu_custom_call.1} parent=75 // pred_check
          %p568 = pneg %p101
        $region86: #{tpu_custom_call.1} parent=75 // pred_check_branch
          %570 = sbr.rel (%p568) target = $region88
        $region87: #{tpu_custom_call.1} parent=75 // pred_region
          %571 = dma.done [#allocation6], 16
        $region88: #{tpu_custom_call.1} parent=75 // pred_fallthru
          _
        // Predicated region
        $region89: #{tpu_custom_call.1} parent=75 // pred_check
          %p572 = pneg %p122
        $region90: #{tpu_custom_call.1} parent=75 // pred_check_branch
          %574 = sbr.rel (%p572) target = $region92
        $region91: #{tpu_custom_call.1} parent=75 // pred_region
          %575 = dma.done [#allocation9], 768
        $region92: #{tpu_custom_call.1} parent=75 // pred_fallthru
          _
        // Predicated region
        $region93: #{tpu_custom_call.1} parent=75 // pred_check
          %p576 = pneg %p143
        $region94: #{tpu_custom_call.1} parent=75 // pred_check_branch
          %578 = sbr.rel (%p576) target = $region96
        $region95: #{tpu_custom_call.1} parent=75 // pred_region
          %579 = dma.done [#allocation9], 48
        $region96: #{tpu_custom_call.1} parent=75 // pred_fallthru
          _
        // Predicated region
        $region97: #{tpu_custom_call.1} parent=75 // pred_check
          %p580 = pneg %p164
        $region98: #{tpu_custom_call.1} parent=75 // pred_check_branch
          %582 = sbr.rel (%p580) target = $region100
        $region99: #{tpu_custom_call.1} parent=75 // pred_region
          %583 = dma.done [#allocation12], 1024
        $region100: #{tpu_custom_call.1} parent=75 // pred_fallthru
          _
        // Predicated region
        $region101: #{tpu_custom_call.1} parent=75 // pred_check
          %p584 = pneg %p185
        $region102: #{tpu_custom_call.1} parent=75 // pred_check_branch
          %586 = sbr.rel (%p584) target = $region104
        $region103: #{tpu_custom_call.1} parent=75 // pred_region
          %587 = dma.done [#allocation12], 1024
        $region104: #{tpu_custom_call.1} parent=75 // pred_fallthru
          _
        // Predicated region
        $region105: #{tpu_custom_call.1} parent=75 // pred_check
          %p588 = pneg %p206
        $region106: #{tpu_custom_call.1} parent=75 // pred_check_branch
          %590 = sbr.rel (%p588) target = $region108
        $region107: #{tpu_custom_call.1} parent=75 // pred_region
          %591 = dma.done [#allocation15], 16
        $region108: #{tpu_custom_call.1} parent=75 // pred_fallthru
          _
        // Predicated region
        $region109: #{tpu_custom_call.1} parent=75 // pred_check
          %p592 = pneg %p227
        $region110: #{tpu_custom_call.1} parent=75 // pred_check_branch
          %594 = sbr.rel (%p592) target = $region112
        $region111: #{tpu_custom_call.1} parent=75 // pred_region
          %595 = dma.done [#allocation15], 16
        $region112: #{tpu_custom_call.1} parent=75 // pred_fallthru
          _
        // Predicated region
        $region113: #{tpu_custom_call.1} parent=75 // pred_check
          %p596 = pneg %p248
        $region114: #{tpu_custom_call.1} parent=75 // pred_check_branch
          %598 = sbr.rel (%p596) target = $region116
        $region115: #{tpu_custom_call.1} parent=75 // pred_region
          %599 = dma.done [#allocation18], 16
        $region116: #{tpu_custom_call.1} parent=75 // pred_fallthru
          _
        // Predicated region
        $region117: #{tpu_custom_call.1} parent=75 // pred_check
          %p600 = pneg %p269
        $region118: #{tpu_custom_call.1} parent=75 // pred_check_branch
          %602 = sbr.rel (%p600) target = $region120
        $region119: #{tpu_custom_call.1} parent=75 // pred_region
          %603 = dma.done [#allocation18], 256
        $region120: #{tpu_custom_call.1} parent=75 // pred_fallthru
          _
        // Predicated region
        $region121: #{tpu_custom_call.1} parent=75 // pred_check
          %p604 = pneg %p290
        $region122: #{tpu_custom_call.1} parent=75 // pred_check_branch
          %606 = sbr.rel (%p604) target = $region124
        $region123: #{tpu_custom_call.1} parent=75 // pred_region
          %607 = dma.done [#allocation21], 16
        $region124: #{tpu_custom_call.1} parent=75 // pred_fallthru
          _
        // Predicated region
        $region125: #{tpu_custom_call.1} parent=75 // pred_check
          %p608 = pneg %p311
        $region126: #{tpu_custom_call.1} parent=75 // pred_check_branch
          %610 = sbr.rel (%p608) target = $region128
        $region127: #{tpu_custom_call.1} parent=75 // pred_region
          %611 = dma.done [#allocation21], 256
        $region128: #{tpu_custom_call.1} parent=75 // pred_fallthru
          _
        // Predicated region
        $region129: #{tpu_custom_call.1} parent=75 // pred_check
          %p612 = pneg %p332
        $region130: #{tpu_custom_call.1} parent=75 // pred_check_branch
          %614 = sbr.rel (%p612) target = $region132
        $region131: #{tpu_custom_call.1} parent=75 // pred_region
          %615 = dma.done [#allocation24], 16
        $region132: #{tpu_custom_call.1} parent=75 // pred_fallthru
          _
        %s616 = sand.u32 %s46, 1
        %s617 = scalar_lea.sflag [#allocation3], %s616
        %s618 = sand.u32 %s46, 1
        %s619 = smul.addr %s618, 8
        %s620 = scalar_lea.vmem [#allocation2], %s619
        %p621 = pneg %p59
        %p622 = pneg %p56
        %p623 = pneg %p80
        %p624 = pneg %p77
        %p625 = pneg %p101
        %p626 = pneg %p98
        %p627 = pneg %p122
        %p628 = pneg %p119
        %p629 = pneg %p143
        %p630 = pneg %p140
        %p631 = pneg %p164
        %p632 = pneg %p161
        %p633 = pneg %p185
        %p634 = pneg %p182
        %p635 = pneg %p206
        %p636 = pneg %p203
        %p637 = pneg %p227
        %p638 = pneg %p224
        %p639 = pneg %p248
        %p640 = pneg %p245
        %p641 = pneg %p269
        %p642 = pneg %p266
        %p643 = pneg %p290
        %p644 = pneg %p287
        %p645 = pneg %p311
        %p646 = pneg %p308
        %p647 = pneg %p332
        %p648 = pneg %p329
        %p649 = pneg %p358
        %p650 = pneg %p355
        %s651 = sand.u32 %s345, 1
        %s652 = scalar_lea.sflag [#allocation4], %s651
        %s653 = sand.u32 %s345, 1
        %s654 = smul.addr %s653, 8
        %s655 = scalar_lea.vmem [#allocation25], %s654
        %v657 = vld [vmem:[%s559] sm:$0xff]
        %v658 = vld [vmem:[#allocation5] sm:$0x1]
        %v659 = vld [vmem:[#allocation7] sm:$0x1]
        %vm660 = vcmask 261120
        %v661 = vsel %vm660, %v657, 0.0
        %662 = vadd.xlane.f32.xlu0 %v661
        %v663 = vpop.xlane.xlu0 %662
        %v664 = vrcp.pop 32.0
        %v665 = vmul.f32 %v663, %v664
        %v666 = vsub.f32 %v657, %v665
        %v667 = vmul.f32 %v666, %v666
        %v668 = vsel %vm660, %v667, 0.0
        %669 = vadd.xlane.f32.xlu0 %v668
        %v670 = vpop.xlane.xlu0 %669
        %v671 = vmul.f32 %v670, %v664
        %v672 = vadd.f32 %v671, 1e-05
        %v673 = vrsqrt.pop %v672
        %v674 = vmul.f32 %v666, %v673
        %v676 = vlaneseq
        %v677 = vshrl.u32 %v676, 7
        %v678 = vsub.s32 0, %v677
        %v679 = vrot.slane %v658, %v678
        %v681 = vmul.f32 %v674, %v679
        %v683 = vlaneseq
        %v684 = vshrl.u32 %v683, 7
        %v685 = vsub.s32 0, %v684
        %v686 = vrot.slane %v659, %v685
        %v688 = vadd.f32 %v681, %v686
        %v689 = vpack.c.bf16 %v688, %v688
        %v690 = vld [vmem:[#allocation8] sm:$0xff]
        %v691 = vld [vmem:[#allocation8 + $0x8] sm:$0xf]
        %v692 = vld [vmem:[#allocation8 + $0xc] sm:$0xff]
        %v693 = vld [vmem:[#allocation8 + $0x14] sm:$0xf]
        %v694 = vld [vmem:[#allocation8 + $0x18] sm:$0xff]
        %v695 = vld [vmem:[#allocation8 + $0x20] sm:$0xf]
        %v696 = vld [vmem:[#allocation8 + $0x24] sm:$0xff]
        %v697 = vld [vmem:[#allocation8 + $0x2c] sm:$0xf]
        %v698 = vld [vmem:[#allocation10] sm:$0x7]
        %v700 = vlaneseq
        %v701 = vshrl.u32 %v700, 7
        %v702 = vsub.s32 0, %v701
        %v703 = vrot.slane %v698, %v702
        %v704 = vlaneseq
        %v705 = vshrl.u32 %v704, 7
        %v706 = vsub.s32 1, %v705
        %v707 = vrot.slane %v698, %v706
        %v708 = vlaneseq
        %v709 = vshrl.u32 %v708, 7
        %v710 = vsub.s32 2, %v709
        %v711 = vrot.slane %v698, %v710
        %v723 = vunpack.c.l.b16 %v690
        %v724 = vunpack.c.h.b16 %v690
        %v725 = vunpack.c.l.b16 %v691
        %v726 = vunpack.c.l.b16 %v692
        %v727 = vunpack.c.h.b16 %v692
        %v728 = vunpack.c.l.b16 %v693
        %v729 = vunpack.c.l.b16 %v694
        %v730 = vunpack.c.h.b16 %v694
        %v731 = vunpack.c.l.b16 %v695
        %v732 = vunpack.c.l.b16 %v696
        %v733 = vunpack.c.h.b16 %v696
        %v734 = vunpack.c.l.b16 %v697
        %v735 = vpack.c.b16 %v726, %v723
        %v736 = vpack.c.b16 %v727, %v724
        %v737 = vpack.c.b16 %v728, %v725
        %v738 = vpack.c.b16 %v732, %v729
        %v739 = vpack.c.b16 %v733, %v730
        %v740 = vpack.c.b16 %v734, %v731
        %v748 = vsel %vm660, %v689, 0
        %750 = vmatprep.subr.bf16.mxu0 %v736
        %751 = vmatpush1.bf16.msra.mxu0 %v735
        %752 = vmatprep.subr.bf16.mxu0 %v739
        %753 = vmatpush1.bf16.msra.mxu0 %v738
        %754 = vmatprep.subr.bf16.mxu0 0
        %755 = vmatpush1.bf16.msra.mxu0 0
        %756 = vmatprep.subr.bf16.mxu0 0
        %757 = vmatpush1.bf16.msra.mxu0 0
        %758 = vmatprep.subr.bf16.mxu0 0
        %759 = vmatpush1.bf16.msra.mxu0 0
        %760 = vmatprep.subr.bf16.mxu0 0
        %761 = vmatpush1.bf16.msra.mxu0 0
        %762 = vmatprep.subr.bf16.mxu0 0
        %763 = vmatpush1.bf16.msra.mxu0 0
        %764 = vmatprep.subr.bf16.mxu0 0
        %765 = vmatpush1.bf16.msra.mxu0 0
        %766 = vmatprep.subr.bf16.mxu0 0
        %767 = vmatpush1.bf16.msra.mxu0 0
        %768 = vmatprep.subr.bf16.mxu0 0
        %769 = vmatpush1.bf16.msra.mxu0 0
        %770 = vmatprep.subr.bf16.mxu0 0
        %771 = vmatpush1.bf16.msra.mxu0 0
        %772 = vmatprep.subr.bf16.mxu0 0
        %773 = vmatpush1.bf16.msra.mxu0 0
        %774 = vmatprep.subr.bf16.mxu0 0
        %775 = vmatpush1.bf16.msra.mxu0 0
        %776 = vmatprep.subr.bf16.mxu0 0
        %777 = vmatpush1.bf16.msra.mxu0 0
        %778 = vmatprep.subr.bf16.mxu0 0
        %779 = vmatpush1.bf16.msra.mxu0 0
        %780 = vmatprep.subr.bf16.mxu0 0
        %781 = vmatpush1.bf16.msra.mxu0 0
        %782 = vmatprep.mubr.bf16.mxu0 0
        %783 = vmatmul.mubr.bf16.gmra.mrb[0].mxu0 %v748
        %v784 = vpop.f32.mrb[0].mxu0
        %v785 = vadd.f32 %v703, %v784
        %v786 = vpop.f32.mrb[0].mxu0
        %v787 = vadd.f32 %v707, %v786
        %v788 = vpop.f32.mrb[0].mxu0
        %v789 = vpop.f32.mrb[0].mxu0
        %790 = vdwg.mxu0
        %791 = vmatprep.subr.bf16.mxu0 0
        %792 = vmatpush1.bf16.msra.mxu0 %v737
        %793 = vmatprep.subr.bf16.mxu0 0
        %794 = vmatpush1.bf16.msra.mxu0 %v740
        %795 = vmatprep.subr.bf16.mxu0 0
        %796 = vmatpush1.bf16.msra.mxu0 0
        %797 = vmatprep.subr.bf16.mxu0 0
        %798 = vmatpush1.bf16.msra.mxu0 0
        %799 = vmatprep.subr.bf16.mxu0 0
        %800 = vmatpush1.bf16.msra.mxu0 0
        %801 = vmatprep.subr.bf16.mxu0 0
        %802 = vmatpush1.bf16.msra.mxu0 0
        %803 = vmatprep.subr.bf16.mxu0 0
        %804 = vmatpush1.bf16.msra.mxu0 0
        %805 = vmatprep.subr.bf16.mxu0 0
        %806 = vmatpush1.bf16.msra.mxu0 0
        %807 = vmatprep.subr.bf16.mxu0 0
        %808 = vmatpush1.bf16.msra.mxu0 0
        %809 = vmatprep.subr.bf16.mxu0 0
        %810 = vmatpush1.bf16.msra.mxu0 0
        %811 = vmatprep.subr.bf16.mxu0 0
        %812 = vmatpush1.bf16.msra.mxu0 0
        %813 = vmatprep.subr.bf16.mxu0 0
        %814 = vmatpush1.bf16.msra.mxu0 0
        %815 = vmatprep.subr.bf16.mxu0 0
        %816 = vmatpush1.bf16.msra.mxu0 0
        %817 = vmatprep.subr.bf16.mxu0 0
        %818 = vmatpush1.bf16.msra.mxu0 0
        %819 = vmatprep.subr.bf16.mxu0 0
        %820 = vmatpush1.bf16.msra.mxu0 0
        %821 = vmatprep.subr.bf16.mxu0 0
        %822 = vmatpush1.bf16.msra.mxu0 0
        %823 = vmatprep.mubr.bf16.mxu0 0
        %824 = vmatmul.mubr.bf16.gmra.mrb[0].mxu0 %v748
        %v825 = vpop.f32.mrb[0].mxu0
        %v826 = vadd.f32 %v711, %v825
        %v827 = vpop.f32.mrb[0].mxu0
        %v828 = vpop.f32.mrb[0].mxu0
        %v829 = vpop.f32.mrb[0].mxu0
        %830 = vdwg.mxu0
        %v831 = vld [vmem:[#allocation11] sm:$0xf]
        %v832 = vld [vmem:[#allocation11 + $0x4] sm:$0xf]
        %v833 = vld [vmem:[#allocation11 + $0x8] sm:$0xf]
        %v834 = vld [vmem:[#allocation11 + $0xc] sm:$0xf]
        %v835 = vld [vmem:[#allocation11 + $0x10] sm:$0xf]
        %v836 = vld [vmem:[#allocation11 + $0x14] sm:$0xf]
        %v837 = vld [vmem:[#allocation11 + $0x18] sm:$0xf]
        %v838 = vld [vmem:[#allocation11 + $0x1c] sm:$0xf]
        %v839 = vld [vmem:[#allocation11 + $0x20] sm:$0xf]
        %v840 = vld [vmem:[#allocation11 + $0x24] sm:$0xf]
        %v841 = vld [vmem:[#allocation11 + $0x28] sm:$0xf]
        %v842 = vld [vmem:[#allocation11 + $0x2c] sm:$0xf]
        %v843 = vld [vmem:[#allocation11 + $0x30] sm:$0xf]
        %v844 = vld [vmem:[#allocation11 + $0x34] sm:$0xf]
        %v845 = vld [vmem:[#allocation11 + $0x38] sm:$0xf]
        %v846 = vld [vmem:[#allocation11 + $0x3c] sm:$0xf]
        %v847 = vmul.f32 %v785, %v785
        %848 = vadd.xlane.f32.xlu0 %v847
        %v849 = vpop.xlane.xlu0 %848
        %v850 = vmul.f32 %v849, 0.5
        %v851 = vpack.c.bf16 %v785, %v785
        %v868 = vunpack.c.l.b16 %v831
        %v869 = vunpack.c.l.b16 %v832
        %v870 = vunpack.c.l.b16 %v833
        %v871 = vunpack.c.l.b16 %v834
        %v872 = vunpack.c.l.b16 %v835
        %v873 = vunpack.c.l.b16 %v836
        %v874 = vunpack.c.l.b16 %v837
        %v875 = vunpack.c.l.b16 %v838
        %v876 = vunpack.c.l.b16 %v839
        %v877 = vunpack.c.l.b16 %v840
        %v878 = vunpack.c.l.b16 %v841
        %v879 = vunpack.c.l.b16 %v842
        %v880 = vunpack.c.l.b16 %v843
        %v881 = vunpack.c.l.b16 %v844
        %v882 = vunpack.c.l.b16 %v845
        %v883 = vunpack.c.l.b16 %v846
        %v884 = vpack.c.b16 %v869, %v868
        %v885 = vpack.c.b16 %v871, %v870
        %v886 = vpack.c.b16 %v873, %v872
        %v887 = vpack.c.b16 %v875, %v874
        %v888 = vpack.c.b16 %v877, %v876
        %v889 = vpack.c.b16 %v879, %v878
        %v890 = vpack.c.b16 %v881, %v880
        %v891 = vpack.c.b16 %v883, %v882
        %900 = vmatprep.subr.bf16.mxu0 0
        %901 = vmatpush1.bf16.msra.mxu0 %v884
        %902 = vmatprep.subr.bf16.mxu0 0
        %903 = vmatpush1.bf16.msra.mxu0 %v885
        %904 = vmatprep.subr.bf16.mxu0 0
        %905 = vmatpush1.bf16.msra.mxu0 %v886
        %906 = vmatprep.subr.bf16.mxu0 0
        %907 = vmatpush1.bf16.msra.mxu0 %v887
        %908 = vmatprep.subr.bf16.mxu0 0
        %909 = vmatpush1.bf16.msra.mxu0 %v888
        %910 = vmatprep.subr.bf16.mxu0 0
        %911 = vmatpush1.bf16.msra.mxu0 %v889
        %912 = vmatprep.subr.bf16.mxu0 0
        %913 = vmatpush1.bf16.msra.mxu0 %v890
        %914 = vmatprep.subr.bf16.mxu0 0
        %915 = vmatpush1.bf16.msra.mxu0 %v891
        %916 = vmatprep.subr.bf16.mxu0 0
        %917 = vmatpush1.bf16.msra.mxu0 0
        %918 = vmatprep.subr.bf16.mxu0 0
        %919 = vmatpush1.bf16.msra.mxu0 0
        %920 = vmatprep.subr.bf16.mxu0 0
        %921 = vmatpush1.bf16.msra.mxu0 0
        %922 = vmatprep.subr.bf16.mxu0 0
        %923 = vmatpush1.bf16.msra.mxu0 0
        %924 = vmatprep.subr.bf16.mxu0 0
        %925 = vmatpush1.bf16.msra.mxu0 0
        %926 = vmatprep.subr.bf16.mxu0 0
        %927 = vmatpush1.bf16.msra.mxu0 0
        %928 = vmatprep.subr.bf16.mxu0 0
        %929 = vmatpush1.bf16.msra.mxu0 0
        %930 = vmatprep.subr.bf16.mxu0 0
        %931 = vmatpush1.bf16.msra.mxu0 0
        %932 = vmatprep.mubr.bf16.mxu0 0
        %933 = vmatmul.mubr.bf16.gmra.mrb[0].mxu0 %v851
        %v934 = vpop.f32.mrb[0].mxu0
        %v935 = vadd.f32 0.0, %v934
        %v936 = vpop.f32.mrb[0].mxu0
        %v937 = vpop.f32.mrb[0].mxu0
        %v938 = vpop.f32.mrb[0].mxu0
        %939 = vdwg.mxu0
        %v940 = vsub.f32 %v935, %v850
        %v941 = vmul.f32 %v940, 1.442695
        %v942 = vpow.pop %v941
        %v943 = vmul.f32 %v942, 0.25
        %v944 = vmul.f32 %v787, %v787
        %945 = vadd.xlane.f32.xlu0 %v944
        %v946 = vpop.xlane.xlu0 %945
        %v947 = vmul.f32 %v946, 0.5
        %v948 = vpack.c.bf16 %v787, %v787
        %949 = vmatprep.subr.bf16.mxu0 0
        %950 = vmatpush1.bf16.msra.mxu0 %v884
        %951 = vmatprep.subr.bf16.mxu0 0
        %952 = vmatpush1.bf16.msra.mxu0 %v885
        %953 = vmatprep.subr.bf16.mxu0 0
        %954 = vmatpush1.bf16.msra.mxu0 %v886
        %955 = vmatprep.subr.bf16.mxu0 0
        %956 = vmatpush1.bf16.msra.mxu0 %v887
        %957 = vmatprep.subr.bf16.mxu0 0
        %958 = vmatpush1.bf16.msra.mxu0 %v888
        %959 = vmatprep.subr.bf16.mxu0 0
        %960 = vmatpush1.bf16.msra.mxu0 %v889
        %961 = vmatprep.subr.bf16.mxu0 0
        %962 = vmatpush1.bf16.msra.mxu0 %v890
        %963 = vmatprep.subr.bf16.mxu0 0
        %964 = vmatpush1.bf16.msra.mxu0 %v891
        %965 = vmatprep.subr.bf16.mxu0 0
        %966 = vmatpush1.bf16.msra.mxu0 0
        %967 = vmatprep.subr.bf16.mxu0 0
        %968 = vmatpush1.bf16.msra.mxu0 0
        %969 = vmatprep.subr.bf16.mxu0 0
        %970 = vmatpush1.bf16.msra.mxu0 0
        %971 = vmatprep.subr.bf16.mxu0 0
        %972 = vmatpush1.bf16.msra.mxu0 0
        %973 = vmatprep.subr.bf16.mxu0 0
        %974 = vmatpush1.bf16.msra.mxu0 0
        %975 = vmatprep.subr.bf16.mxu0 0
        %976 = vmatpush1.bf16.msra.mxu0 0
        %977 = vmatprep.subr.bf16.mxu0 0
        %978 = vmatpush1.bf16.msra.mxu0 0
        %979 = vmatprep.subr.bf16.mxu0 0
        %980 = vmatpush1.bf16.msra.mxu0 0
        %981 = vmatprep.mubr.bf16.mxu0 0
        %982 = vmatmul.mubr.bf16.gmra.mrb[0].mxu0 %v948
        %v983 = vpop.f32.mrb[0].mxu0
        %v984 = vadd.f32 0.0, %v983
        %v985 = vpop.f32.mrb[0].mxu0
        %v986 = vpop.f32.mrb[0].mxu0
        %v987 = vpop.f32.mrb[0].mxu0
        %988 = vdwg.mxu0
        %v989 = vsub.f32 %v984, %v947
        %v990 = vmul.f32 %v989, 1.442695
        %v991 = vpow.pop %v990
        %v992 = vmul.f32 %v991, 0.25
        %vm993 = vcmask 130048
        %v994 = vsel %vm993, %v943, 0.0
        %v995 = vrot.slane %v994, 4
        %v996 = vadd.f32 %v994, %v995
        %v997 = vrot.slane %v996, 2
        %v998 = vadd.f32 %v996, %v997
        %v999 = vrot.slane %v998, 1
        %v1000 = vadd.f32 %v998, %v999
        %v1001 = vmul.f32 %v992, %v1000
        %v1002 = vsel %vm993, %v1001, 0.0
        %1003 = vadd.xlane.f32.xlu0 %v1002
        %v1004 = vpop.xlane.xlu0 %1003
        %v1005 = vpack.c.bf16 %v943, %v943
        %v1006 = vpack.c.bf16 %v826, %v826
        %1007 = vxpose.xlu0.c.b16.start [1/8] %v1005, 128
        %1008 = vxpose.xlu0.c.b16.cont [2/8] 0, 128
        %1009 = vxpose.xlu0.c.b16.cont [3/8] 0, 128
        %1010 = vxpose.xlu0.c.b16.cont [4/8] 0, 128
        %1011 = vxpose.xlu0.c.b16.cont [5/8] 0, 128
        %1012 = vxpose.xlu0.c.b16.cont [6/8] 0, 128
        %1013 = vxpose.xlu0.c.b16.cont [7/8] 0, 128
        %1014 = vxpose.xlu0.c.b16.end [8/8] 0, 128
        %v1015 = vpop.trf.xlu0
        %v1016 = vpop.trf.xlu0
        %v1017 = vpop.trf.xlu0
        %v1018 = vpop.trf.xlu0
        %v1019 = vpop.trf.xlu0
        %v1020 = vpop.trf.xlu0
        %v1021 = vpop.trf.xlu0
        %v1022 = vpop.trf.xlu0
        %vm1023 = vcmask 64512
        %v1025 = vsel %vm1023, %v1015, 0
        %vm1027 = vcmask 1043456
        %v1029 = vsel %vm1027, %v1006, 0
        %1031 = vmatprep.subr.bf16.mxu0 0
        %1032 = vmatpush1.bf16.msra.mxu0 %v1029
        %1033 = vmatprep.subr.bf16.mxu0 0
        %1034 = vmatpush1.bf16.msra.mxu0 0
        %1035 = vmatprep.subr.bf16.mxu0 0
        %1036 = vmatpush1.bf16.msra.mxu0 0
        %1037 = vmatprep.subr.bf16.mxu0 0
        %1038 = vmatpush1.bf16.msra.mxu0 0
        %1039 = vmatprep.subr.bf16.mxu0 0
        %1040 = vmatpush1.bf16.msra.mxu0 0
        %1041 = vmatprep.subr.bf16.mxu0 0
        %1042 = vmatpush1.bf16.msra.mxu0 0
        %1043 = vmatprep.subr.bf16.mxu0 0
        %1044 = vmatpush1.bf16.msra.mxu0 0
        %1045 = vmatprep.subr.bf16.mxu0 0
        %1046 = vmatpush1.bf16.msra.mxu0 0
        %1047 = vmatprep.subr.bf16.mxu0 0
        %1048 = vmatpush1.bf16.msra.mxu0 0
        %1049 = vmatprep.subr.bf16.mxu0 0
        %1050 = vmatpush1.bf16.msra.mxu0 0
        %1051 = vmatprep.subr.bf16.mxu0 0
        %1052 = vmatpush1.bf16.msra.mxu0 0
        %1053 = vmatprep.subr.bf16.mxu0 0
        %1054 = vmatpush1.bf16.msra.mxu0 0
        %1055 = vmatprep.subr.bf16.mxu0 0
        %1056 = vmatpush1.bf16.msra.mxu0 0
        %1057 = vmatprep.subr.bf16.mxu0 0
        %1058 = vmatpush1.bf16.msra.mxu0 0
        %1059 = vmatprep.subr.bf16.mxu0 0
        %1060 = vmatpush1.bf16.msra.mxu0 0
        %1061 = vmatprep.subr.bf16.mxu0 0
        %1062 = vmatpush1.bf16.msra.mxu0 0
        %1063 = vmatprep.mubr.bf16.mxu0 0
        %1064 = vmatmul.mubr.bf16.gmra.mrb[0].mxu0 %v1025
        %v1065 = vpop.f32.mrb[0].mxu0
        %v1066 = vadd.f32 0.0, %v1065
        %v1067 = vpop.f32.mrb[0].mxu0
        %v1068 = vpop.f32.mrb[0].mxu0
        %v1069 = vadd.f32 0.0, %v1068
        %v1070 = vpop.f32.mrb[0].mxu0
        %1071 = vdwg.mxu0
        %v1072 = vpack.c.bf16 %v992, %v992
        %v1073 = vpack.c.bf16 %v1069, %v1066
        %v1075 = vsel %vm993, %v1072, 0
        %1077 = vmatprep.subr.bf16.mxu0 0
        %1078 = vmatpush1.bf16.msra.mxu0 %v1073
        %1079 = vmatprep.subr.bf16.mxu0 0
        %1080 = vmatpush1.bf16.msra.mxu0 0
        %1081 = vmatprep.subr.bf16.mxu0 0
        %1082 = vmatpush1.bf16.msra.mxu0 0
        %1083 = vmatprep.subr.bf16.mxu0 0
        %1084 = vmatpush1.bf16.msra.mxu0 0
        %1085 = vmatprep.subr.bf16.mxu0 0
        %1086 = vmatpush1.bf16.msra.mxu0 0
        %1087 = vmatprep.subr.bf16.mxu0 0
        %1088 = vmatpush1.bf16.msra.mxu0 0
        %1089 = vmatprep.subr.bf16.mxu0 0
        %1090 = vmatpush1.bf16.msra.mxu0 0
        %1091 = vmatprep.subr.bf16.mxu0 0
        %1092 = vmatpush1.bf16.msra.mxu0 0
        %1093 = vmatprep.subr.bf16.mxu0 0
        %1094 = vmatpush1.bf16.msra.mxu0 0
        %1095 = vmatprep.subr.bf16.mxu0 0
        %1096 = vmatpush1.bf16.msra.mxu0 0
        %1097 = vmatprep.subr.bf16.mxu0 0
        %1098 = vmatpush1.bf16.msra.mxu0 0
        %1099 = vmatprep.subr.bf16.mxu0 0
        %1100 = vmatpush1.bf16.msra.mxu0 0
        %1101 = vmatprep.subr.bf16.mxu0 0
        %1102 = vmatpush1.bf16.msra.mxu0 0
        %1103 = vmatprep.subr.bf16.mxu0 0
        %1104 = vmatpush1.bf16.msra.mxu0 0
        %1105 = vmatprep.subr.bf16.mxu0 0
        %1106 = vmatpush1.bf16.msra.mxu0 0
        %1107 = vmatprep.subr.bf16.mxu0 0
        %1108 = vmatpush1.bf16.msra.mxu0 0
        %1109 = vmatprep.mubr.bf16.mxu0 0
        %1110 = vmatmul.mubr.bf16.gmra.mrb[0].mxu0 %v1075
        %v1111 = vpop.f32.mrb[0].mxu0
        %v1112 = vadd.f32 0.0, %v1111
        %v1113 = vpop.f32.mrb[0].mxu0
        %v1114 = vpop.f32.mrb[0].mxu0
        %v1115 = vpop.f32.mrb[0].mxu0
        %1116 = vdwg.mxu0
        %v1117 = vadd.f32 %v1004, 1e-08
        %v1118 = vrcp.pop %v1117
        %v1119 = vmul.f32 %v1112, %v1118
        %v1120 = vpack.c.bf16 %v1119, %v1119
        %v1121 = vld [vmem:[#allocation13] sm:$0xf]
        %v1122 = vld [vmem:[#allocation13 + $0x4] sm:$0xf]
        %v1123 = vld [vmem:[#allocation13 + $0x8] sm:$0xf]
        %v1124 = vld [vmem:[#allocation13 + $0xc] sm:$0xf]
        %v1125 = vld [vmem:[#allocation13 + $0x10] sm:$0xf]
        %v1126 = vld [vmem:[#allocation13 + $0x14] sm:$0xf]
        %v1127 = vld [vmem:[#allocation13 + $0x18] sm:$0xf]
        %v1128 = vld [vmem:[#allocation13 + $0x1c] sm:$0xf]
        %v1129 = vld [vmem:[#allocation13 + $0x20] sm:$0xf]
        %v1130 = vld [vmem:[#allocation13 + $0x24] sm:$0xf]
        %v1131 = vld [vmem:[#allocation13 + $0x28] sm:$0xf]
        %v1132 = vld [vmem:[#allocation13 + $0x2c] sm:$0xf]
        %v1133 = vld [vmem:[#allocation13 + $0x30] sm:$0xf]
        %v1134 = vld [vmem:[#allocation13 + $0x34] sm:$0xf]
        %v1135 = vld [vmem:[#allocation13 + $0x38] sm:$0xf]
        %v1136 = vld [vmem:[#allocation13 + $0x3c] sm:$0xf]
        %v1137 = vld [vmem:[#allocation14] sm:$0x1]
        %v1139 = vlaneseq
        %v1140 = vshrl.u32 %v1139, 7
        %v1141 = vsub.s32 0, %v1140
        %v1142 = vrot.slane %v1137, %v1141
        %v1160 = vunpack.c.l.b16 %v1121
        %v1161 = vunpack.c.l.b16 %v1122
        %v1162 = vunpack.c.l.b16 %v1123
        %v1163 = vunpack.c.l.b16 %v1124
        %v1164 = vunpack.c.l.b16 %v1125
        %v1165 = vunpack.c.l.b16 %v1126
        %v1166 = vunpack.c.l.b16 %v1127
        %v1167 = vunpack.c.l.b16 %v1128
        %v1168 = vunpack.c.l.b16 %v1129
        %v1169 = vunpack.c.l.b16 %v1130
        %v1170 = vunpack.c.l.b16 %v1131
        %v1171 = vunpack.c.l.b16 %v1132
        %v1172 = vunpack.c.l.b16 %v1133
        %v1173 = vunpack.c.l.b16 %v1134
        %v1174 = vunpack.c.l.b16 %v1135
        %v1175 = vunpack.c.l.b16 %v1136
        %v1176 = vpack.c.b16 %v1161, %v1160
        %v1177 = vpack.c.b16 %v1163, %v1162
        %v1178 = vpack.c.b16 %v1165, %v1164
        %v1179 = vpack.c.b16 %v1167, %v1166
        %v1180 = vpack.c.b16 %v1169, %v1168
        %v1181 = vpack.c.b16 %v1171, %v1170
        %v1182 = vpack.c.b16 %v1173, %v1172
        %v1183 = vpack.c.b16 %v1175, %v1174
        %1192 = vmatprep.subr.bf16.mxu0 0
        %1193 = vmatpush1.bf16.msra.mxu0 %v1176
        %1194 = vmatprep.subr.bf16.mxu0 0
        %1195 = vmatpush1.bf16.msra.mxu0 %v1177
        %1196 = vmatprep.subr.bf16.mxu0 0
        %1197 = vmatpush1.bf16.msra.mxu0 %v1178
        %1198 = vmatprep.subr.bf16.mxu0 0
        %1199 = vmatpush1.bf16.msra.mxu0 %v1179
        %1200 = vmatprep.subr.bf16.mxu0 0
        %1201 = vmatpush1.bf16.msra.mxu0 %v1180
        %1202 = vmatprep.subr.bf16.mxu0 0
        %1203 = vmatpush1.bf16.msra.mxu0 %v1181
        %1204 = vmatprep.subr.bf16.mxu0 0
        %1205 = vmatpush1.bf16.msra.mxu0 %v1182
        %1206 = vmatprep.subr.bf16.mxu0 0
        %1207 = vmatpush1.bf16.msra.mxu0 %v1183
        %1208 = vmatprep.subr.bf16.mxu0 0
        %1209 = vmatpush1.bf16.msra.mxu0 0
        %1210 = vmatprep.subr.bf16.mxu0 0
        %1211 = vmatpush1.bf16.msra.mxu0 0
        %1212 = vmatprep.subr.bf16.mxu0 0
        %1213 = vmatpush1.bf16.msra.mxu0 0
        %1214 = vmatprep.subr.bf16.mxu0 0
        %1215 = vmatpush1.bf16.msra.mxu0 0
        %1216 = vmatprep.subr.bf16.mxu0 0
        %1217 = vmatpush1.bf16.msra.mxu0 0
        %1218 = vmatprep.subr.bf16.mxu0 0
        %1219 = vmatpush1.bf16.msra.mxu0 0
        %1220 = vmatprep.subr.bf16.mxu0 0
        %1221 = vmatpush1.bf16.msra.mxu0 0
        %1222 = vmatprep.subr.bf16.mxu0 0
        %1223 = vmatpush1.bf16.msra.mxu0 0
        %1224 = vmatprep.mubr.bf16.mxu0 0
        %1225 = vmatmul.mubr.bf16.gmra.mrb[0].mxu0 %v1120
        %v1226 = vpop.f32.mrb[0].mxu0
        %v1227 = vadd.f32 %v1142, %v1226
        %v1228 = vpop.f32.mrb[0].mxu0
        %v1229 = vpop.f32.mrb[0].mxu0
        %v1230 = vpop.f32.mrb[0].mxu0
        %1231 = vdwg.mxu0
        %v1232 = vadd.f32 %v657, %v1227
        %v1233 = vld [vmem:[#allocation16] sm:$0x1]
        %v1234 = vld [vmem:[#allocation17] sm:$0x1]
        %v1235 = vsel %vm660, %v1232, 0.0
        %1236 = vadd.xlane.f32.xlu0 %v1235
        %v1237 = vpop.xlane.xlu0 %1236
        %v1238 = vmul.f32 %v1237, %v664
        %v1239 = vsub.f32 %v1232, %v1238
        %v1240 = vmul.f32 %v1239, %v1239
        %v1241 = vsel %vm660, %v1240, 0.0
        %1242 = vadd.xlane.f32.xlu0 %v1241
        %v1243 = vpop.xlane.xlu0 %1242
        %v1244 = vmul.f32 %v1243, %v664
        %v1245 = vadd.f32 %v1244, 1e-05
        %v1246 = vrsqrt.pop %v1245
        %v1247 = vmul.f32 %v1239, %v1246
        %v1249 = vlaneseq
        %v1250 = vshrl.u32 %v1249, 7
        %v1251 = vsub.s32 0, %v1250
        %v1252 = vrot.slane %v1233, %v1251
        %v1254 = vmul.f32 %v1247, %v1252
        %v1256 = vlaneseq
        %v1257 = vshrl.u32 %v1256, 7
        %v1258 = vsub.s32 0, %v1257
        %v1259 = vrot.slane %v1234, %v1258
        %v1261 = vadd.f32 %v1254, %v1259
        %v1262 = vpack.c.bf16 %v1261, %v1261
        %v1263 = vld [vmem:[#allocation19] sm:$0xf]
        %v1264 = vld [vmem:[#allocation19 + $0x4] sm:$0xf]
        %v1265 = vld [vmem:[#allocation19 + $0x8] sm:$0xf]
        %v1266 = vld [vmem:[#allocation19 + $0xc] sm:$0xf]
        %v1267 = vld [vmem:[#allocation20] sm:$0x1]
        %v1269 = vlaneseq
        %v1270 = vshrl.u32 %v1269, 7
        %v1271 = vsub.s32 0, %v1270
        %v1272 = vrot.slane %v1267, %v1271
        %v1278 = vunpack.c.l.b16 %v1263
        %v1279 = vunpack.c.l.b16 %v1264
        %v1280 = vunpack.c.l.b16 %v1265
        %v1281 = vunpack.c.l.b16 %v1266
        %v1282 = vpack.c.b16 %v1279, %v1278
        %v1283 = vpack.c.b16 %v1281, %v1280
        %v1287 = vsel %vm660, %v1262, 0
        %1289 = vmatprep.subr.bf16.mxu0 0
        %1290 = vmatpush1.bf16.msra.mxu0 %v1282
        %1291 = vmatprep.subr.bf16.mxu0 0
        %1292 = vmatpush1.bf16.msra.mxu0 %v1283
        %1293 = vmatprep.subr.bf16.mxu0 0
        %1294 = vmatpush1.bf16.msra.mxu0 0
        %1295 = vmatprep.subr.bf16.mxu0 0
        %1296 = vmatpush1.bf16.msra.mxu0 0
        %1297 = vmatprep.subr.bf16.mxu0 0
        %1298 = vmatpush1.bf16.msra.mxu0 0
        %1299 = vmatprep.subr.bf16.mxu0 0
        %1300 = vmatpush1.bf16.msra.mxu0 0
        %1301 = vmatprep.subr.bf16.mxu0 0
        %1302 = vmatpush1.bf16.msra.mxu0 0
        %1303 = vmatprep.subr.bf16.mxu0 0
        %1304 = vmatpush1.bf16.msra.mxu0 0
        %1305 = vmatprep.subr.bf16.mxu0 0
        %1306 = vmatpush1.bf16.msra.mxu0 0
        %1307 = vmatprep.subr.bf16.mxu0 0
        %1308 = vmatpush1.bf16.msra.mxu0 0
        %1309 = vmatprep.subr.bf16.mxu0 0
        %1310 = vmatpush1.bf16.msra.mxu0 0
        %1311 = vmatprep.subr.bf16.mxu0 0
        %1312 = vmatpush1.bf16.msra.mxu0 0
        %1313 = vmatprep.subr.bf16.mxu0 0
        %1314 = vmatpush1.bf16.msra.mxu0 0
        %1315 = vmatprep.subr.bf16.mxu0 0
        %1316 = vmatpush1.bf16.msra.mxu0 0
        %1317 = vmatprep.subr.bf16.mxu0 0
        %1318 = vmatpush1.bf16.msra.mxu0 0
        %1319 = vmatprep.subr.bf16.mxu0 0
        %1320 = vmatpush1.bf16.msra.mxu0 0
        %1321 = vmatprep.mubr.bf16.mxu0 0
        %1322 = vmatmul.mubr.bf16.gmra.mrb[0].mxu0 %v1287
        %v1323 = vpop.f32.mrb[0].mxu0
        %v1324 = vadd.f32 %v1272, %v1323
        %v1325 = vpop.f32.mrb[0].mxu0
        %v1326 = vpop.f32.mrb[0].mxu0
        %v1327 = vpop.f32.mrb[0].mxu0
        %1328 = vdwg.mxu0
        %v1329 = vmul.f32 %v1324, 0.5
        %v1330 = vmul.f32 %v1324, 0.70710677
        %v1331 = verf.f32.pop %v1330
        %v1332 = vadd.f32 %v1331, 1.0
        %v1333 = vmul.f32 %v1329, %v1332
        %v1334 = vpack.c.bf16 %v1333, %v1333
        %v1335 = vld [vmem:[#allocation22] sm:$0xf]
        %v1336 = vld [vmem:[#allocation22 + $0x4] sm:$0xf]
        %v1337 = vld [vmem:[#allocation22 + $0x8] sm:$0xf]
        %v1338 = vld [vmem:[#allocation22 + $0xc] sm:$0xf]
        %v1339 = vld [vmem:[#allocation23] sm:$0x1]
        %v1341 = vlaneseq
        %v1342 = vshrl.u32 %v1341, 7
        %v1343 = vsub.s32 0, %v1342
        %v1344 = vrot.slane %v1339, %v1343
        %v1350 = vunpack.c.l.b16 %v1335
        %v1351 = vunpack.c.l.b16 %v1336
        %v1352 = vunpack.c.l.b16 %v1337
        %v1353 = vunpack.c.l.b16 %v1338
        %v1354 = vpack.c.b16 %v1351, %v1350
        %v1355 = vpack.c.b16 %v1353, %v1352
        %v1359 = vsel %vm660, %v1334, 0
        %1361 = vmatprep.subr.bf16.mxu0 0
        %1362 = vmatpush1.bf16.msra.mxu0 %v1354
        %1363 = vmatprep.subr.bf16.mxu0 0
        %1364 = vmatpush1.bf16.msra.mxu0 %v1355
        %1365 = vmatprep.subr.bf16.mxu0 0
        %1366 = vmatpush1.bf16.msra.mxu0 0
        %1367 = vmatprep.subr.bf16.mxu0 0
        %1368 = vmatpush1.bf16.msra.mxu0 0
        %1369 = vmatprep.subr.bf16.mxu0 0
        %1370 = vmatpush1.bf16.msra.mxu0 0
        %1371 = vmatprep.subr.bf16.mxu0 0
        %1372 = vmatpush1.bf16.msra.mxu0 0
        %1373 = vmatprep.subr.bf16.mxu0 0
        %1374 = vmatpush1.bf16.msra.mxu0 0
        %1375 = vmatprep.subr.bf16.mxu0 0
        %1376 = vmatpush1.bf16.msra.mxu0 0
        %1377 = vmatprep.subr.bf16.mxu0 0
        %1378 = vmatpush1.bf16.msra.mxu0 0
        %1379 = vmatprep.subr.bf16.mxu0 0
        %1380 = vmatpush1.bf16.msra.mxu0 0
        %1381 = vmatprep.subr.bf16.mxu0 0
        %1382 = vmatpush1.bf16.msra.mxu0 0
        %1383 = vmatprep.subr.bf16.mxu0 0
        %1384 = vmatpush1.bf16.msra.mxu0 0
        %1385 = vmatprep.subr.bf16.mxu0 0
        %1386 = vmatpush1.bf16.msra.mxu0 0
        %1387 = vmatprep.subr.bf16.mxu0 0
        %1388 = vmatpush1.bf16.msra.mxu0 0
        %1389 = vmatprep.subr.bf16.mxu0 0
        %1390 = vmatpush1.bf16.msra.mxu0 0
        %1391 = vmatprep.subr.bf16.mxu0 0
        %1392 = vmatpush1.bf16.msra.mxu0 0
        %1393 = vmatprep.mubr.bf16.mxu0 0
        %1394 = vmatmul.mubr.bf16.gmra.mrb[0].mxu0 %v1359
        %v1395 = vpop.f32.mrb[0].mxu0
        %v1396 = vadd.f32 %v1344, %v1395
        %v1397 = vpop.f32.mrb[0].mxu0
        %v1398 = vpop.f32.mrb[0].mxu0
        %v1399 = vpop.f32.mrb[0].mxu0
        %1400 = vdwg.mxu0
        %v1401 = vadd.f32 %v1232, %v1396
        %1402 = vst.msk [vmem:[%s655] sm:$0xff] %vm660, %v1401
        %s1403 = sand.u32 %s345, 1
        %s1404 = scalar_lea.sflag [#allocation4], %s1403
        %s1405 = sand.u32 %s345, 1
        %s1406 = smul.addr %s1405, 8
        %s1407 = scalar_lea.vmem [#allocation25], %s1406
        // Predicated region
        $region133: #{tpu_custom_call.1} parent=75 // pred_check
          %p1408 = pneg %p355
        $region134: #{tpu_custom_call.1} parent=75 // pred_check_branch
          %1410 = sbr.rel (%p1408) target = $region136
        $region135: #{tpu_custom_call.1} parent=75 // pred_region
          %s1412 = ssub.s32 128, 128
          %1413 = vsyncadd %s1404, %s1412
          %s1414 = smul.addr %s38, 128
          %s1415 = scalar_lea.hbm %s14, %s1414
          %s1417 = sshll.u32 %s1407, 4
          %s1418 = int_to_ptr.vmem [resolvable:$true] %s1417
          %1420 = dma.vmem_to_hbm [thread:$0]  %s1418, 128, %s1415, %s1404
        $region136: #{tpu_custom_call.1} parent=75 // pred_fallthru
          _
      $region76: #{tpu_custom_call.1} parent=5 // pred_fallthru
        _
      %p1421 = scmp.le.s32.totalorder 2, %s33
      // Predicated region
      $region137: #{tpu_custom_call.1} parent=5 // pred_check
        %p1422 = pneg %p1421
      $region138: #{tpu_custom_call.1} parent=5 // pred_check_branch
        %1424 = sbr.rel (%p1422) target = $region140
      $region139: #{tpu_custom_call.1} parent=5 // pred_region
        %s1425 = ssub.s32 %s33, 2
        // Predicated region
        $region141: #{tpu_custom_call.1} parent=139 // pred_check
          %p1426 = pneg %p361
        $region142: #{tpu_custom_call.1} parent=139 // pred_check_branch
          %1428 = sbr.rel (%p1426) target = $region144
        $region143: #{tpu_custom_call.1} parent=139 // pred_region
          %s1429 = sand.u32 %s346, 1
          %s1430 = scalar_lea.sflag [#allocation4], %s1429
          %s1431 = sand.u32 %s346, 1
          %s1432 = smul.addr %s1431, 8
          %s1433 = scalar_lea.vmem [#allocation25], %s1432
          %1434 = dma.done %s1430, 128
        $region144: #{tpu_custom_call.1} parent=139 // pred_fallthru
          _
      $region140: #{tpu_custom_call.1} parent=5 // pred_fallthru
        _
    $region6: #{tpu_custom_call.1} parent=1 // loop_footer
      %s37 = sadd.s32 1, %s33
    $region7: #{tpu_custom_call.1} parent=1 // loop_footer_branch
      %32 = sbr.rel target = $region3
    $region8: #{tpu_custom_call.1} parent=1 // loop_exit
      _
    %1435 = vsyncpa [#allocation3], 1
    %s1436 = scalar_lea.sflag [#allocation3], 1
    %1437 = vsyncpa %s1436, 1
    %1438 = vsyncpa [#allocation6], 1
    %1439 = vsyncpa [#allocation9], 1
    %1440 = vsyncpa [#allocation12], 1
    %1441 = vsyncpa [#allocation15], 1
    %1442 = vsyncpa [#allocation18], 1
    %1443 = vsyncpa [#allocation21], 1
    %1444 = vsyncpa [#allocation24], 1
    %1445 = vsyncpa [#allocation4], 1
    %s1446 = scalar_lea.sflag [#allocation4], 1
    %1447 = vsyncpa %s1446, 1

// kernel: tpu_custom_call.1
$region0: #{tpu_custom_call.1}
  #allocation0 [shape = 'u32[]', space=smem, size = 0x4, offset = 0x4, fixed_abs, tag = 'smem constant byte address 0x4 - core index']
  #allocation1 [shape = 'u32[144,128]{1,0:T(1,128)}', space=vmem, size = 0x12000, scoped, tag = 'internal scratch']
  %s0 = inlined_call_operand.hbm [shape: f32[16,32], index: 0, kind: input, shape index: {}]
  %s1 = inlined_call_operand.hbm [shape: f32[1,32], index: 1, kind: input, shape index: {}]
  %s2 = inlined_call_operand.hbm [shape: f32[1,32], index: 2, kind: input, shape index: {}]
  %s3 = inlined_call_operand.hbm [shape: bf16[32,384], index: 3, kind: input, shape index: {}]
  %s4 = inlined_call_operand.hbm [shape: f32[1,384], index: 4, kind: input, shape index: {}]
  %s5 = inlined_call_operand.hbm [shape: bf16[128,16], index: 5, kind: input, shape index: {}]
  %s6 = inlined_call_operand.hbm [shape: bf16[128,32], index: 6, kind: input, shape index: {}]
  %s7 = inlined_call_operand.hbm [shape: f32[1,32], index: 7, kind: input, shape index: {}]
  %s8 = inlined_call_operand.hbm [shape: f32[1,32], index: 8, kind: input, shape index: {}]
  %s9 = inlined_call_operand.hbm [shape: f32[1,32], index: 9, kind: input, shape index: {}]
  %s10 = inlined_call_operand.hbm [shape: bf16[32,32], index: 10, kind: input, shape index: {}]
  %s11 = inlined_call_operand.hbm [shape: f32[1,32], index: 11, kind: input, shape index: {}]
  %s12 = inlined_call_operand.hbm [shape: bf16[32,32], index: 12, kind: input, shape index: {}]
  %s13 = inlined_call_operand.hbm [shape: f32[1,32], index: 13, kind: input, shape index: {}]
  %s14 = inlined_call_operand.hbm [shape: f32[16,32], index: 14, kind: output, shape index: {}]
  %s15 = sld [smem:[#allocation0]]
  $region145: #{tpu_custom_call.1} parent=0
    _
  %s17 = ssub.s32 1, %s15
  %s18 = scalar_select 0, %s17, %s15
  $region1: #{tpu_custom_call.1} parent=0
    #allocation2 [shape = 'u8[8192]{0}', space=vmem, size = 0x2000, scoped, tag = 'input window, operand 0']
    #allocation3 [shape = 's32[2]{0}', space=sflag, size = 0x8, scoped, tag = 'scoped memory for tpu_custom_call.1']
    #allocation4 [shape = 's32[2]{0}', space=sflag, size = 0x8, scoped, tag = 'scoped memory for tpu_custom_call.1']
    #allocation5 [shape = 'u8[512]{0}', space=vmem, size = 0x400, scoped, tag = 'input window, operand 1, single buffered']
    #allocation6 [shape = 's32[1]{0}', space=sflag, size = 0x4, scoped, tag = 'scoped memory for tpu_custom_call.1']
    #allocation7 [shape = 'u8[512]{0}', space=vmem, size = 0x400, scoped, tag = 'input window, operand 2, single buffered']
    #allocation8 [shape = 'u8[24576]{0}', space=vmem, size = 0x6000, scoped, tag = 'input window, operand 3, single buffered']
    #allocation9 [shape = 's32[1]{0}', space=sflag, size = 0x4, scoped, tag = 'scoped memory for tpu_custom_call.1']
    #allocation10 [shape = 'u8[1536]{0}', space=vmem, size = 0x800, scoped, tag = 'input window, operand 4, single buffered']
    #allocation11 [shape = 'u8[32768]{0}', space=vmem, size = 0x8000, scoped, tag = 'input window, operand 5, single buffered']
    #allocation12 [shape = 's32[1]{0}', space=sflag, size = 0x4, scoped, tag = 'scoped memory for tpu_custom_call.1']
    #allocation13 [shape = 'u8[32768]{0}', space=vmem, size = 0x8000, scoped, tag = 'input window, operand 6, single buffered']
    #allocation14 [shape = 'u8[512]{0}', space=vmem, size = 0x400, scoped, tag = 'input window, operand 7, single buffered']
    #allocation15 [shape = 's32[1]{0}', space=sflag, size = 0x4, scoped, tag = 'scoped memory for tpu_custom_call.1']
    #allocation16 [shape = 'u8[512]{0}', space=vmem, size = 0x400, scoped, tag = 'input window, operand 8, single buffered']
    #allocation17 [shape = 'u8[512]{0}', space=vmem, size = 0x400, scoped, tag = 'input window, operand 9, single buffered']
    #allocation18 [shape = 's32[1]{0}', space=sflag, size = 0x4, scoped, tag = 'scoped memory for tpu_custom_call.1']
    #allocation19 [shape = 'u8[8192]{0}', space=vmem, size = 0x2000, scoped, tag = 'input window, operand 10, single buffered']
    #allocation20 [shape = 'u8[512]{0}', space=vmem, size = 0x400, scoped, tag = 'input window, operand 11, single buffered']
    #allocation21 [shape = 's32[1]{0}', space=sflag, size = 0x4, scoped, tag = 'scoped memory for tpu_custom_call.1']
    #allocation22 [shape = 'u8[8192]{0}', space=vmem, size = 0x2000, scoped, tag = 'input window, operand 12, single buffered']
    #allocation23 [shape = 'u8[512]{0}', space=vmem, size = 0x400, scoped, tag = 'input window, operand 13, single buffered']
    #allocation24 [shape = 's32[1]{0}', space=sflag, size = 0x4, scoped, tag = 'scoped memory for tpu_custom_call.1']
    #allocation25 [shape = 'u8[8192]{0}', space=vmem, size = 0x2000, scoped, tag = 'output window, operand 0']
    %19 = vsyncpa [#allocation3], 0
    %s20 = scalar_lea.sflag [#allocation3], 1
    %21 = vsyncpa %s20, 0
    %22 = vsyncpa [#allocation6], 0
    %23 = vsyncpa [#allocation9], 0
    %24 = vsyncpa [#allocation12], 0
    %25 = vsyncpa [#allocation15], 0
    %26 = vsyncpa [#allocation18], 0
    %27 = vsyncpa [#allocation21], 0
    %28 = vsyncpa [#allocation24], 0
    %29 = vsyncpa [#allocation4], 0
    %s30 = scalar_lea.sflag [#allocation4], 1
    %31 = vsyncpa %s30, 0
    loop: start=0, step=1, limit=4
    $region2: #{tpu_custom_call.1} parent=1 // loop_pre_header
      _
    $region3: #{tpu_custom_call.1} parent=1 // loop_header
      %s33 = sphi 0, %s37
      %p34 = scmp.ge.s32.totalorder %s33, 4
      %s43 = sphi 0, %s45
      %s46 = sphi 0, %s43
      %s47 = sphi 0, %s46
      %s63 = sphi 0, %s47
      %s67 = sphi 0, %s67
      %s69 = sphi 0, %s67
      %s70 = sphi 0, %s69
      %s84 = sphi 0, %s70
      %s88 = sphi 0, %s88
      %s90 = sphi 0, %s88
      %s91 = sphi 0, %s90
      %s105 = sphi 0, %s91
      %s109 = sphi 0, %s109
      %s111 = sphi 0, %s109
      %s112 = sphi 0, %s111
      %s126 = sphi 0, %s112
      %s130 = sphi 0, %s130
      %s132 = sphi 0, %s130
      %s133 = sphi 0, %s132
      %s147 = sphi 0, %s133
      %s151 = sphi 0, %s151
      %s153 = sphi 0, %s151
      %s154 = sphi 0, %s153
      %s168 = sphi 0, %s154
      %s172 = sphi 0, %s172
      %s174 = sphi 0, %s172
      %s175 = sphi 0, %s174
      %s189 = sphi 0, %s175
      %s193 = sphi 0, %s193
      %s195 = sphi 0, %s193
      %s196 = sphi 0, %s195
      %s210 = sphi 0, %s196
      %s214 = sphi 0, %s214
      %s216 = sphi 0, %s214
      %s217 = sphi 0, %s216
      %s231 = sphi 0, %s217
      %s235 = sphi 0, %s235
      %s237 = sphi 0, %s235
      %s238 = sphi 0, %s237
      %s252 = sphi 0, %s238
      %s256 = sphi 0, %s256
      %s258 = sphi 0, %s256
      %s259 = sphi 0, %s258
      %s273 = sphi 0, %s259
      %s277 = sphi 0, %s277
      %s279 = sphi 0, %s277
      %s280 = sphi 0, %s279
      %s294 = sphi 0, %s280
      %s298 = sphi 0, %s298
      %s300 = sphi 0, %s298
      %s301 = sphi 0, %s300
      %s315 = sphi 0, %s301
      %s319 = sphi 0, %s319
      %s321 = sphi 0, %s319
      %s322 = sphi 0, %s321
      %s336 = sphi 0, %s322
      %s342 = sphi 0, %s344
      %s345 = sphi 0, %s342
      %s346 = sphi 0, %s345
      %s362 = sphi 0, %s346
    $region4: #{tpu_custom_call.1} parent=1 // loop_header_branch
      %36 = sbr.rel (%p34) target = $region8
    $region5: #{tpu_custom_call.1} parent=1 // loop_body
      %s38 = ssub.s32 %s33, 1
      %s39 = ssub.s32 %s33, 2
      %s40 = sadd.s32 %s33, 1
      %s41 = ssub.s32 %s33, %s40
      %p42 = scmp.eq.s32.totalorder %s41, 0
      %s44 = sadd.s32 %s43, 1
      %s45 = scalar_select %p42, %s43, %s44
      %p48 = pneg %p42
      %p49 = scmp.eq.s32.totalorder %s33, 1
      %p50 = por %p48, %p49
      %p51 = scmp.ne.s32.totalorder %s43, %s46
      %p52 = scmp.eq.s32.totalorder %s33, 0
      %p53 = por %p51, %p52
      %p54 = scmp.ne.s32.totalorder %s43, %s46
      %p55 = scmp.eq.s32.totalorder %s38, 1
      %p56 = por %p54, %p55
      %p57 = scmp.ne.s32.totalorder %s46, %s47
      %p58 = scmp.eq.s32.totalorder %s38, 0
      %p59 = por %p57, %p58
      %p60 = scmp.ne.s32.totalorder %s46, %s47
      %p61 = scmp.eq.s32.totalorder %s39, 1
      %p62 = por %p60, %p61
      %p64 = scmp.ne.s32.totalorder %s47, %s63
      %p65 = scmp.eq.s32.totalorder %s39, 0
      %p66 = por %p64, %p65
      %s68 = sadd.s32 %s67, 1
      %p71 = scmp.eq.s32.totalorder %s33, 1
      %p72 = scmp.ne.s32.totalorder %s67, %s69
      %p73 = scmp.eq.s32.totalorder %s33, 0
      %p74 = por %p72, %p73
      %p75 = scmp.ne.s32.totalorder %s67, %s69
      %p76 = scmp.eq.s32.totalorder %s38, 1
      %p77 = por %p75, %p76
      %p78 = scmp.ne.s32.totalorder %s69, %s70
      %p79 = scmp.eq.s32.totalorder %s38, 0
      %p80 = por %p78, %p79
      %p81 = scmp.ne.s32.totalorder %s69, %s70
      %p82 = scmp.eq.s32.totalorder %s39, 1
      %p83 = por %p81, %p82
      %p85 = scmp.ne.s32.totalorder %s70, %s84
      %p86 = scmp.eq.s32.totalorder %s39, 0
      %p87 = por %p85, %p86
      %s89 = sadd.s32 %s88, 1
      %p92 = scmp.eq.s32.totalorder %s33, 1
      %p93 = scmp.ne.s32.totalorder %s88, %s90
      %p94 = scmp.eq.s32.totalorder %s33, 0
      %p95 = por %p93, %p94
      %p96 = scmp.ne.s32.totalorder %s88, %s90
      %p97 = scmp.eq.s32.totalorder %s38, 1
      %p98 = por %p96, %p97
      %p99 = scmp.ne.s32.totalorder %s90, %s91
      %p100 = scmp.eq.s32.totalorder %s38, 0
      %p101 = por %p99, %p100
      %p102 = scmp.ne.s32.totalorder %s90, %s91
      %p103 = scmp.eq.s32.totalorder %s39, 1
      %p104 = por %p102, %p103
      %p106 = scmp.ne.s32.totalorder %s91, %s105
      %p107 = scmp.eq.s32.totalorder %s39, 0
      %p108 = por %p106, %p107
      %s110 = sadd.s32 %s109, 1
      %p113 = scmp.eq.s32.totalorder %s33, 1
      %p114 = scmp.ne.s32.totalorder %s109, %s111
      %p115 = scmp.eq.s32.totalorder %s33, 0
      %p116 = por %p114, %p115
      %p117 = scmp.ne.s32.totalorder %s109, %s111
      %p118 = scmp.eq.s32.totalorder %s38, 1
      %p119 = por %p117, %p118
      %p120 = scmp.ne.s32.totalorder %s111, %s112
      %p121 = scmp.eq.s32.totalorder %s38, 0
      %p122 = por %p120, %p121
      %p123 = scmp.ne.s32.totalorder %s111, %s112
      %p124 = scmp.eq.s32.totalorder %s39, 1
      %p125 = por %p123, %p124
      %p127 = scmp.ne.s32.totalorder %s112, %s126
      %p128 = scmp.eq.s32.totalorder %s39, 0
      %p129 = por %p127, %p128
      %s131 = sadd.s32 %s130, 1
      %p134 = scmp.eq.s32.totalorder %s33, 1
      %p135 = scmp.ne.s32.totalorder %s130, %s132
      %p136 = scmp.eq.s32.totalorder %s33, 0
      %p137 = por %p135, %p136
      %p138 = scmp.ne.s32.totalorder %s130, %s132
      %p139 = scmp.eq.s32.totalorder %s38, 1
      %p140 = por %p138, %p139
      %p141 = scmp.ne.s32.totalorder %s132, %s133
      %p142 = scmp.eq.s32.totalorder %s38, 0
      %p143 = por %p141, %p142
      %p144 = scmp.ne.s32.totalorder %s132, %s133
      %p145 = scmp.eq.s32.totalorder %s39, 1
      %p146 = por %p144, %p145
      %p148 = scmp.ne.s32.totalorder %s133, %s147
      %p149 = scmp.eq.s32.totalorder %s39, 0
      %p150 = por %p148, %p149
      %s152 = sadd.s32 %s151, 1
      %p155 = scmp.eq.s32.totalorder %s33, 1
      %p156 = scmp.ne.s32.totalorder %s151, %s153
      %p157 = scmp.eq.s32.totalorder %s33, 0
      %p158 = por %p156, %p157
      %p159 = scmp.ne.s32.totalorder %s151, %s153
      %p160 = scmp.eq.s32.totalorder %s38, 1
      %p161 = por %p159, %p160
      %p162 = scmp.ne.s32.totalorder %s153, %s154
      %p163 = scmp.eq.s32.totalorder %s38, 0
      %p164 = por %p162, %p163
      %p165 = scmp.ne.s32.totalorder %s153, %s154
      %p166 = scmp.eq.s32.totalorder %s39, 1
      %p167 = por %p165, %p166
      %p169 = scmp.ne.s32.totalorder %s154, %s168
      %p170 = scmp.eq.s32.totalorder %s39, 0
      %p171 = por %p169, %p170
      %s173 = sadd.s32 %s172, 1
      %p176 = scmp.eq.s32.totalorder %s33, 1
      %p177 = scmp.ne.s32.totalorder %s172, %s174
      %p178 = scmp.eq.s32.totalorder %s33, 0
      %p179 = por %p177, %p178
      %p180 = scmp.ne.s32.totalorder %s172, %s174
      %p181 = scmp.eq.s32.totalorder %s38, 1
      %p182 = por %p180, %p181
      %p183 = scmp.ne.s32.totalorder %s174, %s175
      %p184 = scmp.eq.s32.totalorder %s38, 0
      %p185 = por %p183, %p184
      %p186 = scmp.ne.s32.totalorder %s174, %s175
      %p187 = scmp.eq.s32.totalorder %s39, 1
      %p188 = por %p186, %p187
      %p190 = scmp.ne.s32.totalorder %s175, %s189
      %p191 = scmp.eq.s32.totalorder %s39, 0
      %p192 = por %p190, %p191
      %s194 = sadd.s32 %s193, 1
      %p197 = scmp.eq.s32.totalorder %s33, 1
      %p198 = scmp.ne.s32.totalorder %s193, %s195
      %p199 = scmp.eq.s32.totalorder %s33, 0
      %p200 = por %p198, %p199
      %p201 = scmp.ne.s32.totalorder %s193, %s195
      %p202 = scmp.eq.s32.totalorder %s38, 1
      %p203 = por %p201, %p202
      %p204 = scmp.ne.s32.totalorder %s195, %s196
      %p205 = scmp.eq.s32.totalorder %s38, 0
      %p206 = por %p204, %p205
      %p207 = scmp.ne.s32.totalorder %s195, %s196
      %p208 = scmp.eq.s32.totalorder %s39, 1
      %p209 = por %p207, %p208
      %p211 = scmp.ne.s32.totalorder %s196, %s210
      %p212 = scmp.eq.s32.totalorder %s39, 0
      %p213 = por %p211, %p212
      %s215 = sadd.s32 %s214, 1
      %p218 = scmp.eq.s32.totalorder %s33, 1
      %p219 = scmp.ne.s32.totalorder %s214, %s216
      %p220 = scmp.eq.s32.totalorder %s33, 0
      %p221 = por %p219, %p220
      %p222 = scmp.ne.s32.totalorder %s214, %s216
      %p223 = scmp.eq.s32.totalorder %s38, 1
      %p224 = por %p222, %p223
      %p225 = scmp.ne.s32.totalorder %s216, %s217
      %p226 = scmp.eq.s32.totalorder %s38, 0
      %p227 = por %p225, %p226
      %p228 = scmp.ne.s32.totalorder %s216, %s217
      %p229 = scmp.eq.s32.totalorder %s39, 1
      %p230 = por %p228, %p229
      %p232 = scmp.ne.s32.totalorder %s217, %s231
      %p233 = scmp.eq.s32.totalorder %s39, 0
      %p234 = por %p232, %p233
      %s236 = sadd.s32 %s235, 1
      %p239 = scmp.eq.s32.totalorder %s33, 1
      %p240 = scmp.ne.s32.totalorder %s235, %s237
      %p241 = scmp.eq.s32.totalorder %s33, 0
      %p242 = por %p240, %p241
      %p243 = scmp.ne.s32.totalorder %s235, %s237
      %p244 = scmp.eq.s32.totalorder %s38, 1
      %p245 = por %p243, %p244
      %p246 = scmp.ne.s32.totalorder %s237, %s238
      %p247 = scmp.eq.s32.totalorder %s38, 0
      %p248 = por %p246, %p247
      %p249 = scmp.ne.s32.totalorder %s237, %s238
      %p250 = scmp.eq.s32.totalorder %s39, 1
      %p251 = por %p249, %p250
      %p253 = scmp.ne.s32.totalorder %s238, %s252
      %p254 = scmp.eq.s32.totalorder %s39, 0
      %p255 = por %p253, %p254
      %s257 = sadd.s32 %s256, 1
      %p260 = scmp.eq.s32.totalorder %s33, 1
      %p261 = scmp.ne.s32.totalorder %s256, %s258
      %p262 = scmp.eq.s32.totalorder %s33, 0
      %p263 = por %p261, %p262
      %p264 = scmp.ne.s32.totalorder %s256, %s258
      %p265 = scmp.eq.s32.totalorder %s38, 1
      %p266 = por %p264, %p265
      %p267 = scmp.ne.s32.totalorder %s258, %s259
      %p268 = scmp.eq.s32.totalorder %s38, 0
      %p269 = por %p267, %p268
      %p270 = scmp.ne.s32.totalorder %s258, %s259
      %p271 = scmp.eq.s32.totalorder %s39, 1
      %p272 = por %p270, %p271
      %p274 = scmp.ne.s32.totalorder %s259, %s273
      %p275 = scmp.eq.s32.totalorder %s39, 0
      %p276 = por %p274, %p275
      %s278 = sadd.s32 %s277, 1
      %p281 = scmp.eq.s32.totalorder %s33, 1
      %p282 = scmp.ne.s32.totalorder %s277, %s279
      %p283 = scmp.eq.s32.totalorder %s33, 0
      %p284 = por %p282, %p283
      %p285 = scmp.ne.s32.totalorder %s277, %s279
      %p286 = scmp.eq.s32.totalorder %s38, 1
      %p287 = por %p285, %p286
      %p288 = scmp.ne.s32.totalorder %s279, %s280
      %p289 = scmp.eq.s32.totalorder %s38, 0
      %p290 = por %p288, %p289
      %p291 = scmp.ne.s32.totalorder %s279, %s280
      %p292 = scmp.eq.s32.totalorder %s39, 1
      %p293 = por %p291, %p292
      %p295 = scmp.ne.s32.totalorder %s280, %s294
      %p296 = scmp.eq.s32.totalorder %s39, 0
      %p297 = por %p295, %p296
      %s299 = sadd.s32 %s298, 1
      %p302 = scmp.eq.s32.totalorder %s33, 1
      %p303 = scmp.ne.s32.totalorder %s298, %s300
      %p304 = scmp.eq.s32.totalorder %s33, 0
      %p305 = por %p303, %p304
      %p306 = scmp.ne.s32.totalorder %s298, %s300
      %p307 = scmp.eq.s32.totalorder %s38, 1
      %p308 = por %p306, %p307
      %p309 = scmp.ne.s32.totalorder %s300, %s301
      %p310 = scmp.eq.s32.totalorder %s38, 0
      %p311 = por %p309, %p310
      %p312 = scmp.ne.s32.totalorder %s300, %s301
      %p313 = scmp.eq.s32.totalorder %s39, 1
      %p314 = por %p312, %p313
      %p316 = scmp.ne.s32.totalorder %s301, %s315
      %p317 = scmp.eq.s32.totalorder %s39, 0
      %p318 = por %p316, %p317
      %s320 = sadd.s32 %s319, 1
      %p323 = scmp.eq.s32.totalorder %s33, 1
      %p324 = scmp.ne.s32.totalorder %s319, %s321
      %p325 = scmp.eq.s32.totalorder %s33, 0
      %p326 = por %p324, %p325
      %p327 = scmp.ne.s32.totalorder %s319, %s321
      %p328 = scmp.eq.s32.totalorder %s38, 1
      %p329 = por %p327, %p328
      %p330 = scmp.ne.s32.totalorder %s321, %s322
      %p331 = scmp.eq.s32.totalorder %s38, 0
      %p332 = por %p330, %p331
      %p333 = scmp.ne.s32.totalorder %s321, %s322
      %p334 = scmp.eq.s32.totalorder %s39, 1
      %p335 = por %p333, %p334
      %p337 = scmp.ne.s32.totalorder %s322, %s336
      %p338 = scmp.eq.s32.totalorder %s39, 0
      %p339 = por %p337, %p338
      %s340 = ssub.s32 %s33, %s40
      %p341 = scmp.eq.s32.totalorder %s340, 0
      %s343 = sadd.s32 %s342, 1
      %s344 = scalar_select %p341, %s342, %s343
      %p347 = pneg %p341
      %p348 = scmp.eq.s32.totalorder %s33, 1
      %p349 = por %p347, %p348
      %p350 = scmp.ne.s32.totalorder %s342, %s345
      %p351 = scmp.eq.s32.totalorder %s33, 0
      %p352 = por %p350, %p351
      %p353 = scmp.ne.s32.totalorder %s342, %s345
      %p354 = scmp.eq.s32.totalorder %s38, 1
      %p355 = por %p353, %p354
      %p356 = scmp.ne.s32.totalorder %s345, %s346
      %p357 = scmp.eq.s32.totalorder %s38, 0
      %p358 = por %p356, %p357
      %p359 = scmp.ne.s32.totalorder %s345, %s346
      %p360 = scmp.eq.s32.totalorder %s39, 1
      %p361 = por %p359, %p360
      %p363 = scmp.ne.s32.totalorder %s346, %s362
      %p364 = scmp.eq.s32.totalorder %s39, 0
      %p365 = por %p363, %p364
      %p366 = scmp.le.s32.totalorder 1, %s33
      %p367 = scmp.lt.s32.totalorder %s33, 3
      %p368 = pnand %p366, %p367
      %p369 = pneg %p368
      // Predicated region
      $region9: #{tpu_custom_call.1} parent=5 // pred_check
        _
      $region10: #{tpu_custom_call.1} parent=5 // pred_check_branch
        %371 = sbr.rel (%p368) target = $region12
      $region11: #{tpu_custom_call.1} parent=5 // pred_region
        %s372 = ssub.s32 %s33, 1
        // Predicated region
        $region13: #{tpu_custom_call.1} parent=11 // pred_check
          %p373 = pneg %p80
        $region14: #{tpu_custom_call.1} parent=11 // pred_check_branch
          %375 = sbr.rel (%p373) target = $region16
        $region15: #{tpu_custom_call.1} parent=11 // pred_region
          %s377 = ssub.s32 16, 16
          %378 = vsyncadd [#allocation6], %s377
          %s380 = sshll.u32 [#allocation5], 4
          %s381 = int_to_ptr.vmem [resolvable:$true] %s380
          %383 = dma.hbm_to_vmem [thread:$0]  %s1, 16, %s381, [#allocation6]
        $region16: #{tpu_custom_call.1} parent=11 // pred_fallthru
          _
        // Predicated region
        $region17: #{tpu_custom_call.1} parent=11 // pred_check
          %p384 = pneg %p101
        $region18: #{tpu_custom_call.1} parent=11 // pred_check_branch
          %386 = sbr.rel (%p384) target = $region20
        $region19: #{tpu_custom_call.1} parent=11 // pred_region
          %s388 = ssub.s32 16, 16
          %389 = vsyncadd [#allocation6], %s388
          %s391 = sshll.u32 [#allocation7], 4
          %s392 = int_to_ptr.vmem [resolvable:$true] %s391
          %394 = dma.hbm_to_vmem [thread:$0]  %s2, 16, %s392, [#allocation6]
        $region20: #{tpu_custom_call.1} parent=11 // pred_fallthru
          _
        // Predicated region
        $region21: #{tpu_custom_call.1} parent=11 // pred_check
          %p395 = pneg %p122
        $region22: #{tpu_custom_call.1} parent=11 // pred_check_branch
          %397 = sbr.rel (%p395) target = $region24
        $region23: #{tpu_custom_call.1} parent=11 // pred_region
          %s399 = ssub.s32 768, 768
          %400 = vsyncadd [#allocation9], %s399
          %s401 = sshll.u32 [#allocation8], 4
          %s402 = int_to_ptr.vmem [resolvable:$true] %s401
          %407 = dma.hbm_to_vmem [thread:$0]  %s3, 768, %s402, [#allocation9], 192, 192, 12
        $region24: #{tpu_custom_call.1} parent=11 // pred_fallthru
          _
        // Predicated region
        $region25: #{tpu_custom_call.1} parent=11 // pred_check
          %p408 = pneg %p143
        $region26: #{tpu_custom_call.1} parent=11 // pred_check_branch
          %410 = sbr.rel (%p408) target = $region28
        $region27: #{tpu_custom_call.1} parent=11 // pred_region
          %s412 = ssub.s32 48, 48
          %413 = vsyncadd [#allocation9], %s412
          %s415 = sshll.u32 [#allocation10], 4
          %s416 = int_to_ptr.vmem [resolvable:$true] %s415
          %418 = dma.hbm_to_vmem [thread:$0]  %s4, 48, %s416, [#allocation9]
        $region28: #{tpu_custom_call.1} parent=11 // pred_fallthru
          _
        // Predicated region
        $region29: #{tpu_custom_call.1} parent=11 // pred_check
          %p419 = pneg %p164
        $region30: #{tpu_custom_call.1} parent=11 // pred_check_branch
          %421 = sbr.rel (%p419) target = $region32
        $region31: #{tpu_custom_call.1} parent=11 // pred_region
          %s423 = ssub.s32 1024, 1024
          %424 = vsyncadd [#allocation12], %s423
          %s425 = sshll.u32 [#allocation11], 4
          %s426 = int_to_ptr.vmem [resolvable:$true] %s425
          %431 = dma.hbm_to_vmem [thread:$0]  %s5, 1024, %s426, [#allocation12], 64, 64, 4
        $region32: #{tpu_custom_call.1} parent=11 // pred_fallthru
          _
        // Predicated region
        $region33: #{tpu_custom_call.1} parent=11 // pred_check
          %p432 = pneg %p185
        $region34: #{tpu_custom_call.1} parent=11 // pred_check_branch
          %434 = sbr.rel (%p432) target = $region36
        $region35: #{tpu_custom_call.1} parent=11 // pred_region
          %s436 = ssub.s32 1024, 1024
          %437 = vsyncadd [#allocation12], %s436
          %s438 = sshll.u32 [#allocation13], 4
          %s439 = int_to_ptr.vmem [resolvable:$true] %s438
          %444 = dma.hbm_to_vmem [thread:$0]  %s6, 1024, %s439, [#allocation12], 64, 64, 4
        $region36: #{tpu_custom_call.1} parent=11 // pred_fallthru
          _
        // Predicated region
        $region37: #{tpu_custom_call.1} parent=11 // pred_check
          %p445 = pneg %p206
        $region38: #{tpu_custom_call.1} parent=11 // pred_check_branch
          %447 = sbr.rel (%p445) target = $region40
        $region39: #{tpu_custom_call.1} parent=11 // pred_region
          %s449 = ssub.s32 16, 16
          %450 = vsyncadd [#allocation15], %s449
          %s452 = sshll.u32 [#allocation14], 4
          %s453 = int_to_ptr.vmem [resolvable:$true] %s452
          %455 = dma.hbm_to_vmem [thread:$0]  %s7, 16, %s453, [#allocation15]
        $region40: #{tpu_custom_call.1} parent=11 // pred_fallthru
          _
        // Predicated region
        $region41: #{tpu_custom_call.1} parent=11 // pred_check
          %p456 = pneg %p227
        $region42: #{tpu_custom_call.1} parent=11 // pred_check_branch
          %458 = sbr.rel (%p456) target = $region44
        $region43: #{tpu_custom_call.1} parent=11 // pred_region
          %s460 = ssub.s32 16, 16
          %461 = vsyncadd [#allocation15], %s460
          %s463 = sshll.u32 [#allocation16], 4
          %s464 = int_to_ptr.vmem [resolvable:$true] %s463
          %466 = dma.hbm_to_vmem [thread:$0]  %s8, 16, %s464, [#allocation15]
        $region44: #{tpu_custom_call.1} parent=11 // pred_fallthru
          _
        // Predicated region
        $region45: #{tpu_custom_call.1} parent=11 // pred_check
          %p467 = pneg %p248
        $region46: #{tpu_custom_call.1} parent=11 // pred_check_branch
          %469 = sbr.rel (%p467) target = $region48
        $region47: #{tpu_custom_call.1} parent=11 // pred_region
          %s471 = ssub.s32 16, 16
          %472 = vsyncadd [#allocation18], %s471
          %s474 = sshll.u32 [#allocation17], 4
          %s475 = int_to_ptr.vmem [resolvable:$true] %s474
          %477 = dma.hbm_to_vmem [thread:$0]  %s9, 16, %s475, [#allocation18]
        $region48: #{tpu_custom_call.1} parent=11 // pred_fallthru
          _
        // Predicated region
        $region49: #{tpu_custom_call.1} parent=11 // pred_check
          %p478 = pneg %p269
        $region50: #{tpu_custom_call.1} parent=11 // pred_check_branch
          %480 = sbr.rel (%p478) target = $region52
        $region51: #{tpu_custom_call.1} parent=11 // pred_region
          %s482 = ssub.s32 256, 256
          %483 = vsyncadd [#allocation18], %s482
          %s484 = sshll.u32 [#allocation19], 4
          %s485 = int_to_ptr.vmem [resolvable:$true] %s484
          %490 = dma.hbm_to_vmem [thread:$0]  %s10, 256, %s485, [#allocation18], 64, 64, 4
        $region52: #{tpu_custom_call.1} parent=11 // pred_fallthru
          _
        // Predicated region
        $region53: #{tpu_custom_call.1} parent=11 // pred_check
          %p491 = pneg %p290
        $region54: #{tpu_custom_call.1} parent=11 // pred_check_branch
          %493 = sbr.rel (%p491) target = $region56
        $region55: #{tpu_custom_call.1} parent=11 // pred_region
          %s495 = ssub.s32 16, 16
          %496 = vsyncadd [#allocation21], %s495
          %s498 = sshll.u32 [#allocation20], 4
          %s499 = int_to_ptr.vmem [resolvable:$true] %s498
          %501 = dma.hbm_to_vmem [thread:$0]  %s11, 16, %s499, [#allocation21]
        $region56: #{tpu_custom_call.1} parent=11 // pred_fallthru
          _
        // Predicated region
        $region57: #{tpu_custom_call.1} parent=11 // pred_check
          %p502 = pneg %p311
        $region58: #{tpu_custom_call.1} parent=11 // pred_check_branch
          %504 = sbr.rel (%p502) target = $region60
        $region59: #{tpu_custom_call.1} parent=11 // pred_region
          %s506 = ssub.s32 256, 256
          %507 = vsyncadd [#allocation21], %s506
          %s508 = sshll.u32 [#allocation22], 4
          %s509 = int_to_ptr.vmem [resolvable:$true] %s508
          %514 = dma.hbm_to_vmem [thread:$0]  %s12, 256, %s509, [#allocation21], 64, 64, 4
        $region60: #{tpu_custom_call.1} parent=11 // pred_fallthru
          _
        // Predicated region
        $region61: #{tpu_custom_call.1} parent=11 // pred_check
          %p515 = pneg %p332
        $region62: #{tpu_custom_call.1} parent=11 // pred_check_branch
          %517 = sbr.rel (%p515) target = $region64
        $region63: #{tpu_custom_call.1} parent=11 // pred_region
          %s519 = ssub.s32 16, 16
          %520 = vsyncadd [#allocation24], %s519
          %s522 = sshll.u32 [#allocation23], 4
          %s523 = int_to_ptr.vmem [resolvable:$true] %s522
          %525 = dma.hbm_to_vmem [thread:$0]  %s13, 16, %s523, [#allocation24]
        $region64: #{tpu_custom_call.1} parent=11 // pred_fallthru
          _
      $region12: #{tpu_custom_call.1} parent=5 // pred_fallthru
        _
      %p526 = scmp.lt.s32.totalorder %s33, 2
      // Predicated region
      $region65: #{tpu_custom_call.1} parent=5 // pred_check
        %p527 = pneg %p526
      $region66: #{tpu_custom_call.1} parent=5 // pred_check_branch
        %529 = sbr.rel (%p527) target = $region68
      $region67: #{tpu_custom_call.1} parent=5 // pred_region
        // Predicated region
        $region69: #{tpu_custom_call.1} parent=67 // pred_check
          %p530 = pneg %p53
        $region70: #{tpu_custom_call.1} parent=67 // pred_check_branch
          %532 = sbr.rel (%p530) target = $region72
        $region71: #{tpu_custom_call.1} parent=67 // pred_region
          %s533 = sand.u32 %s43, 1
          %s534 = scalar_lea.sflag [#allocation3], %s533
          %s535 = sand.u32 %s43, 1
          %s536 = smul.addr %s535, 8
          %s537 = scalar_lea.vmem [#allocation2], %s536
          %s539 = ssub.s32 128, 128
          %540 = vsyncadd %s534, %s539
          %s541 = smul.addr %s33, 128
          %s542 = scalar_lea.hbm %s0, %s541
          %s544 = sshll.u32 %s537, 4
          %s545 = int_to_ptr.vmem [resolvable:$true] %s544
          %547 = dma.hbm_to_vmem [thread:$0]  %s542, 128, %s545, %s534
        $region72: #{tpu_custom_call.1} parent=67 // pred_fallthru
          _
      $region68: #{tpu_custom_call.1} parent=5 // pred_fallthru
        _
      %p548 = scmp.le.s32.totalorder 1, %s33
      %p549 = scmp.lt.s32.totalorder %s33, 3
      %p550 = pnand %p548, %p549
      %p551 = pneg %p550
      // Predicated region
      $region73: #{tpu_custom_call.1} parent=5 // pred_check
        _
      $region74: #{tpu_custom_call.1} parent=5 // pred_check_branch
        %553 = sbr.rel (%p550) target = $region76
      $region75: #{tpu_custom_call.1} parent=5 // pred_region
        %s554 = ssub.s32 %s33, 1
        %s555 = sand.u32 %s46, 1
        %s556 = scalar_lea.sflag [#allocation3], %s555
        %s557 = sand.u32 %s46, 1
        %s558 = smul.addr %s557, 8
        %s559 = scalar_lea.vmem [#allocation2], %s558
        // Predicated region
        $region77: #{tpu_custom_call.1} parent=75 // pred_check
          %p560 = pneg %p59
        $region78: #{tpu_custom_call.1} parent=75 // pred_check_branch
          %562 = sbr.rel (%p560) target = $region80
        $region79: #{tpu_custom_call.1} parent=75 // pred_region
          %563 = dma.done %s556, 128
        $region80: #{tpu_custom_call.1} parent=75 // pred_fallthru
          _
        // Predicated region
        $region81: #{tpu_custom_call.1} parent=75 // pred_check
          %p564 = pneg %p80
        $region82: #{tpu_custom_call.1} parent=75 // pred_check_branch
          %566 = sbr.rel (%p564) target = $region84
        $region83: #{tpu_custom_call.1} parent=75 // pred_region
          %567 = dma.done [#allocation6], 16
        $region84: #{tpu_custom_call.1} parent=75 // pred_fallthru
          _
        // Predicated region
        $region85: #{tpu_custom_call.1} parent=75 // pred_check
          %p568 = pneg %p101
        $region86: #{tpu_custom_call.1} parent=75 // pred_check_branch
          %570 = sbr.rel (%p568) target = $region88
        $region87: #{tpu_custom_call.1} parent=75 // pred_region
          %571 = dma.done [#allocation6], 16
        $region88: #{tpu_custom_call.1} parent=75 // pred_fallthru
          _
        // Predicated region
        $region89: #{tpu_custom_call.1} parent=75 // pred_check
          %p572 = pneg %p122
        $region90: #{tpu_custom_call.1} parent=75 // pred_check_branch
          %574 = sbr.rel (%p572) target = $region92
        $region91: #{tpu_custom_call.1} parent=75 // pred_region
          %575 = dma.done [#allocation9], 768
        $region92: #{tpu_custom_call.1} parent=75 // pred_fallthru
          _
        // Predicated region
        $region93: #{tpu_custom_call.1} parent=75 // pred_check
          %p576 = pneg %p143
        $region94: #{tpu_custom_call.1} parent=75 // pred_check_branch
          %578 = sbr.rel (%p576) target = $region96
        $region95: #{tpu_custom_call.1} parent=75 // pred_region
          %579 = dma.done [#allocation9], 48
        $region96: #{tpu_custom_call.1} parent=75 // pred_fallthru
          _
        // Predicated region
        $region97: #{tpu_custom_call.1} parent=75 // pred_check
          %p580 = pneg %p164
        $region98: #{tpu_custom_call.1} parent=75 // pred_check_branch
          %582 = sbr.rel (%p580) target = $region100
        $region99: #{tpu_custom_call.1} parent=75 // pred_region
          %583 = dma.done [#allocation12], 1024
        $region100: #{tpu_custom_call.1} parent=75 // pred_fallthru
          _
        // Predicated region
        $region101: #{tpu_custom_call.1} parent=75 // pred_check
          %p584 = pneg %p185
        $region102: #{tpu_custom_call.1} parent=75 // pred_check_branch
          %586 = sbr.rel (%p584) target = $region104
        $region103: #{tpu_custom_call.1} parent=75 // pred_region
          %587 = dma.done [#allocation12], 1024
        $region104: #{tpu_custom_call.1} parent=75 // pred_fallthru
          _
        // Predicated region
        $region105: #{tpu_custom_call.1} parent=75 // pred_check
          %p588 = pneg %p206
        $region106: #{tpu_custom_call.1} parent=75 // pred_check_branch
          %590 = sbr.rel (%p588) target = $region108
        $region107: #{tpu_custom_call.1} parent=75 // pred_region
          %591 = dma.done [#allocation15], 16
        $region108: #{tpu_custom_call.1} parent=75 // pred_fallthru
          _
        // Predicated region
        $region109: #{tpu_custom_call.1} parent=75 // pred_check
          %p592 = pneg %p227
        $region110: #{tpu_custom_call.1} parent=75 // pred_check_branch
          %594 = sbr.rel (%p592) target = $region112
        $region111: #{tpu_custom_call.1} parent=75 // pred_region
          %595 = dma.done [#allocation15], 16
        $region112: #{tpu_custom_call.1} parent=75 // pred_fallthru
          _
        // Predicated region
        $region113: #{tpu_custom_call.1} parent=75 // pred_check
          %p596 = pneg %p248
        $region114: #{tpu_custom_call.1} parent=75 // pred_check_branch
          %598 = sbr.rel (%p596) target = $region116
        $region115: #{tpu_custom_call.1} parent=75 // pred_region
          %599 = dma.done [#allocation18], 16
        $region116: #{tpu_custom_call.1} parent=75 // pred_fallthru
          _
        // Predicated region
        $region117: #{tpu_custom_call.1} parent=75 // pred_check
          %p600 = pneg %p269
        $region118: #{tpu_custom_call.1} parent=75 // pred_check_branch
          %602 = sbr.rel (%p600) target = $region120
        $region119: #{tpu_custom_call.1} parent=75 // pred_region
          %603 = dma.done [#allocation18], 256
        $region120: #{tpu_custom_call.1} parent=75 // pred_fallthru
          _
        // Predicated region
        $region121: #{tpu_custom_call.1} parent=75 // pred_check
          %p604 = pneg %p290
        $region122: #{tpu_custom_call.1} parent=75 // pred_check_branch
          %606 = sbr.rel (%p604) target = $region124
        $region123: #{tpu_custom_call.1} parent=75 // pred_region
          %607 = dma.done [#allocation21], 16
        $region124: #{tpu_custom_call.1} parent=75 // pred_fallthru
          _
        // Predicated region
        $region125: #{tpu_custom_call.1} parent=75 // pred_check
          %p608 = pneg %p311
        $region126: #{tpu_custom_call.1} parent=75 // pred_check_branch
          %610 = sbr.rel (%p608) target = $region128
        $region127: #{tpu_custom_call.1} parent=75 // pred_region
          %611 = dma.done [#allocation21], 256
        $region128: #{tpu_custom_call.1} parent=75 // pred_fallthru
          _
        // Predicated region
        $region129: #{tpu_custom_call.1} parent=75 // pred_check
          %p612 = pneg %p332
        $region130: #{tpu_custom_call.1} parent=75 // pred_check_branch
          %614 = sbr.rel (%p612) target = $region132
        $region131: #{tpu_custom_call.1} parent=75 // pred_region
          %615 = dma.done [#allocation24], 16
        $region132: #{tpu_custom_call.1} parent=75 // pred_fallthru
          _
        %s616 = sand.u32 %s46, 1
        %s617 = scalar_lea.sflag [#allocation3], %s616
        %s618 = sand.u32 %s46, 1
        %s619 = smul.addr %s618, 8
        %s620 = scalar_lea.vmem [#allocation2], %s619
        %p621 = pneg %p59
        %p622 = pneg %p56
        %p623 = pneg %p80
        %p624 = pneg %p77
        %p625 = pneg %p101
        %p626 = pneg %p98
        %p627 = pneg %p122
        %p628 = pneg %p119
        %p629 = pneg %p143
        %p630 = pneg %p140
        %p631 = pneg %p164
        %p632 = pneg %p161
        %p633 = pneg %p185
        %p634 = pneg %p182
        %p635 = pneg %p206
        %p636 = pneg %p203
        %p637 = pneg %p227
        %p638 = pneg %p224
        %p639 = pneg %p248
        %p640 = pneg %p245
        %p641 = pneg %p269
        %p642 = pneg %p266
        %p643 = pneg %p290
        %p644 = pneg %p287
        %p645 = pneg %p311
        %p646 = pneg %p308
        %p647 = pneg %p332
        %p648 = pneg %p329
        %p649 = pneg %p358
        %p650 = pneg %p355
        %s651 = sand.u32 %s345, 1
        %s652 = scalar_lea.sflag [#allocation4], %s651
        %s653 = sand.u32 %s345, 1
        %s654 = smul.addr %s653, 8
        %s655 = scalar_lea.vmem [#allocation25], %s654
        %v657 = vld [vmem:[%s559] sm:$0xff]
        %v658 = vld [vmem:[#allocation5] sm:$0x1]
        %v659 = vld [vmem:[#allocation7] sm:$0x1]
        %vm660 = vcmask 261120
        %v661 = vsel %vm660, %v657, 0.0
        %662 = vadd.xlane.f32.xlu0 %v661
        %v663 = vpop.xlane.xlu0 %662
        %v664 = vrcp.pop 32.0
        %v665 = vmul.f32 %v663, %v664
        %v666 = vsub.f32 %v657, %v665
        %v667 = vmul.f32 %v666, %v666
        %v668 = vsel %vm660, %v667, 0.0
        %669 = vadd.xlane.f32.xlu0 %v668
        %v670 = vpop.xlane.xlu0 %669
        %v671 = vmul.f32 %v670, %v664
        %v672 = vadd.f32 %v671, 1e-05
        %v673 = vrsqrt.pop %v672
        %v674 = vmul.f32 %v666, %v673
        %v676 = vlaneseq
        %v677 = vshrl.u32 %v676, 7
        %v678 = vsub.s32 0, %v677
        %v679 = vrot.slane %v658, %v678
        %v681 = vmul.f32 %v674, %v679
        %v683 = vlaneseq
        %v684 = vshrl.u32 %v683, 7
        %v685 = vsub.s32 0, %v684
        %v686 = vrot.slane %v659, %v685
        %v688 = vadd.f32 %v681, %v686
        %v689 = vpack.c.bf16 %v688, %v688
        %v690 = vld [vmem:[#allocation8] sm:$0xff]
        %v691 = vld [vmem:[#allocation8 + $0x8] sm:$0xf]
        %v692 = vld [vmem:[#allocation8 + $0xc] sm:$0xff]
        %v693 = vld [vmem:[#allocation8 + $0x14] sm:$0xf]
        %v694 = vld [vmem:[#allocation8 + $0x18] sm:$0xff]
        %v695 = vld [vmem:[#allocation8 + $0x20] sm:$0xf]
        %v696 = vld [vmem:[#allocation8 + $0x24] sm:$0xff]
        %v697 = vld [vmem:[#allocation8 + $0x2c] sm:$0xf]
        %v698 = vld [vmem:[#allocation10] sm:$0x7]
        %v700 = vlaneseq
        %v701 = vshrl.u32 %v700, 7
        %v702 = vsub.s32 0, %v701
        %v703 = vrot.slane %v698, %v702
        %v704 = vlaneseq
        %v705 = vshrl.u32 %v704, 7
        %v706 = vsub.s32 1, %v705
        %v707 = vrot.slane %v698, %v706
        %v708 = vlaneseq
        %v709 = vshrl.u32 %v708, 7
        %v710 = vsub.s32 2, %v709
        %v711 = vrot.slane %v698, %v710
        %v723 = vunpack.c.l.b16 %v690
        %v724 = vunpack.c.h.b16 %v690
        %v725 = vunpack.c.l.b16 %v691
        %v726 = vunpack.c.l.b16 %v692
        %v727 = vunpack.c.h.b16 %v692
        %v728 = vunpack.c.l.b16 %v693
        %v729 = vunpack.c.l.b16 %v694
        %v730 = vunpack.c.h.b16 %v694
        %v731 = vunpack.c.l.b16 %v695
        %v732 = vunpack.c.l.b16 %v696
        %v733 = vunpack.c.h.b16 %v696
        %v734 = vunpack.c.l.b16 %v697
        %v735 = vpack.c.b16 %v726, %v723
        %v736 = vpack.c.b16 %v727, %v724
        %v737 = vpack.c.b16 %v728, %v725
        %v738 = vpack.c.b16 %v732, %v729
        %v739 = vpack.c.b16 %v733, %v730
        %v740 = vpack.c.b16 %v734, %v731
        %v748 = vsel %vm660, %v689, 0
        %750 = vmatprep.subr.bf16.mxu0 %v736
        %751 = vmatpush1.bf16.msra.mxu0 %v735
        %752 = vmatprep.subr.bf16.mxu0 %v739
        %753 = vmatpush1.bf16.msra.mxu0 %v738
        %754 = vmatprep.subr.bf16.mxu0 0
        %755 = vmatpush1.bf16.msra.mxu0 0
        %756 = vmatprep.subr.bf16.mxu0 0
        %757 = vmatpush1.bf16.msra.mxu0 0
        %758 = vmatprep.subr.bf16.mxu0 0
        %759 = vmatpush1.bf16.msra.mxu0 0
        %760 = vmatprep.subr.bf16.mxu0 0
        %761 = vmatpush1.bf16.msra.mxu0 0
        %762 = vmatprep.subr.bf16.mxu0 0
        %763 = vmatpush1.bf16.msra.mxu0 0
        %764 = vmatprep.subr.bf16.mxu0 0
        %765 = vmatpush1.bf16.msra.mxu0 0
        %766 = vmatprep.subr.bf16.mxu0 0
        %767 = vmatpush1.bf16.msra.mxu0 0
        %768 = vmatprep.subr.bf16.mxu0 0
        %769 = vmatpush1.bf16.msra.mxu0 0
        %770 = vmatprep.subr.bf16.mxu0 0
        %771 = vmatpush1.bf16.msra.mxu0 0
        %772 = vmatprep.subr.bf16.mxu0 0
        %773 = vmatpush1.bf16.msra.mxu0 0
        %774 = vmatprep.subr.bf16.mxu0 0
        %775 = vmatpush1.bf16.msra.mxu0 0
        %776 = vmatprep.subr.bf16.mxu0 0
        %777 = vmatpush1.bf16.msra.mxu0 0
        %778 = vmatprep.subr.bf16.mxu0 0
        %779 = vmatpush1.bf16.msra.mxu0 0
        %780 = vmatprep.subr.bf16.mxu0 0
        %781 = vmatpush1.bf16.msra.mxu0 0
        %782 = vmatprep.mubr.bf16.mxu0 0
        %783 = vmatmul.mubr.bf16.gmra.mrb[0].mxu0 %v748
        %v784 = vpop.f32.mrb[0].mxu0
        %v785 = vadd.f32 %v703, %v784
        %v786 = vpop.f32.mrb[0].mxu0
        %v787 = vadd.f32 %v707, %v786
        %v788 = vpop.f32.mrb[0].mxu0
        %v789 = vpop.f32.mrb[0].mxu0
        %790 = vdwg.mxu0
        %791 = vmatprep.subr.bf16.mxu0 0
        %792 = vmatpush1.bf16.msra.mxu0 %v737
        %793 = vmatprep.subr.bf16.mxu0 0
        %794 = vmatpush1.bf16.msra.mxu0 %v740
        %795 = vmatprep.subr.bf16.mxu0 0
        %796 = vmatpush1.bf16.msra.mxu0 0
        %797 = vmatprep.subr.bf16.mxu0 0
        %798 = vmatpush1.bf16.msra.mxu0 0
        %799 = vmatprep.subr.bf16.mxu0 0
        %800 = vmatpush1.bf16.msra.mxu0 0
        %801 = vmatprep.subr.bf16.mxu0 0
        %802 = vmatpush1.bf16.msra.mxu0 0
        %803 = vmatprep.subr.bf16.mxu0 0
        %804 = vmatpush1.bf16.msra.mxu0 0
        %805 = vmatprep.subr.bf16.mxu0 0
        %806 = vmatpush1.bf16.msra.mxu0 0
        %807 = vmatprep.subr.bf16.mxu0 0
        %808 = vmatpush1.bf16.msra.mxu0 0
        %809 = vmatprep.subr.bf16.mxu0 0
        %810 = vmatpush1.bf16.msra.mxu0 0
        %811 = vmatprep.subr.bf16.mxu0 0
        %812 = vmatpush1.bf16.msra.mxu0 0
        %813 = vmatprep.subr.bf16.mxu0 0
        %814 = vmatpush1.bf16.msra.mxu0 0
        %815 = vmatprep.subr.bf16.mxu0 0
        %816 = vmatpush1.bf16.msra.mxu0 0
        %817 = vmatprep.subr.bf16.mxu0 0
        %818 = vmatpush1.bf16.msra.mxu0 0
        %819 = vmatprep.subr.bf16.mxu0 0
        %820 = vmatpush1.bf16.msra.mxu0 0
        %821 = vmatprep.subr.bf16.mxu0 0
        %822 = vmatpush1.bf16.msra.mxu0 0
        %823 = vmatprep.mubr.bf16.mxu0 0
        %824 = vmatmul.mubr.bf16.gmra.mrb[0].mxu0 %v748
        %v825 = vpop.f32.mrb[0].mxu0
        %v826 = vadd.f32 %v711, %v825
        %v827 = vpop.f32.mrb[0].mxu0
        %v828 = vpop.f32.mrb[0].mxu0
        %v829 = vpop.f32.mrb[0].mxu0
        %830 = vdwg.mxu0
        %v831 = vld [vmem:[#allocation11] sm:$0xf]
        %v832 = vld [vmem:[#allocation11 + $0x4] sm:$0xf]
        %v833 = vld [vmem:[#allocation11 + $0x8] sm:$0xf]
        %v834 = vld [vmem:[#allocation11 + $0xc] sm:$0xf]
        %v835 = vld [vmem:[#allocation11 + $0x10] sm:$0xf]
        %v836 = vld [vmem:[#allocation11 + $0x14] sm:$0xf]
        %v837 = vld [vmem:[#allocation11 + $0x18] sm:$0xf]
        %v838 = vld [vmem:[#allocation11 + $0x1c] sm:$0xf]
        %v839 = vld [vmem:[#allocation11 + $0x20] sm:$0xf]
        %v840 = vld [vmem:[#allocation11 + $0x24] sm:$0xf]
        %v841 = vld [vmem:[#allocation11 + $0x28] sm:$0xf]
        %v842 = vld [vmem:[#allocation11 + $0x2c] sm:$0xf]
        %v843 = vld [vmem:[#allocation11 + $0x30] sm:$0xf]
        %v844 = vld [vmem:[#allocation11 + $0x34] sm:$0xf]
        %v845 = vld [vmem:[#allocation11 + $0x38] sm:$0xf]
        %v846 = vld [vmem:[#allocation11 + $0x3c] sm:$0xf]
        %v847 = vmul.f32 %v785, %v785
        %848 = vadd.xlane.f32.xlu0 %v847
        %v849 = vpop.xlane.xlu0 %848
        %v850 = vmul.f32 %v849, 0.5
        %v851 = vpack.c.bf16 %v785, %v785
        %v868 = vunpack.c.l.b16 %v831
        %v869 = vunpack.c.l.b16 %v832
        %v870 = vunpack.c.l.b16 %v833
        %v871 = vunpack.c.l.b16 %v834
        %v872 = vunpack.c.l.b16 %v835
        %v873 = vunpack.c.l.b16 %v836
        %v874 = vunpack.c.l.b16 %v837
        %v875 = vunpack.c.l.b16 %v838
        %v876 = vunpack.c.l.b16 %v839
        %v877 = vunpack.c.l.b16 %v840
        %v878 = vunpack.c.l.b16 %v841
        %v879 = vunpack.c.l.b16 %v842
        %v880 = vunpack.c.l.b16 %v843
        %v881 = vunpack.c.l.b16 %v844
        %v882 = vunpack.c.l.b16 %v845
        %v883 = vunpack.c.l.b16 %v846
        %v884 = vpack.c.b16 %v869, %v868
        %v885 = vpack.c.b16 %v871, %v870
        %v886 = vpack.c.b16 %v873, %v872
        %v887 = vpack.c.b16 %v875, %v874
        %v888 = vpack.c.b16 %v877, %v876
        %v889 = vpack.c.b16 %v879, %v878
        %v890 = vpack.c.b16 %v881, %v880
        %v891 = vpack.c.b16 %v883, %v882
        %900 = vmatprep.subr.bf16.mxu0 0
        %901 = vmatpush1.bf16.msra.mxu0 %v884
        %902 = vmatprep.subr.bf16.mxu0 0
        %903 = vmatpush1.bf16.msra.mxu0 %v885
        %904 = vmatprep.subr.bf16.mxu0 0
        %905 = vmatpush1.bf16.msra.mxu0 %v886
        %906 = vmatprep.subr.bf16.mxu0 0
        %907 = vmatpush1.bf16.msra.mxu0 %v887
        %908 = vmatprep.subr.bf16.mxu0 0
        %909 = vmatpush1.bf16.msra.mxu0 %v888
        %910 = vmatprep.subr.bf16.mxu0 0
        %911 = vmatpush1.bf16.msra.mxu0 %v889
        %912 = vmatprep.subr.bf16.mxu0 0
        %913 = vmatpush1.bf16.msra.mxu0 %v890
        %914 = vmatprep.subr.bf16.mxu0 0
        %915 = vmatpush1.bf16.msra.mxu0 %v891
        %916 = vmatprep.subr.bf16.mxu0 0
        %917 = vmatpush1.bf16.msra.mxu0 0
        %918 = vmatprep.subr.bf16.mxu0 0
        %919 = vmatpush1.bf16.msra.mxu0 0
        %920 = vmatprep.subr.bf16.mxu0 0
        %921 = vmatpush1.bf16.msra.mxu0 0
        %922 = vmatprep.subr.bf16.mxu0 0
        %923 = vmatpush1.bf16.msra.mxu0 0
        %924 = vmatprep.subr.bf16.mxu0 0
        %925 = vmatpush1.bf16.msra.mxu0 0
        %926 = vmatprep.subr.bf16.mxu0 0
        %927 = vmatpush1.bf16.msra.mxu0 0
        %928 = vmatprep.subr.bf16.mxu0 0
        %929 = vmatpush1.bf16.msra.mxu0 0
        %930 = vmatprep.subr.bf16.mxu0 0
        %931 = vmatpush1.bf16.msra.mxu0 0
        %932 = vmatprep.mubr.bf16.mxu0 0
        %933 = vmatmul.mubr.bf16.gmra.mrb[0].mxu0 %v851
        %v934 = vpop.f32.mrb[0].mxu0
        %v935 = vadd.f32 0.0, %v934
        %v936 = vpop.f32.mrb[0].mxu0
        %v937 = vpop.f32.mrb[0].mxu0
        %v938 = vpop.f32.mrb[0].mxu0
        %939 = vdwg.mxu0
        %v940 = vsub.f32 %v935, %v850
        %v941 = vmul.f32 %v940, 1.442695
        %v942 = vpow.pop %v941
        %v943 = vmul.f32 %v942, 0.25
        %v944 = vmul.f32 %v787, %v787
        %945 = vadd.xlane.f32.xlu0 %v944
        %v946 = vpop.xlane.xlu0 %945
        %v947 = vmul.f32 %v946, 0.5
        %v948 = vpack.c.bf16 %v787, %v787
        %949 = vmatprep.subr.bf16.mxu0 0
        %950 = vmatpush1.bf16.msra.mxu0 %v884
        %951 = vmatprep.subr.bf16.mxu0 0
        %952 = vmatpush1.bf16.msra.mxu0 %v885
        %953 = vmatprep.subr.bf16.mxu0 0
        %954 = vmatpush1.bf16.msra.mxu0 %v886
        %955 = vmatprep.subr.bf16.mxu0 0
        %956 = vmatpush1.bf16.msra.mxu0 %v887
        %957 = vmatprep.subr.bf16.mxu0 0
        %958 = vmatpush1.bf16.msra.mxu0 %v888
        %959 = vmatprep.subr.bf16.mxu0 0
        %960 = vmatpush1.bf16.msra.mxu0 %v889
        %961 = vmatprep.subr.bf16.mxu0 0
        %962 = vmatpush1.bf16.msra.mxu0 %v890
        %963 = vmatprep.subr.bf16.mxu0 0
        %964 = vmatpush1.bf16.msra.mxu0 %v891
        %965 = vmatprep.subr.bf16.mxu0 0
        %966 = vmatpush1.bf16.msra.mxu0 0
        %967 = vmatprep.subr.bf16.mxu0 0
        %968 = vmatpush1.bf16.msra.mxu0 0
        %969 = vmatprep.subr.bf16.mxu0 0
        %970 = vmatpush1.bf16.msra.mxu0 0
        %971 = vmatprep.subr.bf16.mxu0 0
        %972 = vmatpush1.bf16.msra.mxu0 0
        %973 = vmatprep.subr.bf16.mxu0 0
        %974 = vmatpush1.bf16.msra.mxu0 0
        %975 = vmatprep.subr.bf16.mxu0 0
        %976 = vmatpush1.bf16.msra.mxu0 0
        %977 = vmatprep.subr.bf16.mxu0 0
        %978 = vmatpush1.bf16.msra.mxu0 0
        %979 = vmatprep.subr.bf16.mxu0 0
        %980 = vmatpush1.bf16.msra.mxu0 0
        %981 = vmatprep.mubr.bf16.mxu0 0
        %982 = vmatmul.mubr.bf16.gmra.mrb[0].mxu0 %v948
        %v983 = vpop.f32.mrb[0].mxu0
        %v984 = vadd.f32 0.0, %v983
        %v985 = vpop.f32.mrb[0].mxu0
        %v986 = vpop.f32.mrb[0].mxu0
        %v987 = vpop.f32.mrb[0].mxu0
        %988 = vdwg.mxu0
        %v989 = vsub.f32 %v984, %v947
        %v990 = vmul.f32 %v989, 1.442695
        %v991 = vpow.pop %v990
        %v992 = vmul.f32 %v991, 0.25
        %vm993 = vcmask 130048
        %v994 = vsel %vm993, %v943, 0.0
        %v995 = vrot.slane %v994, 4
        %v996 = vadd.f32 %v994, %v995
        %v997 = vrot.slane %v996, 2
        %v998 = vadd.f32 %v996, %v997
        %v999 = vrot.slane %v998, 1
        %v1000 = vadd.f32 %v998, %v999
        %v1001 = vmul.f32 %v992, %v1000
        %v1002 = vsel %vm993, %v1001, 0.0
        %1003 = vadd.xlane.f32.xlu0 %v1002
        %v1004 = vpop.xlane.xlu0 %1003
        %v1005 = vpack.c.bf16 %v943, %v943
        %v1006 = vpack.c.bf16 %v826, %v826
        %1007 = vxpose.xlu0.c.b16.start [1/8] %v1005, 128
        %1008 = vxpose.xlu0.c.b16.cont [2/8] 0, 128
        %1009 = vxpose.xlu0.c.b16.cont [3/8] 0, 128
        %1010 = vxpose.xlu0.c.b16.cont [4/8] 0, 128
        %1011 = vxpose.xlu0.c.b16.cont [5/8] 0, 128
        %1012 = vxpose.xlu0.c.b16.cont [6/8] 0, 128
        %1013 = vxpose.xlu0.c.b16.cont [7/8] 0, 128
        %1014 = vxpose.xlu0.c.b16.end [8/8] 0, 128
        %v1015 = vpop.trf.xlu0
        %v1016 = vpop.trf.xlu0
        %v1017 = vpop.trf.xlu0
        %v1018 = vpop.trf.xlu0
        %v1019 = vpop.trf.xlu0
        %v1020 = vpop.trf.xlu0
        %v1021 = vpop.trf.xlu0
        %v1022 = vpop.trf.xlu0
        %vm1023 = vcmask 64512
        %v1025 = vsel %vm1023, %v1015, 0
        %vm1027 = vcmask 1043456
        %v1029 = vsel %vm1027, %v1006, 0
        %1031 = vmatprep.subr.bf16.mxu0 0
        %1032 = vmatpush1.bf16.msra.mxu0 %v1029
        %1033 = vmatprep.subr.bf16.mxu0 0
        %1034 = vmatpush1.bf16.msra.mxu0 0
        %1035 = vmatprep.subr.bf16.mxu0 0
        %1036 = vmatpush1.bf16.msra.mxu0 0
        %1037 = vmatprep.subr.bf16.mxu0 0
        %1038 = vmatpush1.bf16.msra.mxu0 0
        %1039 = vmatprep.subr.bf16.mxu0 0
        %1040 = vmatpush1.bf16.msra.mxu0 0
        %1041 = vmatprep.subr.bf16.mxu0 0
        %1042 = vmatpush1.bf16.msra.mxu0 0
        %1043 = vmatprep.subr.bf16.mxu0 0
        %1044 = vmatpush1.bf16.msra.mxu0 0
        %1045 = vmatprep.subr.bf16.mxu0 0
        %1046 = vmatpush1.bf16.msra.mxu0 0
        %1047 = vmatprep.subr.bf16.mxu0 0
        %1048 = vmatpush1.bf16.msra.mxu0 0
        %1049 = vmatprep.subr.bf16.mxu0 0
        %1050 = vmatpush1.bf16.msra.mxu0 0
        %1051 = vmatprep.subr.bf16.mxu0 0
        %1052 = vmatpush1.bf16.msra.mxu0 0
        %1053 = vmatprep.subr.bf16.mxu0 0
        %1054 = vmatpush1.bf16.msra.mxu0 0
        %1055 = vmatprep.subr.bf16.mxu0 0
        %1056 = vmatpush1.bf16.msra.mxu0 0
        %1057 = vmatprep.subr.bf16.mxu0 0
        %1058 = vmatpush1.bf16.msra.mxu0 0
        %1059 = vmatprep.subr.bf16.mxu0 0
        %1060 = vmatpush1.bf16.msra.mxu0 0
        %1061 = vmatprep.subr.bf16.mxu0 0
        %1062 = vmatpush1.bf16.msra.mxu0 0
        %1063 = vmatprep.mubr.bf16.mxu0 0
        %1064 = vmatmul.mubr.bf16.gmra.mrb[0].mxu0 %v1025
        %v1065 = vpop.f32.mrb[0].mxu0
        %v1066 = vadd.f32 0.0, %v1065
        %v1067 = vpop.f32.mrb[0].mxu0
        %v1068 = vpop.f32.mrb[0].mxu0
        %v1069 = vadd.f32 0.0, %v1068
        %v1070 = vpop.f32.mrb[0].mxu0
        %1071 = vdwg.mxu0
        %v1072 = vpack.c.bf16 %v992, %v992
        %v1073 = vpack.c.bf16 %v1069, %v1066
        %v1075 = vsel %vm993, %v1072, 0
        %1077 = vmatprep.subr.bf16.mxu0 0
        %1078 = vmatpush1.bf16.msra.mxu0 %v1073
        %1079 = vmatprep.subr.bf16.mxu0 0
        %1080 = vmatpush1.bf16.msra.mxu0 0
        %1081 = vmatprep.subr.bf16.mxu0 0
        %1082 = vmatpush1.bf16.msra.mxu0 0
        %1083 = vmatprep.subr.bf16.mxu0 0
        %1084 = vmatpush1.bf16.msra.mxu0 0
        %1085 = vmatprep.subr.bf16.mxu0 0
        %1086 = vmatpush1.bf16.msra.mxu0 0
        %1087 = vmatprep.subr.bf16.mxu0 0
        %1088 = vmatpush1.bf16.msra.mxu0 0
        %1089 = vmatprep.subr.bf16.mxu0 0
        %1090 = vmatpush1.bf16.msra.mxu0 0
        %1091 = vmatprep.subr.bf16.mxu0 0
        %1092 = vmatpush1.bf16.msra.mxu0 0
        %1093 = vmatprep.subr.bf16.mxu0 0
        %1094 = vmatpush1.bf16.msra.mxu0 0
        %1095 = vmatprep.subr.bf16.mxu0 0
        %1096 = vmatpush1.bf16.msra.mxu0 0
        %1097 = vmatprep.subr.bf16.mxu0 0
        %1098 = vmatpush1.bf16.msra.mxu0 0
        %1099 = vmatprep.subr.bf16.mxu0 0
        %1100 = vmatpush1.bf16.msra.mxu0 0
        %1101 = vmatprep.subr.bf16.mxu0 0
        %1102 = vmatpush1.bf16.msra.mxu0 0
        %1103 = vmatprep.subr.bf16.mxu0 0
        %1104 = vmatpush1.bf16.msra.mxu0 0
        %1105 = vmatprep.subr.bf16.mxu0 0
        %1106 = vmatpush1.bf16.msra.mxu0 0
        %1107 = vmatprep.subr.bf16.mxu0 0
        %1108 = vmatpush1.bf16.msra.mxu0 0
        %1109 = vmatprep.mubr.bf16.mxu0 0
        %1110 = vmatmul.mubr.bf16.gmra.mrb[0].mxu0 %v1075
        %v1111 = vpop.f32.mrb[0].mxu0
        %v1112 = vadd.f32 0.0, %v1111
        %v1113 = vpop.f32.mrb[0].mxu0
        %v1114 = vpop.f32.mrb[0].mxu0
        %v1115 = vpop.f32.mrb[0].mxu0
        %1116 = vdwg.mxu0
        %v1117 = vadd.f32 %v1004, 1e-08
        %v1118 = vrcp.pop %v1117
        %v1119 = vmul.f32 %v1112, %v1118
        %v1120 = vpack.c.bf16 %v1119, %v1119
        %v1121 = vld [vmem:[#allocation13] sm:$0xf]
        %v1122 = vld [vmem:[#allocation13 + $0x4] sm:$0xf]
        %v1123 = vld [vmem:[#allocation13 + $0x8] sm:$0xf]
        %v1124 = vld [vmem:[#allocation13 + $0xc] sm:$0xf]
        %v1125 = vld [vmem:[#allocation13 + $0x10] sm:$0xf]
        %v1126 = vld [vmem:[#allocation13 + $0x14] sm:$0xf]
        %v1127 = vld [vmem:[#allocation13 + $0x18] sm:$0xf]
        %v1128 = vld [vmem:[#allocation13 + $0x1c] sm:$0xf]
        %v1129 = vld [vmem:[#allocation13 + $0x20] sm:$0xf]
        %v1130 = vld [vmem:[#allocation13 + $0x24] sm:$0xf]
        %v1131 = vld [vmem:[#allocation13 + $0x28] sm:$0xf]
        %v1132 = vld [vmem:[#allocation13 + $0x2c] sm:$0xf]
        %v1133 = vld [vmem:[#allocation13 + $0x30] sm:$0xf]
        %v1134 = vld [vmem:[#allocation13 + $0x34] sm:$0xf]
        %v1135 = vld [vmem:[#allocation13 + $0x38] sm:$0xf]
        %v1136 = vld [vmem:[#allocation13 + $0x3c] sm:$0xf]
        %v1137 = vld [vmem:[#allocation14] sm:$0x1]
        %v1139 = vlaneseq
        %v1140 = vshrl.u32 %v1139, 7
        %v1141 = vsub.s32 0, %v1140
        %v1142 = vrot.slane %v1137, %v1141
        %v1160 = vunpack.c.l.b16 %v1121
        %v1161 = vunpack.c.l.b16 %v1122
        %v1162 = vunpack.c.l.b16 %v1123
        %v1163 = vunpack.c.l.b16 %v1124
        %v1164 = vunpack.c.l.b16 %v1125
        %v1165 = vunpack.c.l.b16 %v1126
        %v1166 = vunpack.c.l.b16 %v1127
        %v1167 = vunpack.c.l.b16 %v1128
        %v1168 = vunpack.c.l.b16 %v1129
        %v1169 = vunpack.c.l.b16 %v1130
        %v1170 = vunpack.c.l.b16 %v1131
        %v1171 = vunpack.c.l.b16 %v1132
        %v1172 = vunpack.c.l.b16 %v1133
        %v1173 = vunpack.c.l.b16 %v1134
        %v1174 = vunpack.c.l.b16 %v1135
        %v1175 = vunpack.c.l.b16 %v1136
        %v1176 = vpack.c.b16 %v1161, %v1160
        %v1177 = vpack.c.b16 %v1163, %v1162
        %v1178 = vpack.c.b16 %v1165, %v1164
        %v1179 = vpack.c.b16 %v1167, %v1166
        %v1180 = vpack.c.b16 %v1169, %v1168
        %v1181 = vpack.c.b16 %v1171, %v1170
        %v1182 = vpack.c.b16 %v1173, %v1172
        %v1183 = vpack.c.b16 %v1175, %v1174
        %1192 = vmatprep.subr.bf16.mxu0 0
        %1193 = vmatpush1.bf16.msra.mxu0 %v1176
        %1194 = vmatprep.subr.bf16.mxu0 0
        %1195 = vmatpush1.bf16.msra.mxu0 %v1177
        %1196 = vmatprep.subr.bf16.mxu0 0
        %1197 = vmatpush1.bf16.msra.mxu0 %v1178
        %1198 = vmatprep.subr.bf16.mxu0 0
        %1199 = vmatpush1.bf16.msra.mxu0 %v1179
        %1200 = vmatprep.subr.bf16.mxu0 0
        %1201 = vmatpush1.bf16.msra.mxu0 %v1180
        %1202 = vmatprep.subr.bf16.mxu0 0
        %1203 = vmatpush1.bf16.msra.mxu0 %v1181
        %1204 = vmatprep.subr.bf16.mxu0 0
        %1205 = vmatpush1.bf16.msra.mxu0 %v1182
        %1206 = vmatprep.subr.bf16.mxu0 0
        %1207 = vmatpush1.bf16.msra.mxu0 %v1183
        %1208 = vmatprep.subr.bf16.mxu0 0
        %1209 = vmatpush1.bf16.msra.mxu0 0
        %1210 = vmatprep.subr.bf16.mxu0 0
        %1211 = vmatpush1.bf16.msra.mxu0 0
        %1212 = vmatprep.subr.bf16.mxu0 0
        %1213 = vmatpush1.bf16.msra.mxu0 0
        %1214 = vmatprep.subr.bf16.mxu0 0
        %1215 = vmatpush1.bf16.msra.mxu0 0
        %1216 = vmatprep.subr.bf16.mxu0 0
        %1217 = vmatpush1.bf16.msra.mxu0 0
        %1218 = vmatprep.subr.bf16.mxu0 0
        %1219 = vmatpush1.bf16.msra.mxu0 0
        %1220 = vmatprep.subr.bf16.mxu0 0
        %1221 = vmatpush1.bf16.msra.mxu0 0
        %1222 = vmatprep.subr.bf16.mxu0 0
        %1223 = vmatpush1.bf16.msra.mxu0 0
        %1224 = vmatprep.mubr.bf16.mxu0 0
        %1225 = vmatmul.mubr.bf16.gmra.mrb[0].mxu0 %v1120
        %v1226 = vpop.f32.mrb[0].mxu0
        %v1227 = vadd.f32 %v1142, %v1226
        %v1228 = vpop.f32.mrb[0].mxu0
        %v1229 = vpop.f32.mrb[0].mxu0
        %v1230 = vpop.f32.mrb[0].mxu0
        %1231 = vdwg.mxu0
        %v1232 = vadd.f32 %v657, %v1227
        %v1233 = vld [vmem:[#allocation16] sm:$0x1]
        %v1234 = vld [vmem:[#allocation17] sm:$0x1]
        %v1235 = vsel %vm660, %v1232, 0.0
        %1236 = vadd.xlane.f32.xlu0 %v1235
        %v1237 = vpop.xlane.xlu0 %1236
        %v1238 = vmul.f32 %v1237, %v664
        %v1239 = vsub.f32 %v1232, %v1238
        %v1240 = vmul.f32 %v1239, %v1239
        %v1241 = vsel %vm660, %v1240, 0.0
        %1242 = vadd.xlane.f32.xlu0 %v1241
        %v1243 = vpop.xlane.xlu0 %1242
        %v1244 = vmul.f32 %v1243, %v664
        %v1245 = vadd.f32 %v1244, 1e-05
        %v1246 = vrsqrt.pop %v1245
        %v1247 = vmul.f32 %v1239, %v1246
        %v1249 = vlaneseq
        %v1250 = vshrl.u32 %v1249, 7
        %v1251 = vsub.s32 0, %v1250
        %v1252 = vrot.slane %v1233, %v1251
        %v1254 = vmul.f32 %v1247, %v1252
        %v1256 = vlaneseq
        %v1257 = vshrl.u32 %v1256, 7
        %v1258 = vsub.s32 0, %v1257
        %v1259 = vrot.slane %v1234, %v1258
        %v1261 = vadd.f32 %v1254, %v1259
        %v1262 = vpack.c.bf16 %v1261, %v1261
        %v1263 = vld [vmem:[#allocation19] sm:$0xf]
        %v1264 = vld [vmem:[#allocation19 + $0x4] sm:$0xf]
        %v1265 = vld [vmem:[#allocation19 + $0x8] sm:$0xf]
        %v1266 = vld [vmem:[#allocation19 + $0xc] sm:$0xf]
        %v1267 = vld [vmem:[#allocation20] sm:$0x1]
        %v1269 = vlaneseq
        %v1270 = vshrl.u32 %v1269, 7
        %v1271 = vsub.s32 0, %v1270
        %v1272 = vrot.slane %v1267, %v1271
        %v1278 = vunpack.c.l.b16 %v1263
        %v1279 = vunpack.c.l.b16 %v1264
        %v1280 = vunpack.c.l.b16 %v1265
        %v1281 = vunpack.c.l.b16 %v1266
        %v1282 = vpack.c.b16 %v1279, %v1278
        %v1283 = vpack.c.b16 %v1281, %v1280
        %v1287 = vsel %vm660, %v1262, 0
        %1289 = vmatprep.subr.bf16.mxu0 0
        %1290 = vmatpush1.bf16.msra.mxu0 %v1282
        %1291 = vmatprep.subr.bf16.mxu0 0
        %1292 = vmatpush1.bf16.msra.mxu0 %v1283
        %1293 = vmatprep.subr.bf16.mxu0 0
        %1294 = vmatpush1.bf16.msra.mxu0 0
        %1295 = vmatprep.subr.bf16.mxu0 0
        %1296 = vmatpush1.bf16.msra.mxu0 0
        %1297 = vmatprep.subr.bf16.mxu0 0
        %1298 = vmatpush1.bf16.msra.mxu0 0
        %1299 = vmatprep.subr.bf16.mxu0 0
        %1300 = vmatpush1.bf16.msra.mxu0 0
        %1301 = vmatprep.subr.bf16.mxu0 0
        %1302 = vmatpush1.bf16.msra.mxu0 0
        %1303 = vmatprep.subr.bf16.mxu0 0
        %1304 = vmatpush1.bf16.msra.mxu0 0
        %1305 = vmatprep.subr.bf16.mxu0 0
        %1306 = vmatpush1.bf16.msra.mxu0 0
        %1307 = vmatprep.subr.bf16.mxu0 0
        %1308 = vmatpush1.bf16.msra.mxu0 0
        %1309 = vmatprep.subr.bf16.mxu0 0
        %1310 = vmatpush1.bf16.msra.mxu0 0
        %1311 = vmatprep.subr.bf16.mxu0 0
        %1312 = vmatpush1.bf16.msra.mxu0 0
        %1313 = vmatprep.subr.bf16.mxu0 0
        %1314 = vmatpush1.bf16.msra.mxu0 0
        %1315 = vmatprep.subr.bf16.mxu0 0
        %1316 = vmatpush1.bf16.msra.mxu0 0
        %1317 = vmatprep.subr.bf16.mxu0 0
        %1318 = vmatpush1.bf16.msra.mxu0 0
        %1319 = vmatprep.subr.bf16.mxu0 0
        %1320 = vmatpush1.bf16.msra.mxu0 0
        %1321 = vmatprep.mubr.bf16.mxu0 0
        %1322 = vmatmul.mubr.bf16.gmra.mrb[0].mxu0 %v1287
        %v1323 = vpop.f32.mrb[0].mxu0
        %v1324 = vadd.f32 %v1272, %v1323
        %v1325 = vpop.f32.mrb[0].mxu0
        %v1326 = vpop.f32.mrb[0].mxu0
        %v1327 = vpop.f32.mrb[0].mxu0
        %1328 = vdwg.mxu0
        %v1329 = vmul.f32 %v1324, 0.5
        %v1330 = vmul.f32 %v1324, 0.70710677
        %v1331 = verf.f32.pop %v1330
        %v1332 = vadd.f32 %v1331, 1.0
        %v1333 = vmul.f32 %v1329, %v1332
        %v1334 = vpack.c.bf16 %v1333, %v1333
        %v1335 = vld [vmem:[#allocation22] sm:$0xf]
        %v1336 = vld [vmem:[#allocation22 + $0x4] sm:$0xf]
        %v1337 = vld [vmem:[#allocation22 + $0x8] sm:$0xf]
        %v1338 = vld [vmem:[#allocation22 + $0xc] sm:$0xf]
        %v1339 = vld [vmem:[#allocation23] sm:$0x1]
        %v1341 = vlaneseq
        %v1342 = vshrl.u32 %v1341, 7
        %v1343 = vsub.s32 0, %v1342
        %v1344 = vrot.slane %v1339, %v1343
        %v1350 = vunpack.c.l.b16 %v1335
        %v1351 = vunpack.c.l.b16 %v1336
        %v1352 = vunpack.c.l.b16 %v1337
        %v1353 = vunpack.c.l.b16 %v1338
        %v1354 = vpack.c.b16 %v1351, %v1350
        %v1355 = vpack.c.b16 %v1353, %v1352
        %v1359 = vsel %vm660, %v1334, 0
        %1361 = vmatprep.subr.bf16.mxu0 0
        %1362 = vmatpush1.bf16.msra.mxu0 %v1354
        %1363 = vmatprep.subr.bf16.mxu0 0
        %1364 = vmatpush1.bf16.msra.mxu0 %v1355
        %1365 = vmatprep.subr.bf16.mxu0 0
        %1366 = vmatpush1.bf16.msra.mxu0 0
        %1367 = vmatprep.subr.bf16.mxu0 0
        %1368 = vmatpush1.bf16.msra.mxu0 0
        %1369 = vmatprep.subr.bf16.mxu0 0
        %1370 = vmatpush1.bf16.msra.mxu0 0
        %1371 = vmatprep.subr.bf16.mxu0 0
        %1372 = vmatpush1.bf16.msra.mxu0 0
        %1373 = vmatprep.subr.bf16.mxu0 0
        %1374 = vmatpush1.bf16.msra.mxu0 0
        %1375 = vmatprep.subr.bf16.mxu0 0
        %1376 = vmatpush1.bf16.msra.mxu0 0
        %1377 = vmatprep.subr.bf16.mxu0 0
        %1378 = vmatpush1.bf16.msra.mxu0 0
        %1379 = vmatprep.subr.bf16.mxu0 0
        %1380 = vmatpush1.bf16.msra.mxu0 0
        %1381 = vmatprep.subr.bf16.mxu0 0
        %1382 = vmatpush1.bf16.msra.mxu0 0
        %1383 = vmatprep.subr.bf16.mxu0 0
        %1384 = vmatpush1.bf16.msra.mxu0 0
        %1385 = vmatprep.subr.bf16.mxu0 0
        %1386 = vmatpush1.bf16.msra.mxu0 0
        %1387 = vmatprep.subr.bf16.mxu0 0
        %1388 = vmatpush1.bf16.msra.mxu0 0
        %1389 = vmatprep.subr.bf16.mxu0 0
        %1390 = vmatpush1.bf16.msra.mxu0 0
        %1391 = vmatprep.subr.bf16.mxu0 0
        %1392 = vmatpush1.bf16.msra.mxu0 0
        %1393 = vmatprep.mubr.bf16.mxu0 0
        %1394 = vmatmul.mubr.bf16.gmra.mrb[0].mxu0 %v1359
        %v1395 = vpop.f32.mrb[0].mxu0
        %v1396 = vadd.f32 %v1344, %v1395
        %v1397 = vpop.f32.mrb[0].mxu0
        %v1398 = vpop.f32.mrb[0].mxu0
        %v1399 = vpop.f32.mrb[0].mxu0
        %1400 = vdwg.mxu0
        %v1401 = vadd.f32 %v1232, %v1396
        %1402 = vst.msk [vmem:[%s655] sm:$0xff] %vm660, %v1401
        %s1403 = sand.u32 %s345, 1
        %s1404 = scalar_lea.sflag [#allocation4], %s1403
        %s1405 = sand.u32 %s345, 1
        %s1406 = smul.addr %s1405, 8
        %s1407 = scalar_lea.vmem [#allocation25], %s1406
        // Predicated region
        $region133: #{tpu_custom_call.1} parent=75 // pred_check
          %p1408 = pneg %p355
        $region134: #{tpu_custom_call.1} parent=75 // pred_check_branch
          %1410 = sbr.rel (%p1408) target = $region136
        $region135: #{tpu_custom_call.1} parent=75 // pred_region
          %s1412 = ssub.s32 128, 128
          %1413 = vsyncadd %s1404, %s1412
          %s1414 = smul.addr %s38, 128
          %s1415 = scalar_lea.hbm %s14, %s1414
          %s1417 = sshll.u32 %s1407, 4
          %s1418 = int_to_ptr.vmem [resolvable:$true] %s1417
          %1420 = dma.vmem_to_hbm [thread:$0]  %s1418, 128, %s1415, %s1404
        $region136: #{tpu_custom_call.1} parent=75 // pred_fallthru
          _
      $region76: #{tpu_custom_call.1} parent=5 // pred_fallthru
        _
      %p1421 = scmp.le.s32.totalorder 2, %s33
      // Predicated region
      $region137: #{tpu_custom_call.1} parent=5 // pred_check
        %p1422 = pneg %p1421
      $region138: #{tpu_custom_call.1} parent=5 // pred_check_branch
        %1424 = sbr.rel (%p1422) target = $region140
      $region139: #{tpu_custom_call.1} parent=5 // pred_region
        %s1425 = ssub.s32 %s33, 2
        // Predicated region
        $region141: #{tpu_custom_call.1} parent=139 // pred_check
          %p1426 = pneg %p361
        $region142: #{tpu_custom_call.1} parent=139 // pred_check_branch
          %1428 = sbr.rel (%p1426) target = $region144
        $region143: #{tpu_custom_call.1} parent=139 // pred_region
          %s1429 = sand.u32 %s346, 1
          %s1430 = scalar_lea.sflag [#allocation4], %s1429
          %s1431 = sand.u32 %s346, 1
          %s1432 = smul.addr %s1431, 8
          %s1433 = scalar_lea.vmem [#allocation25], %s1432
          %1434 = dma.done %s1430, 128
        $region144: #{tpu_custom_call.1} parent=139 // pred_fallthru
          _
      $region140: #{tpu_custom_call.1} parent=5 // pred_fallthru
        _
    $region6: #{tpu_custom_call.1} parent=1 // loop_footer
      %s37 = sadd.s32 1, %s33
    $region7: #{tpu_custom_call.1} parent=1 // loop_footer_branch
      %32 = sbr.rel target = $region3
    $region8: #{tpu_custom_call.1} parent=1 // loop_exit
      _
    %1435 = vsyncpa [#allocation3], 1
    %s1436 = scalar_lea.sflag [#allocation3], 1
    %1437 = vsyncpa %s1436, 1
    %1438 = vsyncpa [#allocation6], 1
    %1439 = vsyncpa [#allocation9], 1
    %1440 = vsyncpa [#allocation12], 1
    %1441 = vsyncpa [#allocation15], 1
    %1442 = vsyncpa [#allocation18], 1
    %1443 = vsyncpa [#allocation21], 1
    %1444 = vsyncpa [#allocation24], 1
    %1445 = vsyncpa [#allocation4], 1
    %s1446 = scalar_lea.sflag [#allocation4], 1
    %1447 = vsyncpa %s1446, 1

</llo_original>
